<compile_context>
chip_gen: v7x
topology: tpu7x:2x2x1
jax: 0.10.0
libtpu: 0.0.40
codegen_flags: <defaults>
</compile_context>

<pallas_src>
import functools
import math

import jax
import jax.numpy as jnp
from jax import lax
from jax.experimental import pallas as pl
from jax.experimental.pallas import tpu as pltpu  # noqa: F401  (TPU backend import)

D_MODEL = 32
N_HEADS = 4
HEAD_DIM = D_MODEL // N_HEADS
EPS = 1e-5
LANE = 128
MASK_VALUE = float(jnp.finfo(jnp.float32).min)   # GPT-2 causal fill value


# ---------------------------------------------------------------------------
# Packed-parameter layout (22 tensors -> 3 lane-aligned slabs).
# ---------------------------------------------------------------------------
# Weight slab (D_MODEL, 384): every weight whose matmul contracts over D_MODEL.
_W_LAYOUT = (("w_qkv", 3 * D_MODEL), ("w_ap", D_MODEL), ("wq", D_MODEL),
             ("w_kv", 2 * D_MODEL), ("wo", D_MODEL), ("w_fc", 4 * D_MODEL))
_W_OFF, _W_WIDTH = {}, {}
_o = 0
for _n, _w in _W_LAYOUT:
    _W_OFF[_n], _W_WIDTH[_n] = _o, _w
    _o += _w
W_SLAB_COLS = _o                                  # 384 (multiple of 128)

# Bias / LayerNorm slab (16, 128): one zero-padded 128-lane row per vector.
_B_LAYOUT = (("ln1_g", D_MODEL), ("ln1_b", D_MODEL),
             ("ln2_g", D_MODEL), ("ln2_b", D_MODEL),
             ("ln3_g", D_MODEL), ("ln3_b", D_MODEL),
             ("b_qkv", 3 * D_MODEL), ("b_ap", D_MODEL),
             ("bq", D_MODEL), ("b_kv", 2 * D_MODEL),
             ("bo", D_MODEL), ("b_fc", 4 * D_MODEL), ("b_fp", D_MODEL))
_B_ROW = {n: i for i, (n, _) in enumerate(_B_LAYOUT)}
_B_WIDTH = dict(_B_LAYOUT)
B_SLAB_ROWS = -(-len(_B_LAYOUT) // 8) * 8         # pad rows to a sublane multiple


def _wcols(W, name):
    o = _W_OFF[name]
    return W[:, o:o + _W_WIDTH[name]]


def _brow(Bv, name):
    r = _B_ROW[name]
    return Bv[r:r + 1, :_B_WIDTH[name]]


# ---------------------------------------------------------------------------
# Shared math (used both inside the Pallas kernel and by the pure-JAX reference).
# ---------------------------------------------------------------------------
def _layernorm(x, g, b):
    mu = jnp.mean(x, axis=-1, keepdims=True)
    xc = x - mu
    var = jnp.mean(xc * xc, axis=-1, keepdims=True)
    return xc * lax.rsqrt(var + EPS) * g + b


def _softmax(x, approx_recip=False):
    m = jnp.max(x, axis=-1, keepdims=True)
    e = jnp.exp(x - m)
    s = jnp.sum(e, axis=-1, keepdims=True)
    if approx_recip:                               # EUP slot, keeps VALU free
        return e * pl.reciprocal(s, approx=True)
    return e / s


def _gelu_new(x):
    # GPT-2 "gelu_new" (tanh approximation)
    return 0.5 * x * (1.0 + jnp.tanh(math.sqrt(2.0 / math.pi) * (x + 0.044715 * x * x * x)))


def _split_heads(x, n_blocks, seq):
    """(n_blocks*seq, D) -> (n_blocks*N_HEADS, seq, HEAD_DIM) via static slices."""
    parts = []
    for b in range(n_blocks):
        rows = x[b * seq:(b + 1) * seq, :]
        for h in range(N_HEADS):
            parts.append(rows[:, h * HEAD_DIM:(h + 1) * HEAD_DIM])
    return jnp.stack(parts, axis=0)


def _merge_heads(oz, n_blocks):
    """(n_blocks*N_HEADS, seq, HEAD_DIM) -> (n_blocks*seq, D).

    The 4 x 8-lane concat stays inside one vreg, so it is cheap."""
    return jnp.concatenate(
        [jnp.concatenate([oz[b * N_HEADS + h] for h in range(N_HEADS)], axis=1)
         for b in range(n_blocks)], axis=0)


def _multihead_attention(q, k, v, *, n_blocks, causal=False, bias=None,
                         approx_recip=False):
    """Scaled dot-product attention batched over (blocks x heads).

    q: (n_blocks*Tq, D), k/v: (n_blocks*Tk, D); bias is an additive per-key bias
    of shape (1, Tk).  Returns merged heads (n_blocks*Tq, D); the caller applies
    the output projection (one (N,32)@(32,32) matmul)."""
    Tq = q.shape[0] // n_blocks
    Tk = k.shape[0] // n_blocks
    qz = _split_heads(q, n_blocks, Tq)
    kz = _split_heads(k, n_blocks, Tk)
    vz = _split_heads(v, n_blocks, Tk)
    s = jnp.einsum("zqd,zkd->zqk", qz, kz,
                   preferred_element_type=jnp.float32) * (1.0 / math.sqrt(HEAD_DIM))
    if causal:
        rows = lax.broadcasted_iota(jnp.int32, (Tq, Tk), 0)
        cols = lax.broadcasted_iota(jnp.int32, (Tq, Tk), 1)
        keep = (cols <= rows)[None]                       # (1, Tq, Tk)
        kept = s if bias is None else s + bias            # bias only on kept keys:
        s = jnp.where(keep, kept, MASK_VALUE)             # never finfo.min + (-1e9)
    elif bias is not None:
        s = s + bias
    p = _softmax(s, approx_recip=approx_recip)
    oz = jnp.einsum("zqk,zkd->zqd", p, vz, preferred_element_type=jnp.float32)
    return _merge_heads(oz, n_blocks)


# ---------------------------------------------------------------------------
# Pallas kernel: whole AttentionBlock forward, full arrays resident in VMEM.
# ---------------------------------------------------------------------------
@functools.lru_cache(maxsize=None)
def _build_kernel(B, Td, has_mask):
    def kernel(*refs):
        if has_mask:
            dec_ref, enc_ref, maskb_ref, w_ref, wfp_ref, b_ref, out_ref = refs
            bias0 = maskb_ref[...]                 # (1, Td) additive key bias (batch 0)
        else:
            dec_ref, enc_ref, w_ref, wfp_ref, b_ref, out_ref = refs
            bias0 = None
        D = D_MODEL

        # --- parameter unpack, hoisted once (3 slab loads, static slices) -----
        W = w_ref[...]                             # (32, 384)
        Bv = b_ref[...]                            # (16, 128)
        w_qkv, w_ap = _wcols(W, "w_qkv"), _wcols(W, "w_ap")
        wq, w_kv, wo = _wcols(W, "wq"), _wcols(W, "w_kv"), _wcols(W, "wo")
        w_fc = _wcols(W, "w_fc")
        w_fp = wfp_ref[...]                        # (128, 32)
        ln1_g, ln1_b = _brow(Bv, "ln1_g"), _brow(Bv, "ln1_b")
        ln2_g, ln2_b = _brow(Bv, "ln2_g"), _brow(Bv, "ln2_b")
        ln3_g, ln3_b = _brow(Bv, "ln3_g"), _brow(Bv, "ln3_b")
        b_qkv, b_ap = _brow(Bv, "b_qkv"), _brow(Bv, "b_ap")
        bq, b_kv, bo = _brow(Bv, "bq"), _brow(Bv, "b_kv"), _brow(Bv, "bo")
        b_fc, b_fp = _brow(Bv, "b_fc"), _brow(Bv, "b_fp")

        dec = dec_ref[...]                         # (B*Td, D)
        enc = enc_ref[...]                         # (B*Tenc, D)

        # --- GPT-2 causal self-attention on batch element 0 only (see header) -
        h1 = _layernorm(dec[:Td, :], ln1_g, ln1_b)
        qkv = jnp.dot(h1, w_qkv, preferred_element_type=jnp.float32) + b_qkv
        attn_h = _multihead_attention(qkv[:, :D], qkv[:, D:2 * D], qkv[:, 2 * D:],
                                      n_blocks=1, causal=True, bias=bias0,
                                      approx_recip=True)
        attn0 = jnp.dot(attn_h, w_ap, preferred_element_type=jnp.float32) + b_ap
        # NOTE: all dropouts (attn/resid/mlp, MHA p=0.1) are identity in eval mode.

        res1 = dec + jnp.concatenate([attn0] * B, axis=0)   # broadcast batch-0 attn

        # --- cross-attention (nn.MultiheadAttention), batched over B x heads --
        h2 = _layernorm(res1, ln2_g, ln2_b)
        qc = jnp.dot(h2, wq, preferred_element_type=jnp.float32) + bq        # (B*Td, D)
        kv = jnp.dot(enc, w_kv, preferred_element_type=jnp.float32) + b_kv   # (B*Tenc, 2D)
        cross_h = _multihead_attention(qc, kv[:, :D], kv[:, D:2 * D],
                                       n_blocks=B, approx_recip=True)
        cross = jnp.dot(cross_h, wo, preferred_element_type=jnp.float32) + bo
        res2 = cross + res1

        # --- GPT-2 MLP (c_fc -> gelu_new -> c_proj), one (B*Td, D) slab -------
        h3 = _layernorm(res2, ln3_g, ln3_b)
        mid = _gelu_new(jnp.dot(h3, w_fc, preferred_element_type=jnp.float32) + b_fc)
        y = jnp.dot(mid, w_fp, preferred_element_type=jnp.float32) + b_fp + res2

        # --- single unmasked, 128-lane-dense writeback (wrapper slices :D) ----
        out_ref[...] = jnp.concatenate(
            [y, jnp.zeros((B * Td, LANE - D), jnp.float32)], axis=1)

    return kernel


# ---------------------------------------------------------------------------
# Wrapper / glue
# ---------------------------------------------------------------------------
def _pack_params(p):
    d = dict(p)
    d["w_kv"] = jnp.concatenate([p["wk"], p["wv"]], axis=1)   # merged K|V projection
    d["b_kv"] = jnp.concatenate([p["bk"], p["bv"]], axis=1)
    w_slab = jnp.concatenate([d[n] for n, _ in _W_LAYOUT], axis=1)          # (32, 384)
    rows = [jnp.pad(d[n].reshape(1, -1), ((0, 0), (0, LANE - w)))
            for n, w in _B_LAYOUT]
    if B_SLAB_ROWS > len(rows):
        rows.append(jnp.zeros((B_SLAB_ROWS - len(rows), LANE), jnp.float32))
    b_slab = jnp.concatenate(rows, axis=0)                                   # (16, 128)
    return (w_slab.astype(jnp.float32),
            p["w_fp"].astype(jnp.float32),
            b_slab.astype(jnp.float32))


def attention_block_forward(params, decoder_stat, encoder_stat, attn_mask=None):
    B, Td, D = decoder_stat.shape
    Tenc = encoder_stat.shape[1]
    assert D == D_MODEL
    w_slab, w_fp, b_slab = _pack_params(params)
    dec_flat = decoder_stat.astype(jnp.float32).reshape(B * Td, D)
    enc_flat = encoder_stat.astype(jnp.float32).reshape(B * Tenc, D)

    has_mask = attn_mask is not None
    inputs = [dec_flat, enc_flat]
    if has_mask:
        # Mirrors (1 - mask.unsqueeze(1).unsqueeze(2)) * -1e9.  Only batch row 0
        # is consumed because the module adds outputs_attn[0] to every batch.
        m0 = attn_mask[0].astype(jnp.float32).reshape(1, Td)
        inputs.append((1.0 - m0) * -1e9)
    inputs += [w_slab, w_fp, b_slab]

    out = pl.pallas_call(                      # no grid: single invocation, no
        _build_kernel(B, Td, has_mask),        # pipelining / double-buffering
        out_shape=jax.ShapeDtypeStruct((B * Td, LANE), jnp.float32),
    )(*inputs)
    return out[:, :D].reshape(B, Td, D)


# ---------------------------------------------------------------------------
# Pure-JAX reference (same math, no Pallas, exact softmax) for a sanity check.
# ---------------------------------------------------------------------------
def reference_forward(p, dec, enc, attn_mask=None):
    B, Td, D = dec.shape
    Tenc = enc.shape[1]
    dec_f = dec.astype(jnp.float32).reshape(B * Td, D)
    enc_f = enc.astype(jnp.float32).reshape(B * Tenc, D)
    bias0 = None
    if attn_mask is not None:
        bias0 = (1.0 - attn_mask[0].astype(jnp.float32).reshape(1, Td)) * -1e9
    h1 = _layernorm(dec_f[:Td, :], p["ln1_g"], p["ln1_b"])
    qkv = h1 @ p["w_qkv"] + p["b_qkv"]
    attn_h = _multihead_attention(qkv[:, :D], qkv[:, D:2 * D], qkv[:, 2 * D:],
                                  n_blocks=1, causal=True, bias=bias0)
    attn0 = attn_h @ p["w_ap"] + p["b_ap"]
    res1 = dec_f + jnp.concatenate([attn0] * B, axis=0)
    h2 = _layernorm(res1, p["ln2_g"], p["ln2_b"])
    qc = h2 @ p["wq"] + p["bq"]
    kc = enc_f @ p["wk"] + p["bk"]
    vc = enc_f @ p["wv"] + p["bv"]
    cross = _multihead_attention(qc, kc, vc, n_blocks=B) @ p["wo"] + p["bo"]
    res2 = cross + res1
    h3 = _layernorm(res2, p["ln3_g"], p["ln3_b"])
    mid = _gelu_new(h3 @ p["w_fc"] + p["b_fc"])
    y = mid @ p["w_fp"] + p["b_fp"] + res2
    return y.reshape(B, Td, D)


# ---------------------------------------------------------------------------
# Deterministic parameter init (synthetic; module __init__ only fixes shapes).
# ---------------------------------------------------------------------------
def init_params(key, d=D_MODEL):
    ks = iter(jax.random.split(key, 32))

    def w(shape, scale=0.05):
        return scale * jax.random.normal(next(ks), shape, dtype=jnp.float32)

    def ln_pair():
        return (1.0 + 0.1 * jax.random.normal(next(ks), (1, d), dtype=jnp.float32),
                0.1 * jax.random.normal(next(ks), (1, d), dtype=jnp.float32))

    ln1_g, ln1_b = ln_pair()
    ln2_g, ln2_b = ln_pair()
    ln3_g, ln3_b = ln_pair()
    return dict(
        ln1_g=ln1_g, ln1_b=ln1_b,
        # GPT-2 c_attn / c_proj (Conv1D weights already (in, out))
        w_qkv=w((d, 3 * d)), b_qkv=w((1, 3 * d)),
        w_ap=w((d, d)), b_ap=w((1, d)),
        ln2_g=ln2_g, ln2_b=ln2_b,
        # nn.MultiheadAttention in_proj (pre-transposed per q/k/v) + out_proj
        wq=w((d, d)), wk=w((d, d)), wv=w((d, d)),
        bq=w((1, d)), bk=w((1, d)), bv=w((1, d)),
        wo=w((d, d)), bo=w((1, d)),
        ln3_g=ln3_g, ln3_b=ln3_b,
        # GPT-2 MLP: c_fc (d -> 4d), c_proj (4d -> d)
        w_fc=w((d, 4 * d)), b_fc=w((1, 4 * d)),
        w_fp=w((4 * d, d)), b_fp=w((1, d)),
    )


if __name__ == "__main__":
    key = jax.random.PRNGKey(0)
    kp, kd, ke = jax.random.split(key, 3)
    params = init_params(kp)

    B, T_DEC, T_ENC = 2, 8, 12
    decoder_stat = jax.random.normal(kd, (B, T_DEC, D_MODEL), dtype=jnp.float32)
    encoder_stat = jax.random.normal(ke, (B, T_ENC, D_MODEL), dtype=jnp.float32)

    # no-mask path (mask input / bias-add compiled out)
    out = attention_block_forward(params, decoder_stat, encoder_stat, attn_mask=None)
    out = jax.block_until_ready(out)
    ref = reference_forward(params, decoder_stat, encoder_stat, attn_mask=None)
    err = float(jnp.max(jnp.abs(out - ref)))
    assert out.shape == (B, T_DEC, D_MODEL), out.shape
    assert err < 5e-2, f"kernel/reference mismatch (no mask): max abs err = {err}"

    # masked path
    attn_mask = jnp.array([[1, 1, 1, 0, 1, 1, 0, 1],
                           [1, 1, 1, 1, 1, 1, 1, 1]], dtype=jnp.float32)
    out_m = attention_block_forward(params, decoder_stat, encoder_stat, attn_mask=attn_mask)
    out_m = jax.block_until_ready(out_m)
    ref_m = reference_forward(params, decoder_stat, encoder_stat, attn_mask=attn_mask)
    err_m = float(jnp.max(jnp.abs(out_m - ref_m)))
    assert err_m < 5e-2, f"kernel/reference mismatch (mask): max abs err = {err_m}"

    print("KERNEL_OK")
</pallas_src>

<mosaic_0001>
module attributes {stable_mosaic.version = 11 : i64} {
  func.func @kernel(%arg0: memref<16x32xf32, #tpu.memory_space<vmem>>, %arg1: memref<24x32xf32, #tpu.memory_space<vmem>>, %arg2: memref<32x384xf32, #tpu.memory_space<vmem>>, %arg3: memref<128x32xf32, #tpu.memory_space<vmem>>, %arg4: memref<16x128xf32, #tpu.memory_space<vmem>>, %arg5: memref<16x128xf32, #tpu.memory_space<vmem>>) attributes {dimension_semantics = [], scalar_prefetch = 0 : i64, scratch_operands = 0 : i64, tpu.core_type = #tpu.core_type<tc>} {
    %c0 = arith.constant 0 : index
    %c0_0 = arith.constant 0 : index
    %0 = vector.load %arg2[%c0, %c0_0] : memref<32x384xf32, #tpu.memory_space<vmem>>, vector<32x384xf32>
    %c0_1 = arith.constant 0 : index
    %c0_2 = arith.constant 0 : index
    %1 = vector.load %arg4[%c0_1, %c0_2] : memref<16x128xf32, #tpu.memory_space<vmem>>, vector<16x128xf32>
    %2 = vector.extract_strided_slice %0 {offsets = [0, 0], sizes = [32, 96], strides = [1, 1]} : vector<32x384xf32> to vector<32x96xf32>
    %3 = vector.extract_strided_slice %0 {offsets = [0, 96], sizes = [32, 32], strides = [1, 1]} : vector<32x384xf32> to vector<32x32xf32>
    %4 = vector.extract_strided_slice %0 {offsets = [0, 128], sizes = [32, 32], strides = [1, 1]} : vector<32x384xf32> to vector<32x32xf32>
    %5 = vector.extract_strided_slice %0 {offsets = [0, 160], sizes = [32, 64], strides = [1, 1]} : vector<32x384xf32> to vector<32x64xf32>
    %6 = vector.extract_strided_slice %0 {offsets = [0, 224], sizes = [32, 32], strides = [1, 1]} : vector<32x384xf32> to vector<32x32xf32>
    %7 = vector.extract_strided_slice %0 {offsets = [0, 256], sizes = [32, 128], strides = [1, 1]} : vector<32x384xf32> to vector<32x128xf32>
    %c0_3 = arith.constant 0 : index
    %c0_4 = arith.constant 0 : index
    %8 = vector.load %arg3[%c0_3, %c0_4] : memref<128x32xf32, #tpu.memory_space<vmem>>, vector<128x32xf32>
    %9 = vector.extract_strided_slice %1 {offsets = [0, 0], sizes = [1, 32], strides = [1, 1]} : vector<16x128xf32> to vector<1x32xf32>
    %10 = vector.extract_strided_slice %1 {offsets = [1, 0], sizes = [1, 32], strides = [1, 1]} : vector<16x128xf32> to vector<1x32xf32>
    %11 = vector.extract_strided_slice %1 {offsets = [2, 0], sizes = [1, 32], strides = [1, 1]} : vector<16x128xf32> to vector<1x32xf32>
    %12 = vector.extract_strided_slice %1 {offsets = [3, 0], sizes = [1, 32], strides = [1, 1]} : vector<16x128xf32> to vector<1x32xf32>
    %13 = vector.extract_strided_slice %1 {offsets = [4, 0], sizes = [1, 32], strides = [1, 1]} : vector<16x128xf32> to vector<1x32xf32>
    %14 = vector.extract_strided_slice %1 {offsets = [5, 0], sizes = [1, 32], strides = [1, 1]} : vector<16x128xf32> to vector<1x32xf32>
    %15 = vector.extract_strided_slice %1 {offsets = [6, 0], sizes = [1, 96], strides = [1, 1]} : vector<16x128xf32> to vector<1x96xf32>
    %16 = vector.extract_strided_slice %1 {offsets = [7, 0], sizes = [1, 32], strides = [1, 1]} : vector<16x128xf32> to vector<1x32xf32>
    %17 = vector.extract_strided_slice %1 {offsets = [8, 0], sizes = [1, 32], strides = [1, 1]} : vector<16x128xf32> to vector<1x32xf32>
    %18 = vector.extract_strided_slice %1 {offsets = [9, 0], sizes = [1, 64], strides = [1, 1]} : vector<16x128xf32> to vector<1x64xf32>
    %19 = vector.extract_strided_slice %1 {offsets = [10, 0], sizes = [1, 32], strides = [1, 1]} : vector<16x128xf32> to vector<1x32xf32>
    %20 = vector.extract_strided_slice %1 {offsets = [11, 0], sizes = [1, 128], strides = [1, 1]} : vector<16x128xf32> to vector<1x128xf32>
    %21 = vector.extract_strided_slice %1 {offsets = [12, 0], sizes = [1, 32], strides = [1, 1]} : vector<16x128xf32> to vector<1x32xf32>
    %c0_5 = arith.constant 0 : index
    %c0_6 = arith.constant 0 : index
    %22 = vector.load %arg0[%c0_5, %c0_6] : memref<16x32xf32, #tpu.memory_space<vmem>>, vector<16x32xf32>
    %c0_7 = arith.constant 0 : index
    %c0_8 = arith.constant 0 : index
    %23 = vector.load %arg1[%c0_7, %c0_8] : memref<24x32xf32, #tpu.memory_space<vmem>>, vector<24x32xf32>
    %24 = vector.extract_strided_slice %22 {offsets = [0, 0], sizes = [8, 32], strides = [1, 1]} : vector<16x32xf32> to vector<8x32xf32>
    %cst = arith.constant dense<0.000000e+00> : vector<8xf32>
    %25 = vector.multi_reduction <add>, %24, %cst [1] : vector<8x32xf32> to vector<8xf32>
    %26 = vector.shape_cast %25 : vector<8xf32> to vector<8x1xf32>
    %cst_9 = arith.constant 3.200000e+01 : f32
    %27 = vector.broadcast %cst_9 : f32 to vector<8x1xf32>
    %28 = arith.divf %26, %27 : vector<8x1xf32>
    %29 = vector.broadcast %28 : vector<8x1xf32> to vector<8x32xf32>
    %30 = arith.subf %24, %29 : vector<8x32xf32>
    %31 = arith.mulf %30, %30 : vector<8x32xf32>
    %cst_10 = arith.constant dense<0.000000e+00> : vector<8xf32>
    %32 = vector.multi_reduction <add>, %31, %cst_10 [1] : vector<8x32xf32> to vector<8xf32>
    %33 = vector.shape_cast %32 : vector<8xf32> to vector<8x1xf32>
    %cst_11 = arith.constant 3.200000e+01 : f32
    %34 = vector.broadcast %cst_11 : f32 to vector<8x1xf32>
    %35 = arith.divf %33, %34 : vector<8x1xf32>
    %cst_12 = arith.constant 9.99999974E-6 : f32
    %36 = vector.broadcast %cst_12 : f32 to vector<8x1xf32>
    %37 = arith.addf %35, %36 : vector<8x1xf32>
    %38 = math.rsqrt %37 : vector<8x1xf32>
    %39 = vector.broadcast %38 : vector<8x1xf32> to vector<8x32xf32>
    %40 = arith.mulf %30, %39 : vector<8x32xf32>
    %41 = vector.broadcast %9 : vector<1x32xf32> to vector<8x32xf32>
    %42 = arith.mulf %40, %41 : vector<8x32xf32>
    %43 = vector.broadcast %10 : vector<1x32xf32> to vector<8x32xf32>
    %44 = arith.addf %42, %43 : vector<8x32xf32>
    %cst_13 = arith.constant dense<0.000000e+00> : vector<8x96xf32>
    %45 = tpu.matmul %44, %2, %cst_13 {dimension_numbers = #tpu.dot_dimension_numbers<[1], [0], [0], [1], [0, 0, 1, 1], [], []>} : vector<8x32xf32>, vector<32x96xf32>, vector<8x96xf32> -> vector<8x96xf32>
    %46 = vector.broadcast %15 : vector<1x96xf32> to vector<8x96xf32>
    %47 = arith.addf %45, %46 : vector<8x96xf32>
    %48 = vector.extract_strided_slice %47 {offsets = [0, 0], sizes = [8, 32], strides = [1, 1]} : vector<8x96xf32> to vector<8x32xf32>
    %49 = vector.extract_strided_slice %47 {offsets = [0, 32], sizes = [8, 32], strides = [1, 1]} : vector<8x96xf32> to vector<8x32xf32>
    %50 = vector.extract_strided_slice %47 {offsets = [0, 64], sizes = [8, 32], strides = [1, 1]} : vector<8x96xf32> to vector<8x32xf32>
    %51 = vector.extract_strided_slice %48 {offsets = [0, 0], sizes = [8, 8], strides = [1, 1]} : vector<8x32xf32> to vector<8x8xf32>
    %52 = vector.extract_strided_slice %48 {offsets = [0, 8], sizes = [8, 8], strides = [1, 1]} : vector<8x32xf32> to vector<8x8xf32>
    %53 = vector.extract_strided_slice %48 {offsets = [0, 16], sizes = [8, 8], strides = [1, 1]} : vector<8x32xf32> to vector<8x8xf32>
    %54 = vector.extract_strided_slice %48 {offsets = [0, 24], sizes = [8, 8], strides = [1, 1]} : vector<8x32xf32> to vector<8x8xf32>
    %55 = vector.shape_cast %51 : vector<8x8xf32> to vector<1x8x8xf32>
    %56 = vector.shape_cast %52 : vector<8x8xf32> to vector<1x8x8xf32>
    %57 = vector.shape_cast %53 : vector<8x8xf32> to vector<1x8x8xf32>
    %58 = vector.shape_cast %54 : vector<8x8xf32> to vector<1x8x8xf32>
    %59 = tpu.concatenate %55, %56, %57, %58 in 0 : vector<1x8x8xf32>, vector<1x8x8xf32>, vector<1x8x8xf32>, vector<1x8x8xf32> -> vector<4x8x8xf32>
    %60 = vector.extract_strided_slice %49 {offsets = [0, 0], sizes = [8, 8], strides = [1, 1]} : vector<8x32xf32> to vector<8x8xf32>
    %61 = vector.extract_strided_slice %49 {offsets = [0, 8], sizes = [8, 8], strides = [1, 1]} : vector<8x32xf32> to vector<8x8xf32>
    %62 = vector.extract_strided_slice %49 {offsets = [0, 16], sizes = [8, 8], strides = [1, 1]} : vector<8x32xf32> to vector<8x8xf32>
    %63 = vector.extract_strided_slice %49 {offsets = [0, 24], sizes = [8, 8], strides = [1, 1]} : vector<8x32xf32> to vector<8x8xf32>
    %64 = vector.shape_cast %60 : vector<8x8xf32> to vector<1x8x8xf32>
    %65 = vector.shape_cast %61 : vector<8x8xf32> to vector<1x8x8xf32>
    %66 = vector.shape_cast %62 : vector<8x8xf32> to vector<1x8x8xf32>
    %67 = vector.shape_cast %63 : vector<8x8xf32> to vector<1x8x8xf32>
    %68 = tpu.concatenate %64, %65, %66, %67 in 0 : vector<1x8x8xf32>, vector<1x8x8xf32>, vector<1x8x8xf32>, vector<1x8x8xf32> -> vector<4x8x8xf32>
    %69 = vector.extract_strided_slice %50 {offsets = [0, 0], sizes = [8, 8], strides = [1, 1]} : vector<8x32xf32> to vector<8x8xf32>
    %70 = vector.extract_strided_slice %50 {offsets = [0, 8], sizes = [8, 8], strides = [1, 1]} : vector<8x32xf32> to vector<8x8xf32>
    %71 = vector.extract_strided_slice %50 {offsets = [0, 16], sizes = [8, 8], strides = [1, 1]} : vector<8x32xf32> to vector<8x8xf32>
    %72 = vector.extract_strided_slice %50 {offsets = [0, 24], sizes = [8, 8], strides = [1, 1]} : vector<8x32xf32> to vector<8x8xf32>
    %73 = vector.shape_cast %69 : vector<8x8xf32> to vector<1x8x8xf32>
    %74 = vector.shape_cast %70 : vector<8x8xf32> to vector<1x8x8xf32>
    %75 = vector.shape_cast %71 : vector<8x8xf32> to vector<1x8x8xf32>
    %76 = vector.shape_cast %72 : vector<8x8xf32> to vector<1x8x8xf32>
    %77 = tpu.concatenate %73, %74, %75, %76 in 0 : vector<1x8x8xf32>, vector<1x8x8xf32>, vector<1x8x8xf32>, vector<1x8x8xf32> -> vector<4x8x8xf32>
    "tpu.trace_start"() <{level = 10 : i32, message = "zqd,zkd->zqk"}> : () -> ()
    %cst_14 = arith.constant dense<0.000000e+00> : vector<4x8x8xf32>
    %78 = tpu.matmul %59, %68, %cst_14 {dimension_numbers = #tpu.dot_dimension_numbers<[2], [2], [1], [1], [0, 0, 0, 1, 1, 1], [0], [0]>} : vector<4x8x8xf32>, vector<4x8x8xf32>, vector<4x8x8xf32> -> vector<4x8x8xf32>
    "tpu.trace_stop"() : () -> ()
    %cst_15 = arith.constant 0.353553385 : f32
    %79 = vector.broadcast %cst_15 : f32 to vector<4x8x8xf32>
    %80 = arith.mulf %78, %79 : vector<4x8x8xf32>
    %81 = tpu.iota {dimensions = array<i32: 0>} : vector<8x8xi32>
    %82 = tpu.iota {dimensions = array<i32: 1>} : vector<8x8xi32>
    %83 = arith.cmpi sle, %82, %81 : vector<8x8xi32>
    %84 = vector.shape_cast %83 : vector<8x8xi1> to vector<1x8x8xi1>
    %cst_16 = arith.constant -3.40282347E+38 : f32
    %85 = vector.shape_cast %84 : vector<1x8x8xi1> to vector<1x8x8xi1>
    %86 = vector.broadcast %85 : vector<1x8x8xi1> to vector<4x8x8xi1>
    %87 = vector.broadcast %cst_16 : f32 to vector<4x8x8xf32>
    %88 = arith.select %86, %80, %87 : vector<4x8x8xi1>, vector<4x8x8xf32>
    %cst_17 = arith.constant dense<0xFF800000> : vector<4x8xf32>
    %89 = vector.multi_reduction <maximumf>, %88, %cst_17 [2] : vector<4x8x8xf32> to vector<4x8xf32>
    %90 = vector.shape_cast %89 : vector<4x8xf32> to vector<4x8x1xf32>
    %91 = vector.broadcast %90 : vector<4x8x1xf32> to vector<4x8x8xf32>
    %92 = arith.subf %88, %91 : vector<4x8x8xf32>
    %93 = math.exp %92 : vector<4x8x8xf32>
    %cst_18 = arith.constant dense<0.000000e+00> : vector<4x8xf32>
    %94 = vector.multi_reduction <add>, %93, %cst_18 [2] : vector<4x8x8xf32> to vector<4x8xf32>
    %95 = vector.shape_cast %94 : vector<4x8xf32> to vector<4x8x1xf32>
    %96 = tpu.reciprocal %95 {approx = true} : vector<4x8x1xf32> -> vector<4x8x1xf32>
    %97 = vector.broadcast %96 : vector<4x8x1xf32> to vector<4x8x8xf32>
    %98 = arith.mulf %93, %97 : vector<4x8x8xf32>
    "tpu.trace_start"() <{level = 10 : i32, message = "zqk,zkd->zqd"}> : () -> ()
    %cst_19 = arith.constant dense<0.000000e+00> : vector<4x8x8xf32>
    %99 = tpu.matmul %98, %77, %cst_19 {dimension_numbers = #tpu.dot_dimension_numbers<[2], [1], [1], [2], [0, 0, 0, 1, 1, 2], [0], [0]>} : vector<4x8x8xf32>, vector<4x8x8xf32>, vector<4x8x8xf32> -> vector<4x8x8xf32>
    "tpu.trace_stop"() : () -> ()
    %100 = vector.extract_strided_slice %99 {offsets = [0, 0, 0], sizes = [1, 8, 8], strides = [1, 1, 1]} : vector<4x8x8xf32> to vector<1x8x8xf32>
    %101 = vector.shape_cast %100 : vector<1x8x8xf32> to vector<8x8xf32>
    %102 = vector.extract_strided_slice %99 {offsets = [1, 0, 0], sizes = [1, 8, 8], strides = [1, 1, 1]} : vector<4x8x8xf32> to vector<1x8x8xf32>
    %103 = vector.shape_cast %102 : vector<1x8x8xf32> to vector<8x8xf32>
    %104 = vector.extract_strided_slice %99 {offsets = [2, 0, 0], sizes = [1, 8, 8], strides = [1, 1, 1]} : vector<4x8x8xf32> to vector<1x8x8xf32>
    %105 = vector.shape_cast %104 : vector<1x8x8xf32> to vector<8x8xf32>
    %106 = vector.extract_strided_slice %99 {offsets = [3, 0, 0], sizes = [1, 8, 8], strides = [1, 1, 1]} : vector<4x8x8xf32> to vector<1x8x8xf32>
    %107 = vector.shape_cast %106 : vector<1x8x8xf32> to vector<8x8xf32>
    %108 = tpu.concatenate %101, %103, %105, %107 in 1 : vector<8x8xf32>, vector<8x8xf32>, vector<8x8xf32>, vector<8x8xf32> -> vector<8x32xf32>
    %cst_20 = arith.constant dense<0.000000e+00> : vector<8x32xf32>
    %109 = tpu.matmul %108, %3, %cst_20 {dimension_numbers = #tpu.dot_dimension_numbers<[1], [0], [0], [1], [0, 0, 1, 1], [], []>} : vector<8x32xf32>, vector<32x32xf32>, vector<8x32xf32> -> vector<8x32xf32>
    %110 = vector.broadcast %16 : vector<1x32xf32> to vector<8x32xf32>
    %111 = arith.addf %109, %110 : vector<8x32xf32>
    %112 = tpu.concatenate %111, %111 in 0 : vector<8x32xf32>, vector<8x32xf32> -> vector<16x32xf32>
    %113 = arith.addf %22, %112 : vector<16x32xf32>
    %cst_21 = arith.constant dense<0.000000e+00> : vector<16xf32>
    %114 = vector.multi_reduction <add>, %113, %cst_21 [1] : vector<16x32xf32> to vector<16xf32>
    %115 = vector.shape_cast %114 : vector<16xf32> to vector<16x1xf32>
    %cst_22 = arith.constant 3.200000e+01 : f32
    %116 = vector.broadcast %cst_22 : f32 to vector<16x1xf32>
    %117 = arith.divf %115, %116 : vector<16x1xf32>
    %118 = vector.broadcast %117 : vector<16x1xf32> to vector<16x32xf32>
    %119 = arith.subf %113, %118 : vector<16x32xf32>
    %120 = arith.mulf %119, %119 : vector<16x32xf32>
    %cst_23 = arith.constant dense<0.000000e+00> : vector<16xf32>
    %121 = vector.multi_reduction <add>, %120, %cst_23 [1] : vector<16x32xf32> to vector<16xf32>
    %122 = vector.shape_cast %121 : vector<16xf32> to vector<16x1xf32>
    %cst_24 = arith.constant 3.200000e+01 : f32
    %123 = vector.broadcast %cst_24 : f32 to vector<16x1xf32>
    %124 = arith.divf %122, %123 : vector<16x1xf32>
    %cst_25 = arith.constant 9.99999974E-6 : f32
    %125 = vector.broadcast %cst_25 : f32 to vector<16x1xf32>
    %126 = arith.addf %124, %125 : vector<16x1xf32>
    %127 = math.rsqrt %126 : vector<16x1xf32>
    %128 = vector.broadcast %127 : vector<16x1xf32> to vector<16x32xf32>
    %129 = arith.mulf %119, %128 : vector<16x32xf32>
    %130 = vector.broadcast %11 : vector<1x32xf32> to vector<16x32xf32>
    %131 = arith.mulf %129, %130 : vector<16x32xf32>
    %132 = vector.broadcast %12 : vector<1x32xf32> to vector<16x32xf32>
    %133 = arith.addf %131, %132 : vector<16x32xf32>
    %cst_26 = arith.constant dense<0.000000e+00> : vector<16x32xf32>
    %134 = tpu.matmul %133, %4, %cst_26 {dimension_numbers = #tpu.dot_dimension_numbers<[1], [0], [0], [1], [0, 0, 1, 1], [], []>} : vector<16x32xf32>, vector<32x32xf32>, vector<16x32xf32> -> vector<16x32xf32>
    %135 = vector.broadcast %17 : vector<1x32xf32> to vector<16x32xf32>
    %136 = arith.addf %134, %135 : vector<16x32xf32>
    %cst_27 = arith.constant dense<0.000000e+00> : vector<24x64xf32>
    %137 = tpu.matmul %23, %5, %cst_27 {dimension_numbers = #tpu.dot_dimension_numbers<[1], [0], [0], [1], [0, 0, 1, 1], [], []>} : vector<24x32xf32>, vector<32x64xf32>, vector<24x64xf32> -> vector<24x64xf32>
    %138 = vector.broadcast %18 : vector<1x64xf32> to vector<24x64xf32>
    %139 = arith.addf %137, %138 : vector<24x64xf32>
    %140 = vector.extract_strided_slice %139 {offsets = [0, 0], sizes = [24, 32], strides = [1, 1]} : vector<24x64xf32> to vector<24x32xf32>
    %141 = vector.extract_strided_slice %139 {offsets = [0, 32], sizes = [24, 32], strides = [1, 1]} : vector<24x64xf32> to vector<24x32xf32>
    %142 = vector.extract_strided_slice %136 {offsets = [0, 0], sizes = [8, 32], strides = [1, 1]} : vector<16x32xf32> to vector<8x32xf32>
    %143 = vector.extract_strided_slice %142 {offsets = [0, 0], sizes = [8, 8], strides = [1, 1]} : vector<8x32xf32> to vector<8x8xf32>
    %144 = vector.extract_strided_slice %142 {offsets = [0, 8], sizes = [8, 8], strides = [1, 1]} : vector<8x32xf32> to vector<8x8xf32>
    %145 = vector.extract_strided_slice %142 {offsets = [0, 16], sizes = [8, 8], strides = [1, 1]} : vector<8x32xf32> to vector<8x8xf32>
    %146 = vector.extract_strided_slice %142 {offsets = [0, 24], sizes = [8, 8], strides = [1, 1]} : vector<8x32xf32> to vector<8x8xf32>
    %147 = vector.extract_strided_slice %136 {offsets = [8, 0], sizes = [8, 32], strides = [1, 1]} : vector<16x32xf32> to vector<8x32xf32>
    %148 = vector.extract_strided_slice %147 {offsets = [0, 0], sizes = [8, 8], strides = [1, 1]} : vector<8x32xf32> to vector<8x8xf32>
    %149 = vector.extract_strided_slice %147 {offsets = [0, 8], sizes = [8, 8], strides = [1, 1]} : vector<8x32xf32> to vector<8x8xf32>
    %150 = vector.extract_strided_slice %147 {offsets = [0, 16], sizes = [8, 8], strides = [1, 1]} : vector<8x32xf32> to vector<8x8xf32>
    %151 = vector.extract_strided_slice %147 {offsets = [0, 24], sizes = [8, 8], strides = [1, 1]} : vector<8x32xf32> to vector<8x8xf32>
    %152 = vector.shape_cast %143 : vector<8x8xf32> to vector<1x8x8xf32>
    %153 = vector.shape_cast %144 : vector<8x8xf32> to vector<1x8x8xf32>
    %154 = vector.shape_cast %145 : vector<8x8xf32> to vector<1x8x8xf32>
    %155 = vector.shape_cast %146 : vector<8x8xf32> to vector<1x8x8xf32>
    %156 = vector.shape_cast %148 : vector<8x8xf32> to vector<1x8x8xf32>
    %157 = vector.shape_cast %149 : vector<8x8xf32> to vector<1x8x8xf32>
    %158 = vector.shape_cast %150 : vector<8x8xf32> to vector<1x8x8xf32>
    %159 = vector.shape_cast %151 : vector<8x8xf32> to vector<1x8x8xf32>
    %160 = tpu.concatenate %152, %153, %154, %155, %156, %157, %158, %159 in 0 : vector<1x8x8xf32>, vector<1x8x8xf32>, vector<1x8x8xf32>, vector<1x8x8xf32>, vector<1x8x8xf32>, vector<1x8x8xf32>, vector<1x8x8xf32>, vector<1x8x8xf32> -> vector<8x8x8xf32>
    %161 = vector.extract_strided_slice %140 {offsets = [0, 0], sizes = [12, 32], strides = [1, 1]} : vector<24x32xf32> to vector<12x32xf32>
    %162 = vector.extract_strided_slice %161 {offsets = [0, 0], sizes = [12, 8], strides = [1, 1]} : vector<12x32xf32> to vector<12x8xf32>
    %163 = vector.extract_strided_slice %161 {offsets = [0, 8], sizes = [12, 8], strides = [1, 1]} : vector<12x32xf32> to vector<12x8xf32>
    %164 = vector.extract_strided_slice %161 {offsets = [0, 16], sizes = [12, 8], strides = [1, 1]} : vector<12x32xf32> to vector<12x8xf32>
    %165 = vector.extract_strided_slice %161 {offsets = [0, 24], sizes = [12, 8], strides = [1, 1]} : vector<12x32xf32> to vector<12x8xf32>
    %166 = vector.extract_strided_slice %140 {offsets = [12, 0], sizes = [12, 32], strides = [1, 1]} : vector<24x32xf32> to vector<12x32xf32>
    %167 = vector.extract_strided_slice %166 {offsets = [0, 0], sizes = [12, 8], strides = [1, 1]} : vector<12x32xf32> to vector<12x8xf32>
    %168 = vector.extract_strided_slice %166 {offsets = [0, 8], sizes = [12, 8], strides = [1, 1]} : vector<12x32xf32> to vector<12x8xf32>
    %169 = vector.extract_strided_slice %166 {offsets = [0, 16], sizes = [12, 8], strides = [1, 1]} : vector<12x32xf32> to vector<12x8xf32>
    %170 = vector.extract_strided_slice %166 {offsets = [0, 24], sizes = [12, 8], strides = [1, 1]} : vector<12x32xf32> to vector<12x8xf32>
    %171 = vector.shape_cast %162 : vector<12x8xf32> to vector<1x12x8xf32>
    %172 = vector.shape_cast %163 : vector<12x8xf32> to vector<1x12x8xf32>
    %173 = vector.shape_cast %164 : vector<12x8xf32> to vector<1x12x8xf32>
    %174 = vector.shape_cast %165 : vector<12x8xf32> to vector<1x12x8xf32>
    %175 = vector.shape_cast %167 : vector<12x8xf32> to vector<1x12x8xf32>
    %176 = vector.shape_cast %168 : vector<12x8xf32> to vector<1x12x8xf32>
    %177 = vector.shape_cast %169 : vector<12x8xf32> to vector<1x12x8xf32>
    %178 = vector.shape_cast %170 : vector<12x8xf32> to vector<1x12x8xf32>
    %179 = tpu.concatenate %171, %172, %173, %174, %175, %176, %177, %178 in 0 : vector<1x12x8xf32>, vector<1x12x8xf32>, vector<1x12x8xf32>, vector<1x12x8xf32>, vector<1x12x8xf32>, vector<1x12x8xf32>, vector<1x12x8xf32>, vector<1x12x8xf32> -> vector<8x12x8xf32>
    %180 = vector.extract_strided_slice %141 {offsets = [0, 0], sizes = [12, 32], strides = [1, 1]} : vector<24x32xf32> to vector<12x32xf32>
    %181 = vector.extract_strided_slice %180 {offsets = [0, 0], sizes = [12, 8], strides = [1, 1]} : vector<12x32xf32> to vector<12x8xf32>
    %182 = vector.extract_strided_slice %180 {offsets = [0, 8], sizes = [12, 8], strides = [1, 1]} : vector<12x32xf32> to vector<12x8xf32>
    %183 = vector.extract_strided_slice %180 {offsets = [0, 16], sizes = [12, 8], strides = [1, 1]} : vector<12x32xf32> to vector<12x8xf32>
    %184 = vector.extract_strided_slice %180 {offsets = [0, 24], sizes = [12, 8], strides = [1, 1]} : vector<12x32xf32> to vector<12x8xf32>
    %185 = vector.extract_strided_slice %141 {offsets = [12, 0], sizes = [12, 32], strides = [1, 1]} : vector<24x32xf32> to vector<12x32xf32>
    %186 = vector.extract_strided_slice %185 {offsets = [0, 0], sizes = [12, 8], strides = [1, 1]} : vector<12x32xf32> to vector<12x8xf32>
    %187 = vector.extract_strided_slice %185 {offsets = [0, 8], sizes = [12, 8], strides = [1, 1]} : vector<12x32xf32> to vector<12x8xf32>
    %188 = vector.extract_strided_slice %185 {offsets = [0, 16], sizes = [12, 8], strides = [1, 1]} : vector<12x32xf32> to vector<12x8xf32>
    %189 = vector.extract_strided_slice %185 {offsets = [0, 24], sizes = [12, 8], strides = [1, 1]} : vector<12x32xf32> to vector<12x8xf32>
    %190 = vector.shape_cast %181 : vector<12x8xf32> to vector<1x12x8xf32>
    %191 = vector.shape_cast %182 : vector<12x8xf32> to vector<1x12x8xf32>
    %192 = vector.shape_cast %183 : vector<12x8xf32> to vector<1x12x8xf32>
    %193 = vector.shape_cast %184 : vector<12x8xf32> to vector<1x12x8xf32>
    %194 = vector.shape_cast %186 : vector<12x8xf32> to vector<1x12x8xf32>
    %195 = vector.shape_cast %187 : vector<12x8xf32> to vector<1x12x8xf32>
    %196 = vector.shape_cast %188 : vector<12x8xf32> to vector<1x12x8xf32>
    %197 = vector.shape_cast %189 : vector<12x8xf32> to vector<1x12x8xf32>
    %198 = tpu.concatenate %190, %191, %192, %193, %194, %195, %196, %197 in 0 : vector<1x12x8xf32>, vector<1x12x8xf32>, vector<1x12x8xf32>, vector<1x12x8xf32>, vector<1x12x8xf32>, vector<1x12x8xf32>, vector<1x12x8xf32>, vector<1x12x8xf32> -> vector<8x12x8xf32>
    "tpu.trace_start"() <{level = 10 : i32, message = "zqd,zkd->zqk"}> : () -> ()
    %cst_28 = arith.constant dense<0.000000e+00> : vector<8x8x12xf32>
    %199 = tpu.matmul %160, %179, %cst_28 {dimension_numbers = #tpu.dot_dimension_numbers<[2], [2], [1], [1], [0, 0, 0, 1, 1, 1], [0], [0]>} : vector<8x8x8xf32>, vector<8x12x8xf32>, vector<8x8x12xf32> -> vector<8x8x12xf32>
    "tpu.trace_stop"() : () -> ()
    %cst_29 = arith.constant 0.353553385 : f32
    %200 = vector.broadcast %cst_29 : f32 to vector<8x8x12xf32>
    %201 = arith.mulf %199, %200 : vector<8x8x12xf32>
    %cst_30 = arith.constant dense<0xFF800000> : vector<8x8xf32>
    %202 = vector.multi_reduction <maximumf>, %201, %cst_30 [2] : vector<8x8x12xf32> to vector<8x8xf32>
    %203 = vector.shape_cast %202 : vector<8x8xf32> to vector<8x8x1xf32>
    %204 = vector.broadcast %203 : vector<8x8x1xf32> to vector<8x8x12xf32>
    %205 = arith.subf %201, %204 : vector<8x8x12xf32>
    %206 = math.exp %205 : vector<8x8x12xf32>
    %cst_31 = arith.constant dense<0.000000e+00> : vector<8x8xf32>
    %207 = vector.multi_reduction <add>, %206, %cst_31 [2] : vector<8x8x12xf32> to vector<8x8xf32>
    %208 = vector.shape_cast %207 : vector<8x8xf32> to vector<8x8x1xf32>
    %209 = tpu.reciprocal %208 {approx = true} : vector<8x8x1xf32> -> vector<8x8x1xf32>
    %210 = vector.broadcast %209 : vector<8x8x1xf32> to vector<8x8x12xf32>
    %211 = arith.mulf %206, %210 : vector<8x8x12xf32>
    "tpu.trace_start"() <{level = 10 : i32, message = "zqk,zkd->zqd"}> : () -> ()
    %cst_32 = arith.constant dense<0.000000e+00> : vector<8x8x8xf32>
    %212 = tpu.matmul %211, %198, %cst_32 {dimension_numbers = #tpu.dot_dimension_numbers<[2], [1], [1], [2], [0, 0, 0, 1, 1, 2], [0], [0]>} : vector<8x8x12xf32>, vector<8x12x8xf32>, vector<8x8x8xf32> -> vector<8x8x8xf32>
    "tpu.trace_stop"() : () -> ()
    %213 = vector.extract_strided_slice %212 {offsets = [0, 0, 0], sizes = [1, 8, 8], strides = [1, 1, 1]} : vector<8x8x8xf32> to vector<1x8x8xf32>
    %214 = vector.shape_cast %213 : vector<1x8x8xf32> to vector<8x8xf32>
    %215 = vector.extract_strided_slice %212 {offsets = [1, 0, 0], sizes = [1, 8, 8], strides = [1, 1, 1]} : vector<8x8x8xf32> to vector<1x8x8xf32>
    %216 = vector.shape_cast %215 : vector<1x8x8xf32> to vector<8x8xf32>
    %217 = vector.extract_strided_slice %212 {offsets = [2, 0, 0], sizes = [1, 8, 8], strides = [1, 1, 1]} : vector<8x8x8xf32> to vector<1x8x8xf32>
    %218 = vector.shape_cast %217 : vector<1x8x8xf32> to vector<8x8xf32>
    %219 = vector.extract_strided_slice %212 {offsets = [3, 0, 0], sizes = [1, 8, 8], strides = [1, 1, 1]} : vector<8x8x8xf32> to vector<1x8x8xf32>
    %220 = vector.shape_cast %219 : vector<1x8x8xf32> to vector<8x8xf32>
    %221 = tpu.concatenate %214, %216, %218, %220 in 1 : vector<8x8xf32>, vector<8x8xf32>, vector<8x8xf32>, vector<8x8xf32> -> vector<8x32xf32>
    %222 = vector.extract_strided_slice %212 {offsets = [4, 0, 0], sizes = [1, 8, 8], strides = [1, 1, 1]} : vector<8x8x8xf32> to vector<1x8x8xf32>
    %223 = vector.shape_cast %222 : vector<1x8x8xf32> to vector<8x8xf32>
    %224 = vector.extract_strided_slice %212 {offsets = [5, 0, 0], sizes = [1, 8, 8], strides = [1, 1, 1]} : vector<8x8x8xf32> to vector<1x8x8xf32>
    %225 = vector.shape_cast %224 : vector<1x8x8xf32> to vector<8x8xf32>
    %226 = vector.extract_strided_slice %212 {offsets = [6, 0, 0], sizes = [1, 8, 8], strides = [1, 1, 1]} : vector<8x8x8xf32> to vector<1x8x8xf32>
    %227 = vector.shape_cast %226 : vector<1x8x8xf32> to vector<8x8xf32>
    %228 = vector.extract_strided_slice %212 {offsets = [7, 0, 0], sizes = [1, 8, 8], strides = [1, 1, 1]} : vector<8x8x8xf32> to vector<1x8x8xf32>
    %229 = vector.shape_cast %228 : vector<1x8x8xf32> to vector<8x8xf32>
    %230 = tpu.concatenate %223, %225, %227, %229 in 1 : vector<8x8xf32>, vector<8x8xf32>, vector<8x8xf32>, vector<8x8xf32> -> vector<8x32xf32>
    %231 = tpu.concatenate %221, %230 in 0 : vector<8x32xf32>, vector<8x32xf32> -> vector<16x32xf32>
    %cst_33 = arith.constant dense<0.000000e+00> : vector<16x32xf32>
    %232 = tpu.matmul %231, %6, %cst_33 {dimension_numbers = #tpu.dot_dimension_numbers<[1], [0], [0], [1], [0, 0, 1, 1], [], []>} : vector<16x32xf32>, vector<32x32xf32>, vector<16x32xf32> -> vector<16x32xf32>
    %233 = vector.broadcast %19 : vector<1x32xf32> to vector<16x32xf32>
    %234 = arith.addf %232, %233 : vector<16x32xf32>
    %235 = arith.addf %234, %113 : vector<16x32xf32>
    %cst_34 = arith.constant dense<0.000000e+00> : vector<16xf32>
    %236 = vector.multi_reduction <add>, %235, %cst_34 [1] : vector<16x32xf32> to vector<16xf32>
    %237 = vector.shape_cast %236 : vector<16xf32> to vector<16x1xf32>
    %cst_35 = arith.constant 3.200000e+01 : f32
    %238 = vector.broadcast %cst_35 : f32 to vector<16x1xf32>
    %239 = arith.divf %237, %238 : vector<16x1xf32>
    %240 = vector.broadcast %239 : vector<16x1xf32> to vector<16x32xf32>
    %241 = arith.subf %235, %240 : vector<16x32xf32>
    %242 = arith.mulf %241, %241 : vector<16x32xf32>
    %cst_36 = arith.constant dense<0.000000e+00> : vector<16xf32>
    %243 = vector.multi_reduction <add>, %242, %cst_36 [1] : vector<16x32xf32> to vector<16xf32>
    %244 = vector.shape_cast %243 : vector<16xf32> to vector<16x1xf32>
    %cst_37 = arith.constant 3.200000e+01 : f32
    %245 = vector.broadcast %cst_37 : f32 to vector<16x1xf32>
    %246 = arith.divf %244, %245 : vector<16x1xf32>
    %cst_38 = arith.constant 9.99999974E-6 : f32
    %247 = vector.broadcast %cst_38 : f32 to vector<16x1xf32>
    %248 = arith.addf %246, %247 : vector<16x1xf32>
    %249 = math.rsqrt %248 : vector<16x1xf32>
    %250 = vector.broadcast %249 : vector<16x1xf32> to vector<16x32xf32>
    %251 = arith.mulf %241, %250 : vector<16x32xf32>
    %252 = vector.broadcast %13 : vector<1x32xf32> to vector<16x32xf32>
    %253 = arith.mulf %251, %252 : vector<16x32xf32>
    %254 = vector.broadcast %14 : vector<1x32xf32> to vector<16x32xf32>
    %255 = arith.addf %253, %254 : vector<16x32xf32>
    %cst_39 = arith.constant dense<0.000000e+00> : vector<16x128xf32>
    %256 = tpu.matmul %255, %7, %cst_39 {dimension_numbers = #tpu.dot_dimension_numbers<[1], [0], [0], [1], [0, 0, 1, 1], [], []>} : vector<16x32xf32>, vector<32x128xf32>, vector<16x128xf32> -> vector<16x128xf32>
    %257 = vector.broadcast %20 : vector<1x128xf32> to vector<16x128xf32>
    %258 = arith.addf %256, %257 : vector<16x128xf32>
    %cst_40 = arith.constant 5.000000e-01 : f32
    %259 = vector.broadcast %cst_40 : f32 to vector<16x128xf32>
    %260 = arith.mulf %259, %258 : vector<16x128xf32>
    %cst_41 = arith.constant 4.471500e-02 : f32
    %261 = vector.broadcast %cst_41 : f32 to vector<16x128xf32>
    %262 = arith.mulf %261, %258 : vector<16x128xf32>
    %263 = arith.mulf %262, %258 : vector<16x128xf32>
    %264 = arith.mulf %263, %258 : vector<16x128xf32>
    %265 = arith.addf %258, %264 : vector<16x128xf32>
    %cst_42 = arith.constant 0.797884583 : f32
    %266 = vector.broadcast %cst_42 : f32 to vector<16x128xf32>
    %267 = arith.mulf %266, %265 : vector<16x128xf32>
    %268 = math.tanh %267 : vector<16x128xf32>
    %cst_43 = arith.constant 1.000000e+00 : f32
    %269 = vector.broadcast %cst_43 : f32 to vector<16x128xf32>
    %270 = arith.addf %269, %268 : vector<16x128xf32>
    %271 = arith.mulf %260, %270 : vector<16x128xf32>
    %cst_44 = arith.constant dense<0.000000e+00> : vector<16x32xf32>
    %272 = tpu.matmul %271, %8, %cst_44 {dimension_numbers = #tpu.dot_dimension_numbers<[1], [0], [0], [1], [0, 0, 1, 1], [], []>} : vector<16x128xf32>, vector<128x32xf32>, vector<16x32xf32> -> vector<16x32xf32>
    %273 = vector.broadcast %21 : vector<1x32xf32> to vector<16x32xf32>
    %274 = arith.addf %272, %273 : vector<16x32xf32>
    %275 = arith.addf %274, %235 : vector<16x32xf32>
    %cst_45 = arith.constant 0.000000e+00 : f32
    %276 = vector.broadcast %cst_45 : f32 to vector<16x96xf32>
    %277 = tpu.concatenate %275, %276 in 1 : vector<16x32xf32>, vector<16x96xf32> -> vector<16x128xf32>
    %c0_46 = arith.constant 0 : index
    %c0_47 = arith.constant 0 : index
    %278 = vector.load %arg5[%c0_46, %c0_47] : memref<16x128xf32, #tpu.memory_space<vmem>>, vector<16x128xf32>
    tpu.vector_store %arg5[%c0_46, %c0_47], %277 {strides = array<i32>} : memref<16x128xf32, #tpu.memory_space<vmem>>, vector<16x128xf32>,
    return
  }
}

</mosaic_0001>

<llo_original>
// kernel: tpu_custom_call.1
$region0: #{tpu_custom_call.1}
  #allocation0 [shape = 'u32[]', space=smem, size = 0x4, offset = 0x4, fixed_abs, tag = 'smem constant byte address 0x4 - core index']
  #allocation1 [shape = 'u32[144,128]{1,0:T(1,128)}', space=vmem, size = 0x12000, scoped, tag = 'internal scratch']
  %s0 = inlined_call_operand.vmem [shape: f32[16,32], index: 0, kind: input, shape index: {}]
  %s1 = inlined_call_operand.vmem [shape: f32[24,32], index: 1, kind: input, shape index: {}]
  %s2 = inlined_call_operand.vmem [shape: f32[32,384], index: 2, kind: input, shape index: {}]
  %s3 = inlined_call_operand.vmem [shape: f32[128,32], index: 3, kind: input, shape index: {}]
  %s4 = inlined_call_operand.vmem [shape: f32[16,128], index: 4, kind: input, shape index: {}]
  %s5 = inlined_call_operand.hbm [shape: f32[16,128], index: 5, kind: output, shape index: {}]
  %s6 = sld [smem:[#allocation0]]
  $region30: #{tpu_custom_call.1} parent=0
    _
  %s8 = ssub.s32 1, %s6
  %s9 = scalar_select 0, %s8, %s6
  $region1: #{tpu_custom_call.1} parent=0
    #allocation2 [shape = 'u8[8192]{0}', space=vmem, size = 0x2000, scoped, tag = 'output window, operand 0, single buffered']
    #allocation3 [shape = 's32[1]{0}', space=sflag, size = 0x4, scoped, tag = 'scoped memory for tpu_custom_call.1']
    %10 = vsyncpa [#allocation3], 0
    // Predicated region
    $region2: #{tpu_custom_call.1} parent=1 // pred_check
      _
    $region3: #{tpu_custom_call.1} parent=1 // pred_check_branch
      %12 = sbr.rel (0) target = $region5
    $region4: #{tpu_custom_call.1} parent=1 // pred_region
      _
    $region5: #{tpu_custom_call.1} parent=1 // pred_fallthru
      _
    // Predicated region
    $region6: #{tpu_custom_call.1} parent=1 // pred_check
      _
    $region7: #{tpu_custom_call.1} parent=1 // pred_check_branch
      %14 = sbr.rel (0) target = $region9
    $region8: #{tpu_custom_call.1} parent=1 // pred_region
      _
    $region9: #{tpu_custom_call.1} parent=1 // pred_fallthru
      _
    // Predicated region
    $region10: #{tpu_custom_call.1} parent=1 // pred_check
      _
    $region11: #{tpu_custom_call.1} parent=1 // pred_check_branch
      %16 = sbr.rel (0) target = $region13
    $region12: #{tpu_custom_call.1} parent=1 // pred_region
      _
    $region13: #{tpu_custom_call.1} parent=1 // pred_fallthru
      _
    // Predicated region
    $region14: #{tpu_custom_call.1} parent=1 // pred_check
      _
    $region15: #{tpu_custom_call.1} parent=1 // pred_check_branch
      %18 = sbr.rel (0) target = $region17
    $region16: #{tpu_custom_call.1} parent=1 // pred_region
      _
    $region17: #{tpu_custom_call.1} parent=1 // pred_fallthru
      _
    // Predicated region
    $region18: #{tpu_custom_call.1} parent=1 // pred_check
      _
    $region19: #{tpu_custom_call.1} parent=1 // pred_check_branch
      %20 = sbr.rel (0) target = $region21
    $region20: #{tpu_custom_call.1} parent=1 // pred_region
      _
    $region21: #{tpu_custom_call.1} parent=1 // pred_fallthru
      _
    %v21 = vld [vmem:[%s2] sm:$0xff]
    %v22 = vld [vmem:[%s2 + $0x8] sm:$0xff]
    %v23 = vld [vmem:[%s2 + $0x10] sm:$0xff]
    %v24 = vld [vmem:[%s2 + $0x18] sm:$0xff]
    %v25 = vld [vmem:[%s2 + $0x20] sm:$0xff]
    %v26 = vld [vmem:[%s2 + $0x28] sm:$0xff]
    %v27 = vld [vmem:[%s2 + $0x30] sm:$0xff]
    %v28 = vld [vmem:[%s2 + $0x38] sm:$0xff]
    %v29 = vld [vmem:[%s2 + $0x40] sm:$0xff]
    %v30 = vld [vmem:[%s2 + $0x48] sm:$0xff]
    %v31 = vld [vmem:[%s2 + $0x50] sm:$0xff]
    %v32 = vld [vmem:[%s2 + $0x58] sm:$0xff]
    %v33 = vld [vmem:[%s4] sm:$0xff]
    %v34 = vld [vmem:[%s4 + $0x8] sm:$0xff]
    %v35 = vld [vmem:[%s3] sm:$0xff]
    %v36 = vld [vmem:[%s3 + $0x8] sm:$0xff]
    %v37 = vld [vmem:[%s3 + $0x10] sm:$0xff]
    %v38 = vld [vmem:[%s3 + $0x18] sm:$0xff]
    %v39 = vld [vmem:[%s3 + $0x20] sm:$0xff]
    %v40 = vld [vmem:[%s3 + $0x28] sm:$0xff]
    %v41 = vld [vmem:[%s3 + $0x30] sm:$0xff]
    %v42 = vld [vmem:[%s3 + $0x38] sm:$0xff]
    %v43 = vld [vmem:[%s3 + $0x40] sm:$0xff]
    %v44 = vld [vmem:[%s3 + $0x48] sm:$0xff]
    %v45 = vld [vmem:[%s3 + $0x50] sm:$0xff]
    %v46 = vld [vmem:[%s3 + $0x58] sm:$0xff]
    %v47 = vld [vmem:[%s3 + $0x60] sm:$0xff]
    %v48 = vld [vmem:[%s3 + $0x68] sm:$0xff]
    %v49 = vld [vmem:[%s3 + $0x70] sm:$0xff]
    %v50 = vld [vmem:[%s3 + $0x78] sm:$0xff]
    %v51 = vld [vmem:[%s0] sm:$0xff]
    %v52 = vld [vmem:[%s0 + $0x8] sm:$0xff]
    %v53 = vld [vmem:[%s1] sm:$0xff]
    %v54 = vld [vmem:[%s1 + $0x8] sm:$0xff]
    %v55 = vld [vmem:[%s1 + $0x10] sm:$0xff]
    %vm56 = vcmask 261120
    %v57 = vsel %vm56, %v51, 0.0
    %58 = vadd.xlane.f32.xlu0 %v57
    %v59 = vpop.xlane.xlu0 %58
    %v60 = vrcp.pop 32.0
    %v61 = vmul.f32 %v59, %v60
    %v62 = vsub.f32 %v51, %v61
    %v63 = vmul.f32 %v62, %v62
    %v64 = vsel %vm56, %v63, 0.0
    %65 = vadd.xlane.f32.xlu0 %v64
    %v66 = vpop.xlane.xlu0 %65
    %v67 = vmul.f32 %v66, %v60
    %v68 = vadd.f32 %v67, 1e-05
    %v69 = vrsqrt.pop %v68
    %v70 = vmul.f32 %v62, %v69
    %v71 = vlaneseq
    %v72 = vshrl.u32 %v71, 7
    %v73 = vsub.s32 0, %v72
    %v74 = vrot.slane %v33, %v73
    %v75 = vmul.f32 %v70, %v74
    %v76 = vlaneseq
    %v77 = vshrl.u32 %v76, 7
    %v78 = vsub.s32 1, %v77
    %v79 = vrot.slane %v33, %v78
    %v80 = vadd.f32 %v75, %v79
    %v81 = vlaneseq
    %v82 = vshrl.u32 %v81, 7
    %v83 = vsub.s32 6, %v82
    %v84 = vrot.slane %v33, %v83
    %v86 = vsel %vm56, %v80, 0
    %88 = vmatprep.subr.mxu0 0.0
    %89 = vmatpush1.msra.mxu0 %v21
    %90 = vmatprep.subr.mxu0 0.0
    %91 = vmatpush1.msra.mxu0 %v24
    %92 = vmatprep.subr.mxu0 0.0
    %93 = vmatpush1.msra.mxu0 %v27
    %94 = vmatprep.subr.mxu0 0.0
    %95 = vmatpush1.msra.mxu0 %v30
    %96 = vmatprep.subr.mxu0 0.0
    %97 = vmatpush1.msra.mxu0 0.0
    %98 = vmatprep.subr.mxu0 0.0
    %99 = vmatpush1.msra.mxu0 0.0
    %100 = vmatprep.subr.mxu0 0.0
    %101 = vmatpush1.msra.mxu0 0.0
    %102 = vmatprep.subr.mxu0 0.0
    %103 = vmatpush1.msra.mxu0 0.0
    %104 = vmatprep.subr.mxu0 0.0
    %105 = vmatpush1.msra.mxu0 0.0
    %106 = vmatprep.subr.mxu0 0.0
    %107 = vmatpush1.msra.mxu0 0.0
    %108 = vmatprep.subr.mxu0 0.0
    %109 = vmatpush1.msra.mxu0 0.0
    %110 = vmatprep.subr.mxu0 0.0
    %111 = vmatpush1.msra.mxu0 0.0
    %112 = vmatprep.subr.mxu0 0.0
    %113 = vmatpush1.msra.mxu0 0.0
    %114 = vmatprep.subr.mxu0 0.0
    %115 = vmatpush1.msra.mxu0 0.0
    %116 = vmatprep.subr.mxu0 0.0
    %117 = vmatpush1.msra.mxu0 0.0
    %118 = vmatprep.subr.mxu0 0.0
    %119 = vmatpush1.msra.mxu0 0.0
    %120 = vmatprep.subr.mxu0 0.0
    %121 = vmatpush1.msra.mxu0 0.0
    %122 = vmatprep.subr.mxu0 0.0
    %123 = vmatpush1.msra.mxu0 0.0
    %124 = vmatprep.subr.mxu0 0.0
    %125 = vmatpush1.msra.mxu0 0.0
    %126 = vmatprep.subr.mxu0 0.0
    %127 = vmatpush1.msra.mxu0 0.0
    %128 = vmatprep.subr.mxu0 0.0
    %129 = vmatpush1.msra.mxu0 0.0
    %130 = vmatprep.subr.mxu0 0.0
    %131 = vmatpush1.msra.mxu0 0.0
    %132 = vmatprep.subr.mxu0 0.0
    %133 = vmatpush1.msra.mxu0 0.0
    %134 = vmatprep.subr.mxu0 0.0
    %135 = vmatpush1.msra.mxu0 0.0
    %136 = vmatprep.subr.mxu0 0.0
    %137 = vmatpush1.msra.mxu0 0.0
    %138 = vmatprep.subr.mxu0 0.0
    %139 = vmatpush1.msra.mxu0 0.0
    %140 = vmatprep.subr.mxu0 0.0
    %141 = vmatpush1.msra.mxu0 0.0
    %142 = vmatprep.subr.mxu0 0.0
    %143 = vmatpush1.msra.mxu0 0.0
    %144 = vmatprep.subr.mxu0 0.0
    %145 = vmatpush1.msra.mxu0 0.0
    %146 = vmatprep.subr.mxu0 0.0
    %147 = vmatpush1.msra.mxu0 0.0
    %148 = vmatprep.subr.mxu0 0.0
    %149 = vmatpush1.msra.mxu0 0.0
    %150 = vmatprep.subr.mxu0 0.0
    %151 = vmatpush1.msra.mxu0 0.0
    %152 = vmatprep.mubr.f32.mxu0 0.0
    %153 = vmatmul.mubr.f32.gmra.mrb[0].mxu0 %v86
    %v154 = vpop.f32.mrb[0].mxu0
    %v155 = vadd.f32 %v84, %v154
    %v156 = vpop.f32.mrb[0].mxu0
    %157 = vdwg.mxu0
    %159 = vrot.lane.b32.xlu0 %v155, 120
    %v160 = vpop.permute.xlu0 %159
    %161 = vrot.lane.b32.xlu0 %v155, 112
    %v162 = vpop.permute.xlu0 %161
    %163 = vrot.lane.b32.xlu0 %v155, 104
    %v164 = vpop.permute.xlu0 %163
    %165 = vrot.lane.b32.xlu0 %v155, 96
    %v166 = vpop.permute.xlu0 %165
    %vm167 = vcmask 64512
    %v168 = vsel %vm167, %v155, 0
    %v170 = vsel %vm167, %v166, 0
    %172 = vmatprep.subr.mxu0 0.0
    %173 = vmatpush1.xpose.msra.mxu0 %v170
    %174 = vmatprep.subr.mxu0 0.0
    %175 = vmatpush1.xpose.msra.mxu0 0.0
    %176 = vmatprep.subr.mxu0 0.0
    %177 = vmatpush1.xpose.msra.mxu0 0.0
    %178 = vmatprep.subr.mxu0 0.0
    %179 = vmatpush1.xpose.msra.mxu0 0.0
    %180 = vmatprep.subr.mxu0 0.0
    %181 = vmatpush1.xpose.msra.mxu0 0.0
    %182 = vmatprep.subr.mxu0 0.0
    %183 = vmatpush1.xpose.msra.mxu0 0.0
    %184 = vmatprep.subr.mxu0 0.0
    %185 = vmatpush1.xpose.msra.mxu0 0.0
    %186 = vmatprep.subr.mxu0 0.0
    %187 = vmatpush1.xpose.msra.mxu0 0.0
    %188 = vmatprep.subr.mxu0 0.0
    %189 = vmatpush1.xpose.msra.mxu0 0.0
    %190 = vmatprep.subr.mxu0 0.0
    %191 = vmatpush1.xpose.msra.mxu0 0.0
    %192 = vmatprep.subr.mxu0 0.0
    %193 = vmatpush1.xpose.msra.mxu0 0.0
    %194 = vmatprep.subr.mxu0 0.0
    %195 = vmatpush1.xpose.msra.mxu0 0.0
    %196 = vmatprep.subr.mxu0 0.0
    %197 = vmatpush1.xpose.msra.mxu0 0.0
    %198 = vmatprep.subr.mxu0 0.0
    %199 = vmatpush1.xpose.msra.mxu0 0.0
    %200 = vmatprep.subr.mxu0 0.0
    %201 = vmatpush1.xpose.msra.mxu0 0.0
    %202 = vmatprep.subr.mxu0 0.0
    %203 = vmatpush1.xpose.msra.mxu0 0.0
    %204 = vmatprep.subr.mxu0 0.0
    %205 = vmatpush1.xpose.msra.mxu0 0.0
    %206 = vmatprep.subr.mxu0 0.0
    %207 = vmatpush1.xpose.msra.mxu0 0.0
    %208 = vmatprep.subr.mxu0 0.0
    %209 = vmatpush1.xpose.msra.mxu0 0.0
    %210 = vmatprep.subr.mxu0 0.0
    %211 = vmatpush1.xpose.msra.mxu0 0.0
    %212 = vmatprep.subr.mxu0 0.0
    %213 = vmatpush1.xpose.msra.mxu0 0.0
    %214 = vmatprep.subr.mxu0 0.0
    %215 = vmatpush1.xpose.msra.mxu0 0.0
    %216 = vmatprep.subr.mxu0 0.0
    %217 = vmatpush1.xpose.msra.mxu0 0.0
    %218 = vmatprep.subr.mxu0 0.0
    %219 = vmatpush1.xpose.msra.mxu0 0.0
    %220 = vmatprep.subr.mxu0 0.0
    %221 = vmatpush1.xpose.msra.mxu0 0.0
    %222 = vmatprep.subr.mxu0 0.0
    %223 = vmatpush1.xpose.msra.mxu0 0.0
    %224 = vmatprep.subr.mxu0 0.0
    %225 = vmatpush1.xpose.msra.mxu0 0.0
    %226 = vmatprep.subr.mxu0 0.0
    %227 = vmatpush1.xpose.msra.mxu0 0.0
    %228 = vmatprep.subr.mxu0 0.0
    %229 = vmatpush1.xpose.msra.mxu0 0.0
    %230 = vmatprep.subr.mxu0 0.0
    %231 = vmatpush1.xpose.msra.mxu0 0.0
    %232 = vmatprep.subr.mxu0 0.0
    %233 = vmatpush1.xpose.msra.mxu0 0.0
    %234 = vmatprep.subr.mxu0 0.0
    %235 = vmatpush1.xpose.msra.mxu0 0.0
    %236 = vmatprep.mubr.f32.mxu0 0.0
    %237 = vmatmul.mubr.f32.gmra.mrb[0].mxu0 %v168
    %v238 = vpop.f32.mrb[0].mxu0
    %v239 = vadd.f32 0.0, %v238
    %v240 = vpop.f32.mrb[0].mxu0
    %241 = vdwg.mxu0
    %242 = vrot.lane.b32.xlu0 %v160, 96
    %v243 = vpop.permute.xlu0 %242
    %v244 = vsel %vm167, %v160, 0
    %v246 = vsel %vm167, %v243, 0
    %248 = vmatprep.subr.mxu0 0.0
    %249 = vmatpush1.xpose.msra.mxu0 %v246
    %250 = vmatprep.subr.mxu0 0.0
    %251 = vmatpush1.xpose.msra.mxu0 0.0
    %252 = vmatprep.subr.mxu0 0.0
    %253 = vmatpush1.xpose.msra.mxu0 0.0
    %254 = vmatprep.subr.mxu0 0.0
    %255 = vmatpush1.xpose.msra.mxu0 0.0
    %256 = vmatprep.subr.mxu0 0.0
    %257 = vmatpush1.xpose.msra.mxu0 0.0
    %258 = vmatprep.subr.mxu0 0.0
    %259 = vmatpush1.xpose.msra.mxu0 0.0
    %260 = vmatprep.subr.mxu0 0.0
    %261 = vmatpush1.xpose.msra.mxu0 0.0
    %262 = vmatprep.subr.mxu0 0.0
    %263 = vmatpush1.xpose.msra.mxu0 0.0
    %264 = vmatprep.subr.mxu0 0.0
    %265 = vmatpush1.xpose.msra.mxu0 0.0
    %266 = vmatprep.subr.mxu0 0.0
    %267 = vmatpush1.xpose.msra.mxu0 0.0
    %268 = vmatprep.subr.mxu0 0.0
    %269 = vmatpush1.xpose.msra.mxu0 0.0
    %270 = vmatprep.subr.mxu0 0.0
    %271 = vmatpush1.xpose.msra.mxu0 0.0
    %272 = vmatprep.subr.mxu0 0.0
    %273 = vmatpush1.xpose.msra.mxu0 0.0
    %274 = vmatprep.subr.mxu0 0.0
    %275 = vmatpush1.xpose.msra.mxu0 0.0
    %276 = vmatprep.subr.mxu0 0.0
    %277 = vmatpush1.xpose.msra.mxu0 0.0
    %278 = vmatprep.subr.mxu0 0.0
    %279 = vmatpush1.xpose.msra.mxu0 0.0
    %280 = vmatprep.subr.mxu0 0.0
    %281 = vmatpush1.xpose.msra.mxu0 0.0
    %282 = vmatprep.subr.mxu0 0.0
    %283 = vmatpush1.xpose.msra.mxu0 0.0
    %284 = vmatprep.subr.mxu0 0.0
    %285 = vmatpush1.xpose.msra.mxu0 0.0
    %286 = vmatprep.subr.mxu0 0.0
    %287 = vmatpush1.xpose.msra.mxu0 0.0
    %288 = vmatprep.subr.mxu0 0.0
    %289 = vmatpush1.xpose.msra.mxu0 0.0
    %290 = vmatprep.subr.mxu0 0.0
    %291 = vmatpush1.xpose.msra.mxu0 0.0
    %292 = vmatprep.subr.mxu0 0.0
    %293 = vmatpush1.xpose.msra.mxu0 0.0
    %294 = vmatprep.subr.mxu0 0.0
    %295 = vmatpush1.xpose.msra.mxu0 0.0
    %296 = vmatprep.subr.mxu0 0.0
    %297 = vmatpush1.xpose.msra.mxu0 0.0
    %298 = vmatprep.subr.mxu0 0.0
    %299 = vmatpush1.xpose.msra.mxu0 0.0
    %300 = vmatprep.subr.mxu0 0.0
    %301 = vmatpush1.xpose.msra.mxu0 0.0
    %302 = vmatprep.subr.mxu0 0.0
    %303 = vmatpush1.xpose.msra.mxu0 0.0
    %304 = vmatprep.subr.mxu0 0.0
    %305 = vmatpush1.xpose.msra.mxu0 0.0
    %306 = vmatprep.subr.mxu0 0.0
    %307 = vmatpush1.xpose.msra.mxu0 0.0
    %308 = vmatprep.subr.mxu0 0.0
    %309 = vmatpush1.xpose.msra.mxu0 0.0
    %310 = vmatprep.subr.mxu0 0.0
    %311 = vmatpush1.xpose.msra.mxu0 0.0
    %312 = vmatprep.mubr.f32.mxu0 0.0
    %313 = vmatmul.mubr.f32.gmra.mrb[0].mxu0 %v244
    %v314 = vpop.f32.mrb[0].mxu0
    %v315 = vadd.f32 0.0, %v314
    %v316 = vpop.f32.mrb[0].mxu0
    %317 = vdwg.mxu0
    %318 = vrot.lane.b32.xlu0 %v162, 96
    %v319 = vpop.permute.xlu0 %318
    %v320 = vsel %vm167, %v162, 0
    %v322 = vsel %vm167, %v319, 0
    %324 = vmatprep.subr.mxu0 0.0
    %325 = vmatpush1.xpose.msra.mxu0 %v322
    %326 = vmatprep.subr.mxu0 0.0
    %327 = vmatpush1.xpose.msra.mxu0 0.0
    %328 = vmatprep.subr.mxu0 0.0
    %329 = vmatpush1.xpose.msra.mxu0 0.0
    %330 = vmatprep.subr.mxu0 0.0
    %331 = vmatpush1.xpose.msra.mxu0 0.0
    %332 = vmatprep.subr.mxu0 0.0
    %333 = vmatpush1.xpose.msra.mxu0 0.0
    %334 = vmatprep.subr.mxu0 0.0
    %335 = vmatpush1.xpose.msra.mxu0 0.0
    %336 = vmatprep.subr.mxu0 0.0
    %337 = vmatpush1.xpose.msra.mxu0 0.0
    %338 = vmatprep.subr.mxu0 0.0
    %339 = vmatpush1.xpose.msra.mxu0 0.0
    %340 = vmatprep.subr.mxu0 0.0
    %341 = vmatpush1.xpose.msra.mxu0 0.0
    %342 = vmatprep.subr.mxu0 0.0
    %343 = vmatpush1.xpose.msra.mxu0 0.0
    %344 = vmatprep.subr.mxu0 0.0
    %345 = vmatpush1.xpose.msra.mxu0 0.0
    %346 = vmatprep.subr.mxu0 0.0
    %347 = vmatpush1.xpose.msra.mxu0 0.0
    %348 = vmatprep.subr.mxu0 0.0
    %349 = vmatpush1.xpose.msra.mxu0 0.0
    %350 = vmatprep.subr.mxu0 0.0
    %351 = vmatpush1.xpose.msra.mxu0 0.0
    %352 = vmatprep.subr.mxu0 0.0
    %353 = vmatpush1.xpose.msra.mxu0 0.0
    %354 = vmatprep.subr.mxu0 0.0
    %355 = vmatpush1.xpose.msra.mxu0 0.0
    %356 = vmatprep.subr.mxu0 0.0
    %357 = vmatpush1.xpose.msra.mxu0 0.0
    %358 = vmatprep.subr.mxu0 0.0
    %359 = vmatpush1.xpose.msra.mxu0 0.0
    %360 = vmatprep.subr.mxu0 0.0
    %361 = vmatpush1.xpose.msra.mxu0 0.0
    %362 = vmatprep.subr.mxu0 0.0
    %363 = vmatpush1.xpose.msra.mxu0 0.0
    %364 = vmatprep.subr.mxu0 0.0
    %365 = vmatpush1.xpose.msra.mxu0 0.0
    %366 = vmatprep.subr.mxu0 0.0
    %367 = vmatpush1.xpose.msra.mxu0 0.0
    %368 = vmatprep.subr.mxu0 0.0
    %369 = vmatpush1.xpose.msra.mxu0 0.0
    %370 = vmatprep.subr.mxu0 0.0
    %371 = vmatpush1.xpose.msra.mxu0 0.0
    %372 = vmatprep.subr.mxu0 0.0
    %373 = vmatpush1.xpose.msra.mxu0 0.0
    %374 = vmatprep.subr.mxu0 0.0
    %375 = vmatpush1.xpose.msra.mxu0 0.0
    %376 = vmatprep.subr.mxu0 0.0
    %377 = vmatpush1.xpose.msra.mxu0 0.0
    %378 = vmatprep.subr.mxu0 0.0
    %379 = vmatpush1.xpose.msra.mxu0 0.0
    %380 = vmatprep.subr.mxu0 0.0
    %381 = vmatpush1.xpose.msra.mxu0 0.0
    %382 = vmatprep.subr.mxu0 0.0
    %383 = vmatpush1.xpose.msra.mxu0 0.0
    %384 = vmatprep.subr.mxu0 0.0
    %385 = vmatpush1.xpose.msra.mxu0 0.0
    %386 = vmatprep.subr.mxu0 0.0
    %387 = vmatpush1.xpose.msra.mxu0 0.0
    %388 = vmatprep.mubr.f32.mxu0 0.0
    %389 = vmatmul.mubr.f32.gmra.mrb[0].mxu0 %v320
    %v390 = vpop.f32.mrb[0].mxu0
    %v391 = vadd.f32 0.0, %v390
    %v392 = vpop.f32.mrb[0].mxu0
    %393 = vdwg.mxu0
    %394 = vrot.lane.b32.xlu0 %v164, 96
    %v395 = vpop.permute.xlu0 %394
    %v396 = vsel %vm167, %v164, 0
    %v398 = vsel %vm167, %v395, 0
    %400 = vmatprep.subr.mxu0 0.0
    %401 = vmatpush1.xpose.msra.mxu0 %v398
    %402 = vmatprep.subr.mxu0 0.0
    %403 = vmatpush1.xpose.msra.mxu0 0.0
    %404 = vmatprep.subr.mxu0 0.0
    %405 = vmatpush1.xpose.msra.mxu0 0.0
    %406 = vmatprep.subr.mxu0 0.0
    %407 = vmatpush1.xpose.msra.mxu0 0.0
    %408 = vmatprep.subr.mxu0 0.0
    %409 = vmatpush1.xpose.msra.mxu0 0.0
    %410 = vmatprep.subr.mxu0 0.0
    %411 = vmatpush1.xpose.msra.mxu0 0.0
    %412 = vmatprep.subr.mxu0 0.0
    %413 = vmatpush1.xpose.msra.mxu0 0.0
    %414 = vmatprep.subr.mxu0 0.0
    %415 = vmatpush1.xpose.msra.mxu0 0.0
    %416 = vmatprep.subr.mxu0 0.0
    %417 = vmatpush1.xpose.msra.mxu0 0.0
    %418 = vmatprep.subr.mxu0 0.0
    %419 = vmatpush1.xpose.msra.mxu0 0.0
    %420 = vmatprep.subr.mxu0 0.0
    %421 = vmatpush1.xpose.msra.mxu0 0.0
    %422 = vmatprep.subr.mxu0 0.0
    %423 = vmatpush1.xpose.msra.mxu0 0.0
    %424 = vmatprep.subr.mxu0 0.0
    %425 = vmatpush1.xpose.msra.mxu0 0.0
    %426 = vmatprep.subr.mxu0 0.0
    %427 = vmatpush1.xpose.msra.mxu0 0.0
    %428 = vmatprep.subr.mxu0 0.0
    %429 = vmatpush1.xpose.msra.mxu0 0.0
    %430 = vmatprep.subr.mxu0 0.0
    %431 = vmatpush1.xpose.msra.mxu0 0.0
    %432 = vmatprep.subr.mxu0 0.0
    %433 = vmatpush1.xpose.msra.mxu0 0.0
    %434 = vmatprep.subr.mxu0 0.0
    %435 = vmatpush1.xpose.msra.mxu0 0.0
    %436 = vmatprep.subr.mxu0 0.0
    %437 = vmatpush1.xpose.msra.mxu0 0.0
    %438 = vmatprep.subr.mxu0 0.0
    %439 = vmatpush1.xpose.msra.mxu0 0.0
    %440 = vmatprep.subr.mxu0 0.0
    %441 = vmatpush1.xpose.msra.mxu0 0.0
    %442 = vmatprep.subr.mxu0 0.0
    %443 = vmatpush1.xpose.msra.mxu0 0.0
    %444 = vmatprep.subr.mxu0 0.0
    %445 = vmatpush1.xpose.msra.mxu0 0.0
    %446 = vmatprep.subr.mxu0 0.0
    %447 = vmatpush1.xpose.msra.mxu0 0.0
    %448 = vmatprep.subr.mxu0 0.0
    %449 = vmatpush1.xpose.msra.mxu0 0.0
    %450 = vmatprep.subr.mxu0 0.0
    %451 = vmatpush1.xpose.msra.mxu0 0.0
    %452 = vmatprep.subr.mxu0 0.0
    %453 = vmatpush1.xpose.msra.mxu0 0.0
    %454 = vmatprep.subr.mxu0 0.0
    %455 = vmatpush1.xpose.msra.mxu0 0.0
    %456 = vmatprep.subr.mxu0 0.0
    %457 = vmatpush1.xpose.msra.mxu0 0.0
    %458 = vmatprep.subr.mxu0 0.0
    %459 = vmatpush1.xpose.msra.mxu0 0.0
    %460 = vmatprep.subr.mxu0 0.0
    %461 = vmatpush1.xpose.msra.mxu0 0.0
    %462 = vmatprep.subr.mxu0 0.0
    %463 = vmatpush1.xpose.msra.mxu0 0.0
    %464 = vmatprep.mubr.f32.mxu0 0.0
    %465 = vmatmul.mubr.f32.gmra.mrb[0].mxu0 %v396
    %v466 = vpop.f32.mrb[0].mxu0
    %v467 = vadd.f32 0.0, %v466
    %v468 = vpop.f32.mrb[0].mxu0
    %469 = vdwg.mxu0
    %v470 = vmul.f32 %v239, 0.35355338
    %v471 = vmul.f32 %v315, 0.35355338
    %v472 = vmul.f32 %v391, 0.35355338
    %v473 = vmul.f32 %v467, 0.35355338
    %v474 = vlaneseq
    %v475 = vshrl.u32 %v474, 7
    %v476 = vlaneseq
    %v477 = vand.u32 %v476, 127
    %vm478 = vcmp.le.s32.totalorder %v477, %v475
    %v479 = vsel %vm478, 1, 0
    %vm480 = vcmp.eq.s32.totalorder %v479, 1
    %v481 = vsel %vm480, %v470, -3.4028235e+38
    %v482 = vsel %vm480, %v471, -3.4028235e+38
    %v483 = vsel %vm480, %v472, -3.4028235e+38
    %v484 = vsel %vm480, %v473, -3.4028235e+38
    %v485 = vsel %vm167, %v481, -inf
    %486 = vmax.xlane.f32.xlu0 %v485
    %v487 = vpop.xlane.xlu0 %486
    %v488 = vsel %vm167, %v482, -inf
    %489 = vmax.xlane.f32.xlu0 %v488
    %v490 = vpop.xlane.xlu0 %489
    %v491 = vsel %vm167, %v483, -inf
    %492 = vmax.xlane.f32.xlu0 %v491
    %v493 = vpop.xlane.xlu0 %492
    %v494 = vsel %vm167, %v484, -inf
    %495 = vmax.xlane.f32.xlu0 %v494
    %v496 = vpop.xlane.xlu0 %495
    %v497 = vsub.f32 %v481, %v487
    %v498 = vsub.f32 %v482, %v490
    %v499 = vsub.f32 %v483, %v493
    %v500 = vsub.f32 %v484, %v496
    %v501 = vmul.f32 %v497, 1.442695
    %v502 = vpow.pop %v501
    %v503 = vmul.f32 %v498, 1.442695
    %v504 = vpow.pop %v503
    %v505 = vmul.f32 %v499, 1.442695
    %v506 = vpow.pop %v505
    %v507 = vmul.f32 %v500, 1.442695
    %v508 = vpow.pop %v507
    %v509 = vsel %vm167, %v502, 0.0
    %510 = vadd.xlane.f32.xlu0 %v509
    %v511 = vpop.xlane.xlu0 %510
    %v512 = vsel %vm167, %v504, 0.0
    %513 = vadd.xlane.f32.xlu0 %v512
    %v514 = vpop.xlane.xlu0 %513
    %v515 = vsel %vm167, %v506, 0.0
    %516 = vadd.xlane.f32.xlu0 %v515
    %v517 = vpop.xlane.xlu0 %516
    %v518 = vsel %vm167, %v508, 0.0
    %519 = vadd.xlane.f32.xlu0 %v518
    %v520 = vpop.xlane.xlu0 %519
    %v521 = vrcp.pop %v511
    %v522 = vrcp.pop %v514
    %v523 = vrcp.pop %v517
    %v524 = vrcp.pop %v520
    %v525 = vmul.f32 %v502, %v521
    %v526 = vmul.f32 %v504, %v522
    %v527 = vmul.f32 %v506, %v523
    %v528 = vmul.f32 %v508, %v524
    %529 = vrot.lane.b32.xlu0 %v155, 64
    %v530 = vpop.permute.xlu0 %529
    %v533 = vsel %vm167, %v525, 0
    %535 = vmatprep.subr.mxu0 0.0
    %536 = vmatpush1.msra.mxu0 %v530
    %537 = vmatprep.subr.mxu0 0.0
    %538 = vmatpush1.msra.mxu0 0.0
    %539 = vmatprep.subr.mxu0 0.0
    %540 = vmatpush1.msra.mxu0 0.0
    %541 = vmatprep.subr.mxu0 0.0
    %542 = vmatpush1.msra.mxu0 0.0
    %543 = vmatprep.subr.mxu0 0.0
    %544 = vmatpush1.msra.mxu0 0.0
    %545 = vmatprep.subr.mxu0 0.0
    %546 = vmatpush1.msra.mxu0 0.0
    %547 = vmatprep.subr.mxu0 0.0
    %548 = vmatpush1.msra.mxu0 0.0
    %549 = vmatprep.subr.mxu0 0.0
    %550 = vmatpush1.msra.mxu0 0.0
    %551 = vmatprep.subr.mxu0 0.0
    %552 = vmatpush1.msra.mxu0 0.0
    %553 = vmatprep.subr.mxu0 0.0
    %554 = vmatpush1.msra.mxu0 0.0
    %555 = vmatprep.subr.mxu0 0.0
    %556 = vmatpush1.msra.mxu0 0.0
    %557 = vmatprep.subr.mxu0 0.0
    %558 = vmatpush1.msra.mxu0 0.0
    %559 = vmatprep.subr.mxu0 0.0
    %560 = vmatpush1.msra.mxu0 0.0
    %561 = vmatprep.subr.mxu0 0.0
    %562 = vmatpush1.msra.mxu0 0.0
    %563 = vmatprep.subr.mxu0 0.0
    %564 = vmatpush1.msra.mxu0 0.0
    %565 = vmatprep.subr.mxu0 0.0
    %566 = vmatpush1.msra.mxu0 0.0
    %567 = vmatprep.subr.mxu0 0.0
    %568 = vmatpush1.msra.mxu0 0.0
    %569 = vmatprep.subr.mxu0 0.0
    %570 = vmatpush1.msra.mxu0 0.0
    %571 = vmatprep.subr.mxu0 0.0
    %572 = vmatpush1.msra.mxu0 0.0
    %573 = vmatprep.subr.mxu0 0.0
    %574 = vmatpush1.msra.mxu0 0.0
    %575 = vmatprep.subr.mxu0 0.0
    %576 = vmatpush1.msra.mxu0 0.0
    %577 = vmatprep.subr.mxu0 0.0
    %578 = vmatpush1.msra.mxu0 0.0
    %579 = vmatprep.subr.mxu0 0.0
    %580 = vmatpush1.msra.mxu0 0.0
    %581 = vmatprep.subr.mxu0 0.0
    %582 = vmatpush1.msra.mxu0 0.0
    %583 = vmatprep.subr.mxu0 0.0
    %584 = vmatpush1.msra.mxu0 0.0
    %585 = vmatprep.subr.mxu0 0.0
    %586 = vmatpush1.msra.mxu0 0.0
    %587 = vmatprep.subr.mxu0 0.0
    %588 = vmatpush1.msra.mxu0 0.0
    %589 = vmatprep.subr.mxu0 0.0
    %590 = vmatpush1.msra.mxu0 0.0
    %591 = vmatprep.subr.mxu0 0.0
    %592 = vmatpush1.msra.mxu0 0.0
    %593 = vmatprep.subr.mxu0 0.0
    %594 = vmatpush1.msra.mxu0 0.0
    %595 = vmatprep.subr.mxu0 0.0
    %596 = vmatpush1.msra.mxu0 0.0
    %597 = vmatprep.subr.mxu0 0.0
    %598 = vmatpush1.msra.mxu0 0.0
    %599 = vmatprep.mubr.f32.mxu0 0.0
    %600 = vmatmul.mubr.f32.gmra.mrb[0].mxu0 %v533
    %v601 = vpop.f32.mrb[0].mxu0
    %v602 = vadd.f32 0.0, %v601
    %v603 = vpop.f32.mrb[0].mxu0
    %604 = vdwg.mxu0
    %605 = vrot.lane.b32.xlu0 %v160, 64
    %v606 = vpop.permute.xlu0 %605
    %v609 = vsel %vm167, %v526, 0
    %611 = vmatprep.subr.mxu0 0.0
    %612 = vmatpush1.msra.mxu0 %v606
    %613 = vmatprep.subr.mxu0 0.0
    %614 = vmatpush1.msra.mxu0 0.0
    %615 = vmatprep.subr.mxu0 0.0
    %616 = vmatpush1.msra.mxu0 0.0
    %617 = vmatprep.subr.mxu0 0.0
    %618 = vmatpush1.msra.mxu0 0.0
    %619 = vmatprep.subr.mxu0 0.0
    %620 = vmatpush1.msra.mxu0 0.0
    %621 = vmatprep.subr.mxu0 0.0
    %622 = vmatpush1.msra.mxu0 0.0
    %623 = vmatprep.subr.mxu0 0.0
    %624 = vmatpush1.msra.mxu0 0.0
    %625 = vmatprep.subr.mxu0 0.0
    %626 = vmatpush1.msra.mxu0 0.0
    %627 = vmatprep.subr.mxu0 0.0
    %628 = vmatpush1.msra.mxu0 0.0
    %629 = vmatprep.subr.mxu0 0.0
    %630 = vmatpush1.msra.mxu0 0.0
    %631 = vmatprep.subr.mxu0 0.0
    %632 = vmatpush1.msra.mxu0 0.0
    %633 = vmatprep.subr.mxu0 0.0
    %634 = vmatpush1.msra.mxu0 0.0
    %635 = vmatprep.subr.mxu0 0.0
    %636 = vmatpush1.msra.mxu0 0.0
    %637 = vmatprep.subr.mxu0 0.0
    %638 = vmatpush1.msra.mxu0 0.0
    %639 = vmatprep.subr.mxu0 0.0
    %640 = vmatpush1.msra.mxu0 0.0
    %641 = vmatprep.subr.mxu0 0.0
    %642 = vmatpush1.msra.mxu0 0.0
    %643 = vmatprep.subr.mxu0 0.0
    %644 = vmatpush1.msra.mxu0 0.0
    %645 = vmatprep.subr.mxu0 0.0
    %646 = vmatpush1.msra.mxu0 0.0
    %647 = vmatprep.subr.mxu0 0.0
    %648 = vmatpush1.msra.mxu0 0.0
    %649 = vmatprep.subr.mxu0 0.0
    %650 = vmatpush1.msra.mxu0 0.0
    %651 = vmatprep.subr.mxu0 0.0
    %652 = vmatpush1.msra.mxu0 0.0
    %653 = vmatprep.subr.mxu0 0.0
    %654 = vmatpush1.msra.mxu0 0.0
    %655 = vmatprep.subr.mxu0 0.0
    %656 = vmatpush1.msra.mxu0 0.0
    %657 = vmatprep.subr.mxu0 0.0
    %658 = vmatpush1.msra.mxu0 0.0
    %659 = vmatprep.subr.mxu0 0.0
    %660 = vmatpush1.msra.mxu0 0.0
    %661 = vmatprep.subr.mxu0 0.0
    %662 = vmatpush1.msra.mxu0 0.0
    %663 = vmatprep.subr.mxu0 0.0
    %664 = vmatpush1.msra.mxu0 0.0
    %665 = vmatprep.subr.mxu0 0.0
    %666 = vmatpush1.msra.mxu0 0.0
    %667 = vmatprep.subr.mxu0 0.0
    %668 = vmatpush1.msra.mxu0 0.0
    %669 = vmatprep.subr.mxu0 0.0
    %670 = vmatpush1.msra.mxu0 0.0
    %671 = vmatprep.subr.mxu0 0.0
    %672 = vmatpush1.msra.mxu0 0.0
    %673 = vmatprep.subr.mxu0 0.0
    %674 = vmatpush1.msra.mxu0 0.0
    %675 = vmatprep.mubr.f32.mxu0 0.0
    %676 = vmatmul.mubr.f32.gmra.mrb[0].mxu0 %v609
    %v677 = vpop.f32.mrb[0].mxu0
    %v678 = vadd.f32 0.0, %v677
    %v679 = vpop.f32.mrb[0].mxu0
    %680 = vdwg.mxu0
    %681 = vrot.lane.b32.xlu0 %v162, 64
    %v682 = vpop.permute.xlu0 %681
    %v685 = vsel %vm167, %v527, 0
    %687 = vmatprep.subr.mxu0 0.0
    %688 = vmatpush1.msra.mxu0 %v682
    %689 = vmatprep.subr.mxu0 0.0
    %690 = vmatpush1.msra.mxu0 0.0
    %691 = vmatprep.subr.mxu0 0.0
    %692 = vmatpush1.msra.mxu0 0.0
    %693 = vmatprep.subr.mxu0 0.0
    %694 = vmatpush1.msra.mxu0 0.0
    %695 = vmatprep.subr.mxu0 0.0
    %696 = vmatpush1.msra.mxu0 0.0
    %697 = vmatprep.subr.mxu0 0.0
    %698 = vmatpush1.msra.mxu0 0.0
    %699 = vmatprep.subr.mxu0 0.0
    %700 = vmatpush1.msra.mxu0 0.0
    %701 = vmatprep.subr.mxu0 0.0
    %702 = vmatpush1.msra.mxu0 0.0
    %703 = vmatprep.subr.mxu0 0.0
    %704 = vmatpush1.msra.mxu0 0.0
    %705 = vmatprep.subr.mxu0 0.0
    %706 = vmatpush1.msra.mxu0 0.0
    %707 = vmatprep.subr.mxu0 0.0
    %708 = vmatpush1.msra.mxu0 0.0
    %709 = vmatprep.subr.mxu0 0.0
    %710 = vmatpush1.msra.mxu0 0.0
    %711 = vmatprep.subr.mxu0 0.0
    %712 = vmatpush1.msra.mxu0 0.0
    %713 = vmatprep.subr.mxu0 0.0
    %714 = vmatpush1.msra.mxu0 0.0
    %715 = vmatprep.subr.mxu0 0.0
    %716 = vmatpush1.msra.mxu0 0.0
    %717 = vmatprep.subr.mxu0 0.0
    %718 = vmatpush1.msra.mxu0 0.0
    %719 = vmatprep.subr.mxu0 0.0
    %720 = vmatpush1.msra.mxu0 0.0
    %721 = vmatprep.subr.mxu0 0.0
    %722 = vmatpush1.msra.mxu0 0.0
    %723 = vmatprep.subr.mxu0 0.0
    %724 = vmatpush1.msra.mxu0 0.0
    %725 = vmatprep.subr.mxu0 0.0
    %726 = vmatpush1.msra.mxu0 0.0
    %727 = vmatprep.subr.mxu0 0.0
    %728 = vmatpush1.msra.mxu0 0.0
    %729 = vmatprep.subr.mxu0 0.0
    %730 = vmatpush1.msra.mxu0 0.0
    %731 = vmatprep.subr.mxu0 0.0
    %732 = vmatpush1.msra.mxu0 0.0
    %733 = vmatprep.subr.mxu0 0.0
    %734 = vmatpush1.msra.mxu0 0.0
    %735 = vmatprep.subr.mxu0 0.0
    %736 = vmatpush1.msra.mxu0 0.0
    %737 = vmatprep.subr.mxu0 0.0
    %738 = vmatpush1.msra.mxu0 0.0
    %739 = vmatprep.subr.mxu0 0.0
    %740 = vmatpush1.msra.mxu0 0.0
    %741 = vmatprep.subr.mxu0 0.0
    %742 = vmatpush1.msra.mxu0 0.0
    %743 = vmatprep.subr.mxu0 0.0
    %744 = vmatpush1.msra.mxu0 0.0
    %745 = vmatprep.subr.mxu0 0.0
    %746 = vmatpush1.msra.mxu0 0.0
    %747 = vmatprep.subr.mxu0 0.0
    %748 = vmatpush1.msra.mxu0 0.0
    %749 = vmatprep.subr.mxu0 0.0
    %750 = vmatpush1.msra.mxu0 0.0
    %751 = vmatprep.mubr.f32.mxu0 0.0
    %752 = vmatmul.mubr.f32.gmra.mrb[0].mxu0 %v685
    %v753 = vpop.f32.mrb[0].mxu0
    %v754 = vadd.f32 0.0, %v753
    %v755 = vpop.f32.mrb[0].mxu0
    %756 = vdwg.mxu0
    %757 = vrot.lane.b32.xlu0 %v164, 64
    %v758 = vpop.permute.xlu0 %757
    %v761 = vsel %vm167, %v528, 0
    %763 = vmatprep.subr.mxu0 0.0
    %764 = vmatpush1.msra.mxu0 %v758
    %765 = vmatprep.subr.mxu0 0.0
    %766 = vmatpush1.msra.mxu0 0.0
    %767 = vmatprep.subr.mxu0 0.0
    %768 = vmatpush1.msra.mxu0 0.0
    %769 = vmatprep.subr.mxu0 0.0
    %770 = vmatpush1.msra.mxu0 0.0
    %771 = vmatprep.subr.mxu0 0.0
    %772 = vmatpush1.msra.mxu0 0.0
    %773 = vmatprep.subr.mxu0 0.0
    %774 = vmatpush1.msra.mxu0 0.0
    %775 = vmatprep.subr.mxu0 0.0
    %776 = vmatpush1.msra.mxu0 0.0
    %777 = vmatprep.subr.mxu0 0.0
    %778 = vmatpush1.msra.mxu0 0.0
    %779 = vmatprep.subr.mxu0 0.0
    %780 = vmatpush1.msra.mxu0 0.0
    %781 = vmatprep.subr.mxu0 0.0
    %782 = vmatpush1.msra.mxu0 0.0
    %783 = vmatprep.subr.mxu0 0.0
    %784 = vmatpush1.msra.mxu0 0.0
    %785 = vmatprep.subr.mxu0 0.0
    %786 = vmatpush1.msra.mxu0 0.0
    %787 = vmatprep.subr.mxu0 0.0
    %788 = vmatpush1.msra.mxu0 0.0
    %789 = vmatprep.subr.mxu0 0.0
    %790 = vmatpush1.msra.mxu0 0.0
    %791 = vmatprep.subr.mxu0 0.0
    %792 = vmatpush1.msra.mxu0 0.0
    %793 = vmatprep.subr.mxu0 0.0
    %794 = vmatpush1.msra.mxu0 0.0
    %795 = vmatprep.subr.mxu0 0.0
    %796 = vmatpush1.msra.mxu0 0.0
    %797 = vmatprep.subr.mxu0 0.0
    %798 = vmatpush1.msra.mxu0 0.0
    %799 = vmatprep.subr.mxu0 0.0
    %800 = vmatpush1.msra.mxu0 0.0
    %801 = vmatprep.subr.mxu0 0.0
    %802 = vmatpush1.msra.mxu0 0.0
    %803 = vmatprep.subr.mxu0 0.0
    %804 = vmatpush1.msra.mxu0 0.0
    %805 = vmatprep.subr.mxu0 0.0
    %806 = vmatpush1.msra.mxu0 0.0
    %807 = vmatprep.subr.mxu0 0.0
    %808 = vmatpush1.msra.mxu0 0.0
    %809 = vmatprep.subr.mxu0 0.0
    %810 = vmatpush1.msra.mxu0 0.0
    %811 = vmatprep.subr.mxu0 0.0
    %812 = vmatpush1.msra.mxu0 0.0
    %813 = vmatprep.subr.mxu0 0.0
    %814 = vmatpush1.msra.mxu0 0.0
    %815 = vmatprep.subr.mxu0 0.0
    %816 = vmatpush1.msra.mxu0 0.0
    %817 = vmatprep.subr.mxu0 0.0
    %818 = vmatpush1.msra.mxu0 0.0
    %819 = vmatprep.subr.mxu0 0.0
    %820 = vmatpush1.msra.mxu0 0.0
    %821 = vmatprep.subr.mxu0 0.0
    %822 = vmatpush1.msra.mxu0 0.0
    %823 = vmatprep.subr.mxu0 0.0
    %824 = vmatpush1.msra.mxu0 0.0
    %825 = vmatprep.subr.mxu0 0.0
    %826 = vmatpush1.msra.mxu0 0.0
    %827 = vmatprep.mubr.f32.mxu0 0.0
    %828 = vmatmul.mubr.f32.gmra.mrb[0].mxu0 %v761
    %v829 = vpop.f32.mrb[0].mxu0
    %v830 = vadd.f32 0.0, %v829
    %v831 = vpop.f32.mrb[0].mxu0
    %832 = vdwg.mxu0
    %834 = vrot.lane.b32.xlu0 %v678, 8
    %v835 = vpop.permute.xlu0 %834
    %838 = vrot.lane.b32.xlu0 %v754, 16
    %v839 = vpop.permute.xlu0 %838
    %842 = vrot.lane.b32.xlu0 %v830, 24
    %v843 = vpop.permute.xlu0 %842
    %v845 = vsel %vm167, %v602, %v835
    %vm846 = vcmask 130048
    %v847 = vsel %vm846, %v845, %v839
    %vm848 = vcmask 195584
    %v849 = vsel %vm848, %v847, %v843
    %v850 = vlaneseq
    %v851 = vshrl.u32 %v850, 7
    %v852 = vsub.s32 7, %v851
    %v853 = vrot.slane %v33, %v852
    %858 = vrot.lane.b32.xlu0 %v21, 32
    %v859 = vpop.permute.xlu0 %858
    %860 = vrot.lane.b32.xlu0 %v24, 32
    %v861 = vpop.permute.xlu0 %860
    %862 = vrot.lane.b32.xlu0 %v27, 32
    %v863 = vpop.permute.xlu0 %862
    %864 = vrot.lane.b32.xlu0 %v30, 32
    %v865 = vpop.permute.xlu0 %864
    %v871 = vsel %vm56, %v849, 0
    %873 = vmatprep.subr.mxu0 0.0
    %874 = vmatpush1.msra.mxu0 %v859
    %875 = vmatprep.subr.mxu0 0.0
    %876 = vmatpush1.msra.mxu0 %v861
    %877 = vmatprep.subr.mxu0 0.0
    %878 = vmatpush1.msra.mxu0 %v863
    %879 = vmatprep.subr.mxu0 0.0
    %880 = vmatpush1.msra.mxu0 %v865
    %881 = vmatprep.subr.mxu0 0.0
    %882 = vmatpush1.msra.mxu0 0.0
    %883 = vmatprep.subr.mxu0 0.0
    %884 = vmatpush1.msra.mxu0 0.0
    %885 = vmatprep.subr.mxu0 0.0
    %886 = vmatpush1.msra.mxu0 0.0
    %887 = vmatprep.subr.mxu0 0.0
    %888 = vmatpush1.msra.mxu0 0.0
    %889 = vmatprep.subr.mxu0 0.0
    %890 = vmatpush1.msra.mxu0 0.0
    %891 = vmatprep.subr.mxu0 0.0
    %892 = vmatpush1.msra.mxu0 0.0
    %893 = vmatprep.subr.mxu0 0.0
    %894 = vmatpush1.msra.mxu0 0.0
    %895 = vmatprep.subr.mxu0 0.0
    %896 = vmatpush1.msra.mxu0 0.0
    %897 = vmatprep.subr.mxu0 0.0
    %898 = vmatpush1.msra.mxu0 0.0
    %899 = vmatprep.subr.mxu0 0.0
    %900 = vmatpush1.msra.mxu0 0.0
    %901 = vmatprep.subr.mxu0 0.0
    %902 = vmatpush1.msra.mxu0 0.0
    %903 = vmatprep.subr.mxu0 0.0
    %904 = vmatpush1.msra.mxu0 0.0
    %905 = vmatprep.subr.mxu0 0.0
    %906 = vmatpush1.msra.mxu0 0.0
    %907 = vmatprep.subr.mxu0 0.0
    %908 = vmatpush1.msra.mxu0 0.0
    %909 = vmatprep.subr.mxu0 0.0
    %910 = vmatpush1.msra.mxu0 0.0
    %911 = vmatprep.subr.mxu0 0.0
    %912 = vmatpush1.msra.mxu0 0.0
    %913 = vmatprep.subr.mxu0 0.0
    %914 = vmatpush1.msra.mxu0 0.0
    %915 = vmatprep.subr.mxu0 0.0
    %916 = vmatpush1.msra.mxu0 0.0
    %917 = vmatprep.subr.mxu0 0.0
    %918 = vmatpush1.msra.mxu0 0.0
    %919 = vmatprep.subr.mxu0 0.0
    %920 = vmatpush1.msra.mxu0 0.0
    %921 = vmatprep.subr.mxu0 0.0
    %922 = vmatpush1.msra.mxu0 0.0
    %923 = vmatprep.subr.mxu0 0.0
    %924 = vmatpush1.msra.mxu0 0.0
    %925 = vmatprep.subr.mxu0 0.0
    %926 = vmatpush1.msra.mxu0 0.0
    %927 = vmatprep.subr.mxu0 0.0
    %928 = vmatpush1.msra.mxu0 0.0
    %929 = vmatprep.subr.mxu0 0.0
    %930 = vmatpush1.msra.mxu0 0.0
    %931 = vmatprep.subr.mxu0 0.0
    %932 = vmatpush1.msra.mxu0 0.0
    %933 = vmatprep.subr.mxu0 0.0
    %934 = vmatpush1.msra.mxu0 0.0
    %935 = vmatprep.subr.mxu0 0.0
    %936 = vmatpush1.msra.mxu0 0.0
    %937 = vmatprep.mubr.f32.mxu0 0.0
    %938 = vmatmul.mubr.f32.gmra.mrb[0].mxu0 %v871
    %v939 = vpop.f32.mrb[0].mxu0
    %v940 = vadd.f32 %v853, %v939
    %v941 = vpop.f32.mrb[0].mxu0
    %942 = vdwg.mxu0
    %v943 = vadd.f32 %v51, %v940
    %v944 = vadd.f32 %v52, %v940
    %v945 = vsel %vm56, %v943, 0.0
    %946 = vadd.xlane.f32.xlu0 %v945
    %v947 = vpop.xlane.xlu0 %946
    %v948 = vsel %vm56, %v944, 0.0
    %949 = vadd.xlane.f32.xlu0 %v948
    %v950 = vpop.xlane.xlu0 %949
    %v951 = vmul.f32 %v947, %v60
    %v952 = vmul.f32 %v950, %v60
    %v953 = vsub.f32 %v943, %v951
    %v954 = vsub.f32 %v944, %v952
    %v955 = vmul.f32 %v953, %v953
    %v956 = vmul.f32 %v954, %v954
    %v957 = vsel %vm56, %v955, 0.0
    %958 = vadd.xlane.f32.xlu0 %v957
    %v959 = vpop.xlane.xlu0 %958
    %v960 = vsel %vm56, %v956, 0.0
    %961 = vadd.xlane.f32.xlu0 %v960
    %v962 = vpop.xlane.xlu0 %961
    %v963 = vmul.f32 %v959, %v60
    %v964 = vmul.f32 %v962, %v60
    %v965 = vadd.f32 %v963, 1e-05
    %v966 = vadd.f32 %v964, 1e-05
    %v967 = vrsqrt.pop %v965
    %v968 = vrsqrt.pop %v966
    %v969 = vmul.f32 %v953, %v967
    %v970 = vmul.f32 %v954, %v968
    %v971 = vlaneseq
    %v972 = vshrl.u32 %v971, 7
    %v973 = vsub.s32 2, %v972
    %v974 = vrot.slane %v33, %v973
    %v975 = vmul.f32 %v969, %v974
    %v976 = vmul.f32 %v970, %v974
    %v977 = vlaneseq
    %v978 = vshrl.u32 %v977, 7
    %v979 = vsub.s32 3, %v978
    %v980 = vrot.slane %v33, %v979
    %v981 = vadd.f32 %v975, %v980
    %v982 = vadd.f32 %v976, %v980
    %v983 = vlaneseq
    %v984 = vshrl.u32 %v983, 7
    %v985 = vsub.s32 0, %v984
    %v986 = vrot.slane %v34, %v985
    %v988 = vsel %vm56, %v981, 0
    %v991 = vsel %vm56, %v982, 0
    %993 = vmatprep.subr.mxu0 0.0
    %994 = vmatpush1.msra.mxu0 %v22
    %995 = vmatprep.subr.mxu0 0.0
    %996 = vmatpush1.msra.mxu0 %v25
    %997 = vmatprep.subr.mxu0 0.0
    %998 = vmatpush1.msra.mxu0 %v28
    %999 = vmatprep.subr.mxu0 0.0
    %1000 = vmatpush1.msra.mxu0 %v31
    %1001 = vmatprep.subr.mxu0 0.0
    %1002 = vmatpush1.msra.mxu0 0.0
    %1003 = vmatprep.subr.mxu0 0.0
    %1004 = vmatpush1.msra.mxu0 0.0
    %1005 = vmatprep.subr.mxu0 0.0
    %1006 = vmatpush1.msra.mxu0 0.0
    %1007 = vmatprep.subr.mxu0 0.0
    %1008 = vmatpush1.msra.mxu0 0.0
    %1009 = vmatprep.subr.mxu0 0.0
    %1010 = vmatpush1.msra.mxu0 0.0
    %1011 = vmatprep.subr.mxu0 0.0
    %1012 = vmatpush1.msra.mxu0 0.0
    %1013 = vmatprep.subr.mxu0 0.0
    %1014 = vmatpush1.msra.mxu0 0.0
    %1015 = vmatprep.subr.mxu0 0.0
    %1016 = vmatpush1.msra.mxu0 0.0
    %1017 = vmatprep.subr.mxu0 0.0
    %1018 = vmatpush1.msra.mxu0 0.0
    %1019 = vmatprep.subr.mxu0 0.0
    %1020 = vmatpush1.msra.mxu0 0.0
    %1021 = vmatprep.subr.mxu0 0.0
    %1022 = vmatpush1.msra.mxu0 0.0
    %1023 = vmatprep.subr.mxu0 0.0
    %1024 = vmatpush1.msra.mxu0 0.0
    %1025 = vmatprep.subr.mxu0 0.0
    %1026 = vmatpush1.msra.mxu0 0.0
    %1027 = vmatprep.subr.mxu0 0.0
    %1028 = vmatpush1.msra.mxu0 0.0
    %1029 = vmatprep.subr.mxu0 0.0
    %1030 = vmatpush1.msra.mxu0 0.0
    %1031 = vmatprep.subr.mxu0 0.0
    %1032 = vmatpush1.msra.mxu0 0.0
    %1033 = vmatprep.subr.mxu0 0.0
    %1034 = vmatpush1.msra.mxu0 0.0
    %1035 = vmatprep.subr.mxu0 0.0
    %1036 = vmatpush1.msra.mxu0 0.0
    %1037 = vmatprep.subr.mxu0 0.0
    %1038 = vmatpush1.msra.mxu0 0.0
    %1039 = vmatprep.subr.mxu0 0.0
    %1040 = vmatpush1.msra.mxu0 0.0
    %1041 = vmatprep.subr.mxu0 0.0
    %1042 = vmatpush1.msra.mxu0 0.0
    %1043 = vmatprep.subr.mxu0 0.0
    %1044 = vmatpush1.msra.mxu0 0.0
    %1045 = vmatprep.subr.mxu0 0.0
    %1046 = vmatpush1.msra.mxu0 0.0
    %1047 = vmatprep.subr.mxu0 0.0
    %1048 = vmatpush1.msra.mxu0 0.0
    %1049 = vmatprep.subr.mxu0 0.0
    %1050 = vmatpush1.msra.mxu0 0.0
    %1051 = vmatprep.subr.mxu0 0.0
    %1052 = vmatpush1.msra.mxu0 0.0
    %1053 = vmatprep.subr.mxu0 0.0
    %1054 = vmatpush1.msra.mxu0 0.0
    %1055 = vmatprep.subr.mxu0 0.0
    %1056 = vmatpush1.msra.mxu0 0.0
    %1057 = vmatprep.mubr.f32.mxu0 0.0
    %1058 = vmatmul.mubr.f32.gmra.mrb[0].mxu0 %v988
    %v1059 = vpop.f32.mrb[0].mxu0
    %v1060 = vadd.f32 %v986, %v1059
    %v1061 = vpop.f32.mrb[0].mxu0
    %1062 = vmatprep.mubr.f32.mxu0 0.0
    %1063 = vmatmul.mubr.f32.gmra.mrb[0].mxu0 %v991
    %v1064 = vpop.f32.mrb[0].mxu0
    %v1065 = vadd.f32 %v986, %v1064
    %v1066 = vpop.f32.mrb[0].mxu0
    %1067 = vdwg.mxu0
    %v1068 = vlaneseq
    %v1069 = vshrl.u32 %v1068, 7
    %v1070 = vsub.s32 1, %v1069
    %v1071 = vrot.slane %v34, %v1070
    %1076 = vrot.lane.b32.xlu0 %v22, 96
    %v1077 = vpop.permute.xlu0 %1076
    %1078 = vrot.lane.b32.xlu0 %v25, 96
    %v1079 = vpop.permute.xlu0 %1078
    %1080 = vrot.lane.b32.xlu0 %v28, 96
    %v1081 = vpop.permute.xlu0 %1080
    %1082 = vrot.lane.b32.xlu0 %v31, 96
    %v1083 = vpop.permute.xlu0 %1082
    %v1089 = vsel %vm56, %v53, 0
    %v1092 = vsel %vm56, %v54, 0
    %v1095 = vsel %vm56, %v55, 0
    %1097 = vmatprep.subr.mxu0 0.0
    %1098 = vmatpush1.msra.mxu0 %v1077
    %1099 = vmatprep.subr.mxu0 0.0
    %1100 = vmatpush1.msra.mxu0 %v1079
    %1101 = vmatprep.subr.mxu0 0.0
    %1102 = vmatpush1.msra.mxu0 %v1081
    %1103 = vmatprep.subr.mxu0 0.0
    %1104 = vmatpush1.msra.mxu0 %v1083
    %1105 = vmatprep.subr.mxu0 0.0
    %1106 = vmatpush1.msra.mxu0 0.0
    %1107 = vmatprep.subr.mxu0 0.0
    %1108 = vmatpush1.msra.mxu0 0.0
    %1109 = vmatprep.subr.mxu0 0.0
    %1110 = vmatpush1.msra.mxu0 0.0
    %1111 = vmatprep.subr.mxu0 0.0
    %1112 = vmatpush1.msra.mxu0 0.0
    %1113 = vmatprep.subr.mxu0 0.0
    %1114 = vmatpush1.msra.mxu0 0.0
    %1115 = vmatprep.subr.mxu0 0.0
    %1116 = vmatpush1.msra.mxu0 0.0
    %1117 = vmatprep.subr.mxu0 0.0
    %1118 = vmatpush1.msra.mxu0 0.0
    %1119 = vmatprep.subr.mxu0 0.0
    %1120 = vmatpush1.msra.mxu0 0.0
    %1121 = vmatprep.subr.mxu0 0.0
    %1122 = vmatpush1.msra.mxu0 0.0
    %1123 = vmatprep.subr.mxu0 0.0
    %1124 = vmatpush1.msra.mxu0 0.0
    %1125 = vmatprep.subr.mxu0 0.0
    %1126 = vmatpush1.msra.mxu0 0.0
    %1127 = vmatprep.subr.mxu0 0.0
    %1128 = vmatpush1.msra.mxu0 0.0
    %1129 = vmatprep.subr.mxu0 0.0
    %1130 = vmatpush1.msra.mxu0 0.0
    %1131 = vmatprep.subr.mxu0 0.0
    %1132 = vmatpush1.msra.mxu0 0.0
    %1133 = vmatprep.subr.mxu0 0.0
    %1134 = vmatpush1.msra.mxu0 0.0
    %1135 = vmatprep.subr.mxu0 0.0
    %1136 = vmatpush1.msra.mxu0 0.0
    %1137 = vmatprep.subr.mxu0 0.0
    %1138 = vmatpush1.msra.mxu0 0.0
    %1139 = vmatprep.subr.mxu0 0.0
    %1140 = vmatpush1.msra.mxu0 0.0
    %1141 = vmatprep.subr.mxu0 0.0
    %1142 = vmatpush1.msra.mxu0 0.0
    %1143 = vmatprep.subr.mxu0 0.0
    %1144 = vmatpush1.msra.mxu0 0.0
    %1145 = vmatprep.subr.mxu0 0.0
    %1146 = vmatpush1.msra.mxu0 0.0
    %1147 = vmatprep.subr.mxu0 0.0
    %1148 = vmatpush1.msra.mxu0 0.0
    %1149 = vmatprep.subr.mxu0 0.0
    %1150 = vmatpush1.msra.mxu0 0.0
    %1151 = vmatprep.subr.mxu0 0.0
    %1152 = vmatpush1.msra.mxu0 0.0
    %1153 = vmatprep.subr.mxu0 0.0
    %1154 = vmatpush1.msra.mxu0 0.0
    %1155 = vmatprep.subr.mxu0 0.0
    %1156 = vmatpush1.msra.mxu0 0.0
    %1157 = vmatprep.subr.mxu0 0.0
    %1158 = vmatpush1.msra.mxu0 0.0
    %1159 = vmatprep.subr.mxu0 0.0
    %1160 = vmatpush1.msra.mxu0 0.0
    %1161 = vmatprep.mubr.f32.mxu0 0.0
    %1162 = vmatmul.mubr.f32.gmra.mrb[0].mxu0 %v1089
    %v1163 = vpop.f32.mrb[0].mxu0
    %v1164 = vadd.f32 %v1071, %v1163
    %v1165 = vpop.f32.mrb[0].mxu0
    %1166 = vmatprep.mubr.f32.mxu0 0.0
    %1167 = vmatmul.mubr.f32.gmra.mrb[0].mxu0 %v1092
    %v1168 = vpop.f32.mrb[0].mxu0
    %v1169 = vadd.f32 %v1071, %v1168
    %v1170 = vpop.f32.mrb[0].mxu0
    %1171 = vmatprep.mubr.f32.mxu0 0.0
    %1172 = vmatmul.mubr.f32.gmra.mrb[0].mxu0 %v1095
    %v1173 = vpop.f32.mrb[0].mxu0
    %v1174 = vadd.f32 %v1071, %v1173
    %v1175 = vpop.f32.mrb[0].mxu0
    %1176 = vdwg.mxu0
    %1178 = vrot.lane.b32.xlu0 %v1060, 120
    %v1179 = vpop.permute.xlu0 %1178
    %1180 = vrot.lane.b32.xlu0 %v1060, 112
    %v1181 = vpop.permute.xlu0 %1180
    %1182 = vrot.lane.b32.xlu0 %v1060, 104
    %v1183 = vpop.permute.xlu0 %1182
    %1185 = vrot.lane.b32.xlu0 %v1065, 120
    %v1186 = vpop.permute.xlu0 %1185
    %1187 = vrot.lane.b32.xlu0 %v1065, 112
    %v1188 = vpop.permute.xlu0 %1187
    %1189 = vrot.lane.b32.xlu0 %v1065, 104
    %v1190 = vpop.permute.xlu0 %1189
    %1193 = vrot.lane.b32.xlu0 %v1164, 120
    %v1194 = vpop.permute.xlu0 %1193
    %1195 = vrot.lane.b32.xlu0 %v1169, 120
    %v1196 = vpop.permute.xlu0 %1195
    %1197 = vrot.lane.b32.xlu0 %v1164, 112
    %v1198 = vpop.permute.xlu0 %1197
    %1199 = vrot.lane.b32.xlu0 %v1169, 112
    %v1200 = vpop.permute.xlu0 %1199
    %1201 = vrot.lane.b32.xlu0 %v1164, 104
    %v1202 = vpop.permute.xlu0 %1201
    %1203 = vrot.lane.b32.xlu0 %v1169, 104
    %v1204 = vpop.permute.xlu0 %1203
    %vm1206 = vcmask 1043456
    %v1207 = vrot.slane %v1169, 4
    %v1208 = vrot.slane %v1174, 4
    %v1209 = vsel %vm1206, %v1207, %v1208
    %1210 = vrot.lane.b32.xlu0 %v1209, 120
    %v1211 = vpop.permute.xlu0 %1210
    %1212 = vrot.lane.b32.xlu0 %v1208, 120
    %v1213 = vpop.permute.xlu0 %1212
    %1214 = vrot.lane.b32.xlu0 %v1209, 112
    %v1215 = vpop.permute.xlu0 %1214
    %1216 = vrot.lane.b32.xlu0 %v1208, 112
    %v1217 = vpop.permute.xlu0 %1216
    %1218 = vrot.lane.b32.xlu0 %v1209, 104
    %v1219 = vpop.permute.xlu0 %1218
    %1220 = vrot.lane.b32.xlu0 %v1208, 104
    %v1221 = vpop.permute.xlu0 %1220
    %v1222 = vsel %vm167, %v1060, 0
    %v1224 = vsel %vm167, %v1164, 0
    %v1226 = vsel %vm167, %v1169, 0
    %1228 = vmatprep.subr.mxu0 0.0
    %1229 = vmatpush1.xpose.msra.mxu0 %v1224
    %1230 = vmatprep.subr.mxu0 0.0
    %1231 = vmatpush1.xpose.msra.mxu0 %v1226
    %1232 = vmatprep.subr.mxu0 0.0
    %1233 = vmatpush1.xpose.msra.mxu0 0.0
    %1234 = vmatprep.subr.mxu0 0.0
    %1235 = vmatpush1.xpose.msra.mxu0 0.0
    %1236 = vmatprep.subr.mxu0 0.0
    %1237 = vmatpush1.xpose.msra.mxu0 0.0
    %1238 = vmatprep.subr.mxu0 0.0
    %1239 = vmatpush1.xpose.msra.mxu0 0.0
    %1240 = vmatprep.subr.mxu0 0.0
    %1241 = vmatpush1.xpose.msra.mxu0 0.0
    %1242 = vmatprep.subr.mxu0 0.0
    %1243 = vmatpush1.xpose.msra.mxu0 0.0
    %1244 = vmatprep.subr.mxu0 0.0
    %1245 = vmatpush1.xpose.msra.mxu0 0.0
    %1246 = vmatprep.subr.mxu0 0.0
    %1247 = vmatpush1.xpose.msra.mxu0 0.0
    %1248 = vmatprep.subr.mxu0 0.0
    %1249 = vmatpush1.xpose.msra.mxu0 0.0
    %1250 = vmatprep.subr.mxu0 0.0
    %1251 = vmatpush1.xpose.msra.mxu0 0.0
    %1252 = vmatprep.subr.mxu0 0.0
    %1253 = vmatpush1.xpose.msra.mxu0 0.0
    %1254 = vmatprep.subr.mxu0 0.0
    %1255 = vmatpush1.xpose.msra.mxu0 0.0
    %1256 = vmatprep.subr.mxu0 0.0
    %1257 = vmatpush1.xpose.msra.mxu0 0.0
    %1258 = vmatprep.subr.mxu0 0.0
    %1259 = vmatpush1.xpose.msra.mxu0 0.0
    %1260 = vmatprep.subr.mxu0 0.0
    %1261 = vmatpush1.xpose.msra.mxu0 0.0
    %1262 = vmatprep.subr.mxu0 0.0
    %1263 = vmatpush1.xpose.msra.mxu0 0.0
    %1264 = vmatprep.subr.mxu0 0.0
    %1265 = vmatpush1.xpose.msra.mxu0 0.0
    %1266 = vmatprep.subr.mxu0 0.0
    %1267 = vmatpush1.xpose.msra.mxu0 0.0
    %1268 = vmatprep.subr.mxu0 0.0
    %1269 = vmatpush1.xpose.msra.mxu0 0.0
    %1270 = vmatprep.subr.mxu0 0.0
    %1271 = vmatpush1.xpose.msra.mxu0 0.0
    %1272 = vmatprep.subr.mxu0 0.0
    %1273 = vmatpush1.xpose.msra.mxu0 0.0
    %1274 = vmatprep.subr.mxu0 0.0
    %1275 = vmatpush1.xpose.msra.mxu0 0.0
    %1276 = vmatprep.subr.mxu0 0.0
    %1277 = vmatpush1.xpose.msra.mxu0 0.0
    %1278 = vmatprep.subr.mxu0 0.0
    %1279 = vmatpush1.xpose.msra.mxu0 0.0
    %1280 = vmatprep.subr.mxu0 0.0
    %1281 = vmatpush1.xpose.msra.mxu0 0.0
    %1282 = vmatprep.subr.mxu0 0.0
    %1283 = vmatpush1.xpose.msra.mxu0 0.0
    %1284 = vmatprep.subr.mxu0 0.0
    %1285 = vmatpush1.xpose.msra.mxu0 0.0
    %1286 = vmatprep.subr.mxu0 0.0
    %1287 = vmatpush1.xpose.msra.mxu0 0.0
    %1288 = vmatprep.subr.mxu0 0.0
    %1289 = vmatpush1.xpose.msra.mxu0 0.0
    %1290 = vmatprep.subr.mxu0 0.0
    %1291 = vmatpush1.xpose.msra.mxu0 0.0
    %1292 = vmatprep.mubr.f32.mxu0 0.0
    %1293 = vmatmul.mubr.f32.gmra.mrb[0].mxu0 %v1222
    %v1294 = vpop.f32.mrb[0].mxu0
    %v1295 = vadd.f32 0.0, %v1294
    %v1296 = vpop.f32.mrb[0].mxu0
    %1297 = vdwg.mxu0
    %v1298 = vsel %vm167, %v1179, 0
    %v1300 = vsel %vm167, %v1194, 0
    %v1302 = vsel %vm167, %v1196, 0
    %1304 = vmatprep.subr.mxu0 0.0
    %1305 = vmatpush1.xpose.msra.mxu0 %v1300
    %1306 = vmatprep.subr.mxu0 0.0
    %1307 = vmatpush1.xpose.msra.mxu0 %v1302
    %1308 = vmatprep.subr.mxu0 0.0
    %1309 = vmatpush1.xpose.msra.mxu0 0.0
    %1310 = vmatprep.subr.mxu0 0.0
    %1311 = vmatpush1.xpose.msra.mxu0 0.0
    %1312 = vmatprep.subr.mxu0 0.0
    %1313 = vmatpush1.xpose.msra.mxu0 0.0
    %1314 = vmatprep.subr.mxu0 0.0
    %1315 = vmatpush1.xpose.msra.mxu0 0.0
    %1316 = vmatprep.subr.mxu0 0.0
    %1317 = vmatpush1.xpose.msra.mxu0 0.0
    %1318 = vmatprep.subr.mxu0 0.0
    %1319 = vmatpush1.xpose.msra.mxu0 0.0
    %1320 = vmatprep.subr.mxu0 0.0
    %1321 = vmatpush1.xpose.msra.mxu0 0.0
    %1322 = vmatprep.subr.mxu0 0.0
    %1323 = vmatpush1.xpose.msra.mxu0 0.0
    %1324 = vmatprep.subr.mxu0 0.0
    %1325 = vmatpush1.xpose.msra.mxu0 0.0
    %1326 = vmatprep.subr.mxu0 0.0
    %1327 = vmatpush1.xpose.msra.mxu0 0.0
    %1328 = vmatprep.subr.mxu0 0.0
    %1329 = vmatpush1.xpose.msra.mxu0 0.0
    %1330 = vmatprep.subr.mxu0 0.0
    %1331 = vmatpush1.xpose.msra.mxu0 0.0
    %1332 = vmatprep.subr.mxu0 0.0
    %1333 = vmatpush1.xpose.msra.mxu0 0.0
    %1334 = vmatprep.subr.mxu0 0.0
    %1335 = vmatpush1.xpose.msra.mxu0 0.0
    %1336 = vmatprep.subr.mxu0 0.0
    %1337 = vmatpush1.xpose.msra.mxu0 0.0
    %1338 = vmatprep.subr.mxu0 0.0
    %1339 = vmatpush1.xpose.msra.mxu0 0.0
    %1340 = vmatprep.subr.mxu0 0.0
    %1341 = vmatpush1.xpose.msra.mxu0 0.0
    %1342 = vmatprep.subr.mxu0 0.0
    %1343 = vmatpush1.xpose.msra.mxu0 0.0
    %1344 = vmatprep.subr.mxu0 0.0
    %1345 = vmatpush1.xpose.msra.mxu0 0.0
    %1346 = vmatprep.subr.mxu0 0.0
    %1347 = vmatpush1.xpose.msra.mxu0 0.0
    %1348 = vmatprep.subr.mxu0 0.0
    %1349 = vmatpush1.xpose.msra.mxu0 0.0
    %1350 = vmatprep.subr.mxu0 0.0
    %1351 = vmatpush1.xpose.msra.mxu0 0.0
    %1352 = vmatprep.subr.mxu0 0.0
    %1353 = vmatpush1.xpose.msra.mxu0 0.0
    %1354 = vmatprep.subr.mxu0 0.0
    %1355 = vmatpush1.xpose.msra.mxu0 0.0
    %1356 = vmatprep.subr.mxu0 0.0
    %1357 = vmatpush1.xpose.msra.mxu0 0.0
    %1358 = vmatprep.subr.mxu0 0.0
    %1359 = vmatpush1.xpose.msra.mxu0 0.0
    %1360 = vmatprep.subr.mxu0 0.0
    %1361 = vmatpush1.xpose.msra.mxu0 0.0
    %1362 = vmatprep.subr.mxu0 0.0
    %1363 = vmatpush1.xpose.msra.mxu0 0.0
    %1364 = vmatprep.subr.mxu0 0.0
    %1365 = vmatpush1.xpose.msra.mxu0 0.0
    %1366 = vmatprep.subr.mxu0 0.0
    %1367 = vmatpush1.xpose.msra.mxu0 0.0
    %1368 = vmatprep.mubr.f32.mxu0 0.0
    %1369 = vmatmul.mubr.f32.gmra.mrb[0].mxu0 %v1298
    %v1370 = vpop.f32.mrb[0].mxu0
    %v1371 = vadd.f32 0.0, %v1370
    %v1372 = vpop.f32.mrb[0].mxu0
    %1373 = vdwg.mxu0
    %v1374 = vsel %vm167, %v1181, 0
    %v1376 = vsel %vm167, %v1198, 0
    %v1378 = vsel %vm167, %v1200, 0
    %1380 = vmatprep.subr.mxu0 0.0
    %1381 = vmatpush1.xpose.msra.mxu0 %v1376
    %1382 = vmatprep.subr.mxu0 0.0
    %1383 = vmatpush1.xpose.msra.mxu0 %v1378
    %1384 = vmatprep.subr.mxu0 0.0
    %1385 = vmatpush1.xpose.msra.mxu0 0.0
    %1386 = vmatprep.subr.mxu0 0.0
    %1387 = vmatpush1.xpose.msra.mxu0 0.0
    %1388 = vmatprep.subr.mxu0 0.0
    %1389 = vmatpush1.xpose.msra.mxu0 0.0
    %1390 = vmatprep.subr.mxu0 0.0
    %1391 = vmatpush1.xpose.msra.mxu0 0.0
    %1392 = vmatprep.subr.mxu0 0.0
    %1393 = vmatpush1.xpose.msra.mxu0 0.0
    %1394 = vmatprep.subr.mxu0 0.0
    %1395 = vmatpush1.xpose.msra.mxu0 0.0
    %1396 = vmatprep.subr.mxu0 0.0
    %1397 = vmatpush1.xpose.msra.mxu0 0.0
    %1398 = vmatprep.subr.mxu0 0.0
    %1399 = vmatpush1.xpose.msra.mxu0 0.0
    %1400 = vmatprep.subr.mxu0 0.0
    %1401 = vmatpush1.xpose.msra.mxu0 0.0
    %1402 = vmatprep.subr.mxu0 0.0
    %1403 = vmatpush1.xpose.msra.mxu0 0.0
    %1404 = vmatprep.subr.mxu0 0.0
    %1405 = vmatpush1.xpose.msra.mxu0 0.0
    %1406 = vmatprep.subr.mxu0 0.0
    %1407 = vmatpush1.xpose.msra.mxu0 0.0
    %1408 = vmatprep.subr.mxu0 0.0
    %1409 = vmatpush1.xpose.msra.mxu0 0.0
    %1410 = vmatprep.subr.mxu0 0.0
    %1411 = vmatpush1.xpose.msra.mxu0 0.0
    %1412 = vmatprep.subr.mxu0 0.0
    %1413 = vmatpush1.xpose.msra.mxu0 0.0
    %1414 = vmatprep.subr.mxu0 0.0
    %1415 = vmatpush1.xpose.msra.mxu0 0.0
    %1416 = vmatprep.subr.mxu0 0.0
    %1417 = vmatpush1.xpose.msra.mxu0 0.0
    %1418 = vmatprep.subr.mxu0 0.0
    %1419 = vmatpush1.xpose.msra.mxu0 0.0
    %1420 = vmatprep.subr.mxu0 0.0
    %1421 = vmatpush1.xpose.msra.mxu0 0.0
    %1422 = vmatprep.subr.mxu0 0.0
    %1423 = vmatpush1.xpose.msra.mxu0 0.0
    %1424 = vmatprep.subr.mxu0 0.0
    %1425 = vmatpush1.xpose.msra.mxu0 0.0
    %1426 = vmatprep.subr.mxu0 0.0
    %1427 = vmatpush1.xpose.msra.mxu0 0.0
    %1428 = vmatprep.subr.mxu0 0.0
    %1429 = vmatpush1.xpose.msra.mxu0 0.0
    %1430 = vmatprep.subr.mxu0 0.0
    %1431 = vmatpush1.xpose.msra.mxu0 0.0
    %1432 = vmatprep.subr.mxu0 0.0
    %1433 = vmatpush1.xpose.msra.mxu0 0.0
    %1434 = vmatprep.subr.mxu0 0.0
    %1435 = vmatpush1.xpose.msra.mxu0 0.0
    %1436 = vmatprep.subr.mxu0 0.0
    %1437 = vmatpush1.xpose.msra.mxu0 0.0
    %1438 = vmatprep.subr.mxu0 0.0
    %1439 = vmatpush1.xpose.msra.mxu0 0.0
    %1440 = vmatprep.subr.mxu0 0.0
    %1441 = vmatpush1.xpose.msra.mxu0 0.0
    %1442 = vmatprep.subr.mxu0 0.0
    %1443 = vmatpush1.xpose.msra.mxu0 0.0
    %1444 = vmatprep.mubr.f32.mxu0 0.0
    %1445 = vmatmul.mubr.f32.gmra.mrb[0].mxu0 %v1374
    %v1446 = vpop.f32.mrb[0].mxu0
    %v1447 = vadd.f32 0.0, %v1446
    %v1448 = vpop.f32.mrb[0].mxu0
    %1449 = vdwg.mxu0
    %v1450 = vsel %vm167, %v1183, 0
    %v1452 = vsel %vm167, %v1202, 0
    %v1454 = vsel %vm167, %v1204, 0
    %1456 = vmatprep.subr.mxu0 0.0
    %1457 = vmatpush1.xpose.msra.mxu0 %v1452
    %1458 = vmatprep.subr.mxu0 0.0
    %1459 = vmatpush1.xpose.msra.mxu0 %v1454
    %1460 = vmatprep.subr.mxu0 0.0
    %1461 = vmatpush1.xpose.msra.mxu0 0.0
    %1462 = vmatprep.subr.mxu0 0.0
    %1463 = vmatpush1.xpose.msra.mxu0 0.0
    %1464 = vmatprep.subr.mxu0 0.0
    %1465 = vmatpush1.xpose.msra.mxu0 0.0
    %1466 = vmatprep.subr.mxu0 0.0
    %1467 = vmatpush1.xpose.msra.mxu0 0.0
    %1468 = vmatprep.subr.mxu0 0.0
    %1469 = vmatpush1.xpose.msra.mxu0 0.0
    %1470 = vmatprep.subr.mxu0 0.0
    %1471 = vmatpush1.xpose.msra.mxu0 0.0
    %1472 = vmatprep.subr.mxu0 0.0
    %1473 = vmatpush1.xpose.msra.mxu0 0.0
    %1474 = vmatprep.subr.mxu0 0.0
    %1475 = vmatpush1.xpose.msra.mxu0 0.0
    %1476 = vmatprep.subr.mxu0 0.0
    %1477 = vmatpush1.xpose.msra.mxu0 0.0
    %1478 = vmatprep.subr.mxu0 0.0
    %1479 = vmatpush1.xpose.msra.mxu0 0.0
    %1480 = vmatprep.subr.mxu0 0.0
    %1481 = vmatpush1.xpose.msra.mxu0 0.0
    %1482 = vmatprep.subr.mxu0 0.0
    %1483 = vmatpush1.xpose.msra.mxu0 0.0
    %1484 = vmatprep.subr.mxu0 0.0
    %1485 = vmatpush1.xpose.msra.mxu0 0.0
    %1486 = vmatprep.subr.mxu0 0.0
    %1487 = vmatpush1.xpose.msra.mxu0 0.0
    %1488 = vmatprep.subr.mxu0 0.0
    %1489 = vmatpush1.xpose.msra.mxu0 0.0
    %1490 = vmatprep.subr.mxu0 0.0
    %1491 = vmatpush1.xpose.msra.mxu0 0.0
    %1492 = vmatprep.subr.mxu0 0.0
    %1493 = vmatpush1.xpose.msra.mxu0 0.0
    %1494 = vmatprep.subr.mxu0 0.0
    %1495 = vmatpush1.xpose.msra.mxu0 0.0
    %1496 = vmatprep.subr.mxu0 0.0
    %1497 = vmatpush1.xpose.msra.mxu0 0.0
    %1498 = vmatprep.subr.mxu0 0.0
    %1499 = vmatpush1.xpose.msra.mxu0 0.0
    %1500 = vmatprep.subr.mxu0 0.0
    %1501 = vmatpush1.xpose.msra.mxu0 0.0
    %1502 = vmatprep.subr.mxu0 0.0
    %1503 = vmatpush1.xpose.msra.mxu0 0.0
    %1504 = vmatprep.subr.mxu0 0.0
    %1505 = vmatpush1.xpose.msra.mxu0 0.0
    %1506 = vmatprep.subr.mxu0 0.0
    %1507 = vmatpush1.xpose.msra.mxu0 0.0
    %1508 = vmatprep.subr.mxu0 0.0
    %1509 = vmatpush1.xpose.msra.mxu0 0.0
    %1510 = vmatprep.subr.mxu0 0.0
    %1511 = vmatpush1.xpose.msra.mxu0 0.0
    %1512 = vmatprep.subr.mxu0 0.0
    %1513 = vmatpush1.xpose.msra.mxu0 0.0
    %1514 = vmatprep.subr.mxu0 0.0
    %1515 = vmatpush1.xpose.msra.mxu0 0.0
    %1516 = vmatprep.subr.mxu0 0.0
    %1517 = vmatpush1.xpose.msra.mxu0 0.0
    %1518 = vmatprep.subr.mxu0 0.0
    %1519 = vmatpush1.xpose.msra.mxu0 0.0
    %1520 = vmatprep.mubr.f32.mxu0 0.0
    %1521 = vmatmul.mubr.f32.gmra.mrb[0].mxu0 %v1450
    %v1522 = vpop.f32.mrb[0].mxu0
    %v1523 = vadd.f32 0.0, %v1522
    %v1524 = vpop.f32.mrb[0].mxu0
    %1525 = vdwg.mxu0
    %v1526 = vsel %vm167, %v1065, 0
    %v1528 = vsel %vm167, %v1209, 0
    %v1530 = vsel %vm167, %v1208, 0
    %1532 = vmatprep.subr.mxu0 0.0
    %1533 = vmatpush1.xpose.msra.mxu0 %v1528
    %1534 = vmatprep.subr.mxu0 0.0
    %1535 = vmatpush1.xpose.msra.mxu0 %v1530
    %1536 = vmatprep.subr.mxu0 0.0
    %1537 = vmatpush1.xpose.msra.mxu0 0.0
    %1538 = vmatprep.subr.mxu0 0.0
    %1539 = vmatpush1.xpose.msra.mxu0 0.0
    %1540 = vmatprep.subr.mxu0 0.0
    %1541 = vmatpush1.xpose.msra.mxu0 0.0
    %1542 = vmatprep.subr.mxu0 0.0
    %1543 = vmatpush1.xpose.msra.mxu0 0.0
    %1544 = vmatprep.subr.mxu0 0.0
    %1545 = vmatpush1.xpose.msra.mxu0 0.0
    %1546 = vmatprep.subr.mxu0 0.0
    %1547 = vmatpush1.xpose.msra.mxu0 0.0
    %1548 = vmatprep.subr.mxu0 0.0
    %1549 = vmatpush1.xpose.msra.mxu0 0.0
    %1550 = vmatprep.subr.mxu0 0.0
    %1551 = vmatpush1.xpose.msra.mxu0 0.0
    %1552 = vmatprep.subr.mxu0 0.0
    %1553 = vmatpush1.xpose.msra.mxu0 0.0
    %1554 = vmatprep.subr.mxu0 0.0
    %1555 = vmatpush1.xpose.msra.mxu0 0.0
    %1556 = vmatprep.subr.mxu0 0.0
    %1557 = vmatpush1.xpose.msra.mxu0 0.0
    %1558 = vmatprep.subr.mxu0 0.0
    %1559 = vmatpush1.xpose.msra.mxu0 0.0
    %1560 = vmatprep.subr.mxu0 0.0
    %1561 = vmatpush1.xpose.msra.mxu0 0.0
    %1562 = vmatprep.subr.mxu0 0.0
    %1563 = vmatpush1.xpose.msra.mxu0 0.0
    %1564 = vmatprep.subr.mxu0 0.0
    %1565 = vmatpush1.xpose.msra.mxu0 0.0
    %1566 = vmatprep.subr.mxu0 0.0
    %1567 = vmatpush1.xpose.msra.mxu0 0.0
    %1568 = vmatprep.subr.mxu0 0.0
    %1569 = vmatpush1.xpose.msra.mxu0 0.0
    %1570 = vmatprep.subr.mxu0 0.0
    %1571 = vmatpush1.xpose.msra.mxu0 0.0
    %1572 = vmatprep.subr.mxu0 0.0
    %1573 = vmatpush1.xpose.msra.mxu0 0.0
    %1574 = vmatprep.subr.mxu0 0.0
    %1575 = vmatpush1.xpose.msra.mxu0 0.0
    %1576 = vmatprep.subr.mxu0 0.0
    %1577 = vmatpush1.xpose.msra.mxu0 0.0
    %1578 = vmatprep.subr.mxu0 0.0
    %1579 = vmatpush1.xpose.msra.mxu0 0.0
    %1580 = vmatprep.subr.mxu0 0.0
    %1581 = vmatpush1.xpose.msra.mxu0 0.0
    %1582 = vmatprep.subr.mxu0 0.0
    %1583 = vmatpush1.xpose.msra.mxu0 0.0
    %1584 = vmatprep.subr.mxu0 0.0
    %1585 = vmatpush1.xpose.msra.mxu0 0.0
    %1586 = vmatprep.subr.mxu0 0.0
    %1587 = vmatpush1.xpose.msra.mxu0 0.0
    %1588 = vmatprep.subr.mxu0 0.0
    %1589 = vmatpush1.xpose.msra.mxu0 0.0
    %1590 = vmatprep.subr.mxu0 0.0
    %1591 = vmatpush1.xpose.msra.mxu0 0.0
    %1592 = vmatprep.subr.mxu0 0.0
    %1593 = vmatpush1.xpose.msra.mxu0 0.0
    %1594 = vmatprep.subr.mxu0 0.0
    %1595 = vmatpush1.xpose.msra.mxu0 0.0
    %1596 = vmatprep.mubr.f32.mxu0 0.0
    %1597 = vmatmul.mubr.f32.gmra.mrb[0].mxu0 %v1526
    %v1598 = vpop.f32.mrb[0].mxu0
    %v1599 = vadd.f32 0.0, %v1598
    %v1600 = vpop.f32.mrb[0].mxu0
    %1601 = vdwg.mxu0
    %v1602 = vsel %vm167, %v1186, 0
    %v1604 = vsel %vm167, %v1211, 0
    %v1606 = vsel %vm167, %v1213, 0
    %1608 = vmatprep.subr.mxu0 0.0
    %1609 = vmatpush1.xpose.msra.mxu0 %v1604
    %1610 = vmatprep.subr.mxu0 0.0
    %1611 = vmatpush1.xpose.msra.mxu0 %v1606
    %1612 = vmatprep.subr.mxu0 0.0
    %1613 = vmatpush1.xpose.msra.mxu0 0.0
    %1614 = vmatprep.subr.mxu0 0.0
    %1615 = vmatpush1.xpose.msra.mxu0 0.0
    %1616 = vmatprep.subr.mxu0 0.0
    %1617 = vmatpush1.xpose.msra.mxu0 0.0
    %1618 = vmatprep.subr.mxu0 0.0
    %1619 = vmatpush1.xpose.msra.mxu0 0.0
    %1620 = vmatprep.subr.mxu0 0.0
    %1621 = vmatpush1.xpose.msra.mxu0 0.0
    %1622 = vmatprep.subr.mxu0 0.0
    %1623 = vmatpush1.xpose.msra.mxu0 0.0
    %1624 = vmatprep.subr.mxu0 0.0
    %1625 = vmatpush1.xpose.msra.mxu0 0.0
    %1626 = vmatprep.subr.mxu0 0.0
    %1627 = vmatpush1.xpose.msra.mxu0 0.0
    %1628 = vmatprep.subr.mxu0 0.0
    %1629 = vmatpush1.xpose.msra.mxu0 0.0
    %1630 = vmatprep.subr.mxu0 0.0
    %1631 = vmatpush1.xpose.msra.mxu0 0.0
    %1632 = vmatprep.subr.mxu0 0.0
    %1633 = vmatpush1.xpose.msra.mxu0 0.0
    %1634 = vmatprep.subr.mxu0 0.0
    %1635 = vmatpush1.xpose.msra.mxu0 0.0
    %1636 = vmatprep.subr.mxu0 0.0
    %1637 = vmatpush1.xpose.msra.mxu0 0.0
    %1638 = vmatprep.subr.mxu0 0.0
    %1639 = vmatpush1.xpose.msra.mxu0 0.0
    %1640 = vmatprep.subr.mxu0 0.0
    %1641 = vmatpush1.xpose.msra.mxu0 0.0
    %1642 = vmatprep.subr.mxu0 0.0
    %1643 = vmatpush1.xpose.msra.mxu0 0.0
    %1644 = vmatprep.subr.mxu0 0.0
    %1645 = vmatpush1.xpose.msra.mxu0 0.0
    %1646 = vmatprep.subr.mxu0 0.0
    %1647 = vmatpush1.xpose.msra.mxu0 0.0
    %1648 = vmatprep.subr.mxu0 0.0
    %1649 = vmatpush1.xpose.msra.mxu0 0.0
    %1650 = vmatprep.subr.mxu0 0.0
    %1651 = vmatpush1.xpose.msra.mxu0 0.0
    %1652 = vmatprep.subr.mxu0 0.0
    %1653 = vmatpush1.xpose.msra.mxu0 0.0
    %1654 = vmatprep.subr.mxu0 0.0
    %1655 = vmatpush1.xpose.msra.mxu0 0.0
    %1656 = vmatprep.subr.mxu0 0.0
    %1657 = vmatpush1.xpose.msra.mxu0 0.0
    %1658 = vmatprep.subr.mxu0 0.0
    %1659 = vmatpush1.xpose.msra.mxu0 0.0
    %1660 = vmatprep.subr.mxu0 0.0
    %1661 = vmatpush1.xpose.msra.mxu0 0.0
    %1662 = vmatprep.subr.mxu0 0.0
    %1663 = vmatpush1.xpose.msra.mxu0 0.0
    %1664 = vmatprep.subr.mxu0 0.0
    %1665 = vmatpush1.xpose.msra.mxu0 0.0
    %1666 = vmatprep.subr.mxu0 0.0
    %1667 = vmatpush1.xpose.msra.mxu0 0.0
    %1668 = vmatprep.subr.mxu0 0.0
    %1669 = vmatpush1.xpose.msra.mxu0 0.0
    %1670 = vmatprep.subr.mxu0 0.0
    %1671 = vmatpush1.xpose.msra.mxu0 0.0
    %1672 = vmatprep.mubr.f32.mxu0 0.0
    %1673 = vmatmul.mubr.f32.gmra.mrb[0].mxu0 %v1602
    %v1674 = vpop.f32.mrb[0].mxu0
    %v1675 = vadd.f32 0.0, %v1674
    %v1676 = vpop.f32.mrb[0].mxu0
    %1677 = vdwg.mxu0
    %v1678 = vsel %vm167, %v1188, 0
    %v1680 = vsel %vm167, %v1215, 0
    %v1682 = vsel %vm167, %v1217, 0
    %1684 = vmatprep.subr.mxu0 0.0
    %1685 = vmatpush1.xpose.msra.mxu0 %v1680
    %1686 = vmatprep.subr.mxu0 0.0
    %1687 = vmatpush1.xpose.msra.mxu0 %v1682
    %1688 = vmatprep.subr.mxu0 0.0
    %1689 = vmatpush1.xpose.msra.mxu0 0.0
    %1690 = vmatprep.subr.mxu0 0.0
    %1691 = vmatpush1.xpose.msra.mxu0 0.0
    %1692 = vmatprep.subr.mxu0 0.0
    %1693 = vmatpush1.xpose.msra.mxu0 0.0
    %1694 = vmatprep.subr.mxu0 0.0
    %1695 = vmatpush1.xpose.msra.mxu0 0.0
    %1696 = vmatprep.subr.mxu0 0.0
    %1697 = vmatpush1.xpose.msra.mxu0 0.0
    %1698 = vmatprep.subr.mxu0 0.0
    %1699 = vmatpush1.xpose.msra.mxu0 0.0
    %1700 = vmatprep.subr.mxu0 0.0
    %1701 = vmatpush1.xpose.msra.mxu0 0.0
    %1702 = vmatprep.subr.mxu0 0.0
    %1703 = vmatpush1.xpose.msra.mxu0 0.0
    %1704 = vmatprep.subr.mxu0 0.0
    %1705 = vmatpush1.xpose.msra.mxu0 0.0
    %1706 = vmatprep.subr.mxu0 0.0
    %1707 = vmatpush1.xpose.msra.mxu0 0.0
    %1708 = vmatprep.subr.mxu0 0.0
    %1709 = vmatpush1.xpose.msra.mxu0 0.0
    %1710 = vmatprep.subr.mxu0 0.0
    %1711 = vmatpush1.xpose.msra.mxu0 0.0
    %1712 = vmatprep.subr.mxu0 0.0
    %1713 = vmatpush1.xpose.msra.mxu0 0.0
    %1714 = vmatprep.subr.mxu0 0.0
    %1715 = vmatpush1.xpose.msra.mxu0 0.0
    %1716 = vmatprep.subr.mxu0 0.0
    %1717 = vmatpush1.xpose.msra.mxu0 0.0
    %1718 = vmatprep.subr.mxu0 0.0
    %1719 = vmatpush1.xpose.msra.mxu0 0.0
    %1720 = vmatprep.subr.mxu0 0.0
    %1721 = vmatpush1.xpose.msra.mxu0 0.0
    %1722 = vmatprep.subr.mxu0 0.0
    %1723 = vmatpush1.xpose.msra.mxu0 0.0
    %1724 = vmatprep.subr.mxu0 0.0
    %1725 = vmatpush1.xpose.msra.mxu0 0.0
    %1726 = vmatprep.subr.mxu0 0.0
    %1727 = vmatpush1.xpose.msra.mxu0 0.0
    %1728 = vmatprep.subr.mxu0 0.0
    %1729 = vmatpush1.xpose.msra.mxu0 0.0
    %1730 = vmatprep.subr.mxu0 0.0
    %1731 = vmatpush1.xpose.msra.mxu0 0.0
    %1732 = vmatprep.subr.mxu0 0.0
    %1733 = vmatpush1.xpose.msra.mxu0 0.0
    %1734 = vmatprep.subr.mxu0 0.0
    %1735 = vmatpush1.xpose.msra.mxu0 0.0
    %1736 = vmatprep.subr.mxu0 0.0
    %1737 = vmatpush1.xpose.msra.mxu0 0.0
    %1738 = vmatprep.subr.mxu0 0.0
    %1739 = vmatpush1.xpose.msra.mxu0 0.0
    %1740 = vmatprep.subr.mxu0 0.0
    %1741 = vmatpush1.xpose.msra.mxu0 0.0
    %1742 = vmatprep.subr.mxu0 0.0
    %1743 = vmatpush1.xpose.msra.mxu0 0.0
    %1744 = vmatprep.subr.mxu0 0.0
    %1745 = vmatpush1.xpose.msra.mxu0 0.0
    %1746 = vmatprep.subr.mxu0 0.0
    %1747 = vmatpush1.xpose.msra.mxu0 0.0
    %1748 = vmatprep.mubr.f32.mxu0 0.0
    %1749 = vmatmul.mubr.f32.gmra.mrb[0].mxu0 %v1678
    %v1750 = vpop.f32.mrb[0].mxu0
    %v1751 = vadd.f32 0.0, %v1750
    %v1752 = vpop.f32.mrb[0].mxu0
    %1753 = vdwg.mxu0
    %v1754 = vsel %vm167, %v1190, 0
    %v1756 = vsel %vm167, %v1219, 0
    %v1758 = vsel %vm167, %v1221, 0
    %1760 = vmatprep.subr.mxu0 0.0
    %1761 = vmatpush1.xpose.msra.mxu0 %v1756
    %1762 = vmatprep.subr.mxu0 0.0
    %1763 = vmatpush1.xpose.msra.mxu0 %v1758
    %1764 = vmatprep.subr.mxu0 0.0
    %1765 = vmatpush1.xpose.msra.mxu0 0.0
    %1766 = vmatprep.subr.mxu0 0.0
    %1767 = vmatpush1.xpose.msra.mxu0 0.0
    %1768 = vmatprep.subr.mxu0 0.0
    %1769 = vmatpush1.xpose.msra.mxu0 0.0
    %1770 = vmatprep.subr.mxu0 0.0
    %1771 = vmatpush1.xpose.msra.mxu0 0.0
    %1772 = vmatprep.subr.mxu0 0.0
    %1773 = vmatpush1.xpose.msra.mxu0 0.0
    %1774 = vmatprep.subr.mxu0 0.0
    %1775 = vmatpush1.xpose.msra.mxu0 0.0
    %1776 = vmatprep.subr.mxu0 0.0
    %1777 = vmatpush1.xpose.msra.mxu0 0.0
    %1778 = vmatprep.subr.mxu0 0.0
    %1779 = vmatpush1.xpose.msra.mxu0 0.0
    %1780 = vmatprep.subr.mxu0 0.0
    %1781 = vmatpush1.xpose.msra.mxu0 0.0
    %1782 = vmatprep.subr.mxu0 0.0
    %1783 = vmatpush1.xpose.msra.mxu0 0.0
    %1784 = vmatprep.subr.mxu0 0.0
    %1785 = vmatpush1.xpose.msra.mxu0 0.0
    %1786 = vmatprep.subr.mxu0 0.0
    %1787 = vmatpush1.xpose.msra.mxu0 0.0
    %1788 = vmatprep.subr.mxu0 0.0
    %1789 = vmatpush1.xpose.msra.mxu0 0.0
    %1790 = vmatprep.subr.mxu0 0.0
    %1791 = vmatpush1.xpose.msra.mxu0 0.0
    %1792 = vmatprep.subr.mxu0 0.0
    %1793 = vmatpush1.xpose.msra.mxu0 0.0
    %1794 = vmatprep.subr.mxu0 0.0
    %1795 = vmatpush1.xpose.msra.mxu0 0.0
    %1796 = vmatprep.subr.mxu0 0.0
    %1797 = vmatpush1.xpose.msra.mxu0 0.0
    %1798 = vmatprep.subr.mxu0 0.0
    %1799 = vmatpush1.xpose.msra.mxu0 0.0
    %1800 = vmatprep.subr.mxu0 0.0
    %1801 = vmatpush1.xpose.msra.mxu0 0.0
    %1802 = vmatprep.subr.mxu0 0.0
    %1803 = vmatpush1.xpose.msra.mxu0 0.0
    %1804 = vmatprep.subr.mxu0 0.0
    %1805 = vmatpush1.xpose.msra.mxu0 0.0
    %1806 = vmatprep.subr.mxu0 0.0
    %1807 = vmatpush1.xpose.msra.mxu0 0.0
    %1808 = vmatprep.subr.mxu0 0.0
    %1809 = vmatpush1.xpose.msra.mxu0 0.0
    %1810 = vmatprep.subr.mxu0 0.0
    %1811 = vmatpush1.xpose.msra.mxu0 0.0
    %1812 = vmatprep.subr.mxu0 0.0
    %1813 = vmatpush1.xpose.msra.mxu0 0.0
    %1814 = vmatprep.subr.mxu0 0.0
    %1815 = vmatpush1.xpose.msra.mxu0 0.0
    %1816 = vmatprep.subr.mxu0 0.0
    %1817 = vmatpush1.xpose.msra.mxu0 0.0
    %1818 = vmatprep.subr.mxu0 0.0
    %1819 = vmatpush1.xpose.msra.mxu0 0.0
    %1820 = vmatprep.subr.mxu0 0.0
    %1821 = vmatpush1.xpose.msra.mxu0 0.0
    %1822 = vmatprep.subr.mxu0 0.0
    %1823 = vmatpush1.xpose.msra.mxu0 0.0
    %1824 = vmatprep.mubr.f32.mxu0 0.0
    %1825 = vmatmul.mubr.f32.gmra.mrb[0].mxu0 %v1754
    %v1826 = vpop.f32.mrb[0].mxu0
    %v1827 = vadd.f32 0.0, %v1826
    %v1828 = vpop.f32.mrb[0].mxu0
    %1829 = vdwg.mxu0
    %v1830 = vmul.f32 %v1295, 0.35355338
    %v1831 = vmul.f32 %v1371, 0.35355338
    %v1832 = vmul.f32 %v1447, 0.35355338
    %v1833 = vmul.f32 %v1523, 0.35355338
    %v1834 = vmul.f32 %v1599, 0.35355338
    %v1835 = vmul.f32 %v1675, 0.35355338
    %v1836 = vmul.f32 %v1751, 0.35355338
    %v1837 = vmul.f32 %v1827, 0.35355338
    %vm1838 = vcmask 97280
    %v1839 = vsel %vm1838, %v1830, -inf
    %1840 = vmax.xlane.f32.xlu0 %v1839
    %v1841 = vpop.xlane.xlu0 %1840
    %v1842 = vsel %vm1838, %v1831, -inf
    %1843 = vmax.xlane.f32.xlu0 %v1842
    %v1844 = vpop.xlane.xlu0 %1843
    %v1845 = vsel %vm1838, %v1832, -inf
    %1846 = vmax.xlane.f32.xlu0 %v1845
    %v1847 = vpop.xlane.xlu0 %1846
    %v1848 = vsel %vm1838, %v1833, -inf
    %1849 = vmax.xlane.f32.xlu0 %v1848
    %v1850 = vpop.xlane.xlu0 %1849
    %v1851 = vsel %vm1838, %v1834, -inf
    %1852 = vmax.xlane.f32.xlu0 %v1851
    %v1853 = vpop.xlane.xlu0 %1852
    %v1854 = vsel %vm1838, %v1835, -inf
    %1855 = vmax.xlane.f32.xlu0 %v1854
    %v1856 = vpop.xlane.xlu0 %1855
    %v1857 = vsel %vm1838, %v1836, -inf
    %1858 = vmax.xlane.f32.xlu0 %v1857
    %v1859 = vpop.xlane.xlu0 %1858
    %v1860 = vsel %vm1838, %v1837, -inf
    %1861 = vmax.xlane.f32.xlu0 %v1860
    %v1862 = vpop.xlane.xlu0 %1861
    %v1863 = vsub.f32 %v1830, %v1841
    %v1864 = vsub.f32 %v1831, %v1844
    %v1865 = vsub.f32 %v1832, %v1847
    %v1866 = vsub.f32 %v1833, %v1850
    %v1867 = vsub.f32 %v1834, %v1853
    %v1868 = vsub.f32 %v1835, %v1856
    %v1869 = vsub.f32 %v1836, %v1859
    %v1870 = vsub.f32 %v1837, %v1862
    %v1871 = vmul.f32 %v1863, 1.442695
    %v1872 = vpow.pop %v1871
    %v1873 = vmul.f32 %v1864, 1.442695
    %v1874 = vpow.pop %v1873
    %v1875 = vmul.f32 %v1865, 1.442695
    %v1876 = vpow.pop %v1875
    %v1877 = vmul.f32 %v1866, 1.442695
    %v1878 = vpow.pop %v1877
    %v1879 = vmul.f32 %v1867, 1.442695
    %v1880 = vpow.pop %v1879
    %v1881 = vmul.f32 %v1868, 1.442695
    %v1882 = vpow.pop %v1881
    %v1883 = vmul.f32 %v1869, 1.442695
    %v1884 = vpow.pop %v1883
    %v1885 = vmul.f32 %v1870, 1.442695
    %v1886 = vpow.pop %v1885
    %v1887 = vsel %vm1838, %v1872, 0.0
    %1888 = vadd.xlane.f32.xlu0 %v1887
    %v1889 = vpop.xlane.xlu0 %1888
    %v1890 = vsel %vm1838, %v1874, 0.0
    %1891 = vadd.xlane.f32.xlu0 %v1890
    %v1892 = vpop.xlane.xlu0 %1891
    %v1893 = vsel %vm1838, %v1876, 0.0
    %1894 = vadd.xlane.f32.xlu0 %v1893
    %v1895 = vpop.xlane.xlu0 %1894
    %v1896 = vsel %vm1838, %v1878, 0.0
    %1897 = vadd.xlane.f32.xlu0 %v1896
    %v1898 = vpop.xlane.xlu0 %1897
    %v1899 = vsel %vm1838, %v1880, 0.0
    %1900 = vadd.xlane.f32.xlu0 %v1899
    %v1901 = vpop.xlane.xlu0 %1900
    %v1902 = vsel %vm1838, %v1882, 0.0
    %1903 = vadd.xlane.f32.xlu0 %v1902
    %v1904 = vpop.xlane.xlu0 %1903
    %v1905 = vsel %vm1838, %v1884, 0.0
    %1906 = vadd.xlane.f32.xlu0 %v1905
    %v1907 = vpop.xlane.xlu0 %1906
    %v1908 = vsel %vm1838, %v1886, 0.0
    %1909 = vadd.xlane.f32.xlu0 %v1908
    %v1910 = vpop.xlane.xlu0 %1909
    %v1911 = vrcp.pop %v1889
    %v1912 = vrcp.pop %v1892
    %v1913 = vrcp.pop %v1895
    %v1914 = vrcp.pop %v1898
    %v1915 = vrcp.pop %v1901
    %v1916 = vrcp.pop %v1904
    %v1917 = vrcp.pop %v1907
    %v1918 = vrcp.pop %v1910
    %v1919 = vmul.f32 %v1872, %v1911
    %v1920 = vmul.f32 %v1874, %v1912
    %v1921 = vmul.f32 %v1876, %v1913
    %v1922 = vmul.f32 %v1878, %v1914
    %v1923 = vmul.f32 %v1880, %v1915
    %v1924 = vmul.f32 %v1882, %v1916
    %v1925 = vmul.f32 %v1884, %v1917
    %v1926 = vmul.f32 %v1886, %v1918
    %1927 = vrot.lane.b32.xlu0 %v1164, 96
    %v1928 = vpop.permute.xlu0 %1927
    %1929 = vrot.lane.b32.xlu0 %v1169, 96
    %v1930 = vpop.permute.xlu0 %1929
    %v1933 = vsel %vm1838, %v1919, 0
    %v1935 = vsel %vm1206, %v1930, 0
    %1937 = vmatprep.subr.mxu0 0.0
    %1938 = vmatpush1.msra.mxu0 %v1928
    %1939 = vmatprep.subr.mxu0 0.0
    %1940 = vmatpush1.msra.mxu0 %v1935
    %1941 = vmatprep.subr.mxu0 0.0
    %1942 = vmatpush1.msra.mxu0 0.0
    %1943 = vmatprep.subr.mxu0 0.0
    %1944 = vmatpush1.msra.mxu0 0.0
    %1945 = vmatprep.subr.mxu0 0.0
    %1946 = vmatpush1.msra.mxu0 0.0
    %1947 = vmatprep.subr.mxu0 0.0
    %1948 = vmatpush1.msra.mxu0 0.0
    %1949 = vmatprep.subr.mxu0 0.0
    %1950 = vmatpush1.msra.mxu0 0.0
    %1951 = vmatprep.subr.mxu0 0.0
    %1952 = vmatpush1.msra.mxu0 0.0
    %1953 = vmatprep.subr.mxu0 0.0
    %1954 = vmatpush1.msra.mxu0 0.0
    %1955 = vmatprep.subr.mxu0 0.0
    %1956 = vmatpush1.msra.mxu0 0.0
    %1957 = vmatprep.subr.mxu0 0.0
    %1958 = vmatpush1.msra.mxu0 0.0
    %1959 = vmatprep.subr.mxu0 0.0
    %1960 = vmatpush1.msra.mxu0 0.0
    %1961 = vmatprep.subr.mxu0 0.0
    %1962 = vmatpush1.msra.mxu0 0.0
    %1963 = vmatprep.subr.mxu0 0.0
    %1964 = vmatpush1.msra.mxu0 0.0
    %1965 = vmatprep.subr.mxu0 0.0
    %1966 = vmatpush1.msra.mxu0 0.0
    %1967 = vmatprep.subr.mxu0 0.0
    %1968 = vmatpush1.msra.mxu0 0.0
    %1969 = vmatprep.subr.mxu0 0.0
    %1970 = vmatpush1.msra.mxu0 0.0
    %1971 = vmatprep.subr.mxu0 0.0
    %1972 = vmatpush1.msra.mxu0 0.0
    %1973 = vmatprep.subr.mxu0 0.0
    %1974 = vmatpush1.msra.mxu0 0.0
    %1975 = vmatprep.subr.mxu0 0.0
    %1976 = vmatpush1.msra.mxu0 0.0
    %1977 = vmatprep.subr.mxu0 0.0
    %1978 = vmatpush1.msra.mxu0 0.0
    %1979 = vmatprep.subr.mxu0 0.0
    %1980 = vmatpush1.msra.mxu0 0.0
    %1981 = vmatprep.subr.mxu0 0.0
    %1982 = vmatpush1.msra.mxu0 0.0
    %1983 = vmatprep.subr.mxu0 0.0
    %1984 = vmatpush1.msra.mxu0 0.0
    %1985 = vmatprep.subr.mxu0 0.0
    %1986 = vmatpush1.msra.mxu0 0.0
    %1987 = vmatprep.subr.mxu0 0.0
    %1988 = vmatpush1.msra.mxu0 0.0
    %1989 = vmatprep.subr.mxu0 0.0
    %1990 = vmatpush1.msra.mxu0 0.0
    %1991 = vmatprep.subr.mxu0 0.0
    %1992 = vmatpush1.msra.mxu0 0.0
    %1993 = vmatprep.subr.mxu0 0.0
    %1994 = vmatpush1.msra.mxu0 0.0
    %1995 = vmatprep.subr.mxu0 0.0
    %1996 = vmatpush1.msra.mxu0 0.0
    %1997 = vmatprep.subr.mxu0 0.0
    %1998 = vmatpush1.msra.mxu0 0.0
    %1999 = vmatprep.subr.mxu0 0.0
    %2000 = vmatpush1.msra.mxu0 0.0
    %2001 = vmatprep.mubr.f32.mxu0 0.0
    %2002 = vmatmul.mubr.f32.gmra.mrb[0].mxu0 %v1933
    %v2003 = vpop.f32.mrb[0].mxu0
    %v2004 = vadd.f32 0.0, %v2003
    %v2005 = vpop.f32.mrb[0].mxu0
    %2006 = vdwg.mxu0
    %2007 = vrot.lane.b32.xlu0 %v1194, 96
    %v2008 = vpop.permute.xlu0 %2007
    %2009 = vrot.lane.b32.xlu0 %v1196, 96
    %v2010 = vpop.permute.xlu0 %2009
    %v2013 = vsel %vm1838, %v1920, 0
    %v2015 = vsel %vm1206, %v2010, 0
    %2017 = vmatprep.subr.mxu0 0.0
    %2018 = vmatpush1.msra.mxu0 %v2008
    %2019 = vmatprep.subr.mxu0 0.0
    %2020 = vmatpush1.msra.mxu0 %v2015
    %2021 = vmatprep.subr.mxu0 0.0
    %2022 = vmatpush1.msra.mxu0 0.0
    %2023 = vmatprep.subr.mxu0 0.0
    %2024 = vmatpush1.msra.mxu0 0.0
    %2025 = vmatprep.subr.mxu0 0.0
    %2026 = vmatpush1.msra.mxu0 0.0
    %2027 = vmatprep.subr.mxu0 0.0
    %2028 = vmatpush1.msra.mxu0 0.0
    %2029 = vmatprep.subr.mxu0 0.0
    %2030 = vmatpush1.msra.mxu0 0.0
    %2031 = vmatprep.subr.mxu0 0.0
    %2032 = vmatpush1.msra.mxu0 0.0
    %2033 = vmatprep.subr.mxu0 0.0
    %2034 = vmatpush1.msra.mxu0 0.0
    %2035 = vmatprep.subr.mxu0 0.0
    %2036 = vmatpush1.msra.mxu0 0.0
    %2037 = vmatprep.subr.mxu0 0.0
    %2038 = vmatpush1.msra.mxu0 0.0
    %2039 = vmatprep.subr.mxu0 0.0
    %2040 = vmatpush1.msra.mxu0 0.0
    %2041 = vmatprep.subr.mxu0 0.0
    %2042 = vmatpush1.msra.mxu0 0.0
    %2043 = vmatprep.subr.mxu0 0.0
    %2044 = vmatpush1.msra.mxu0 0.0
    %2045 = vmatprep.subr.mxu0 0.0
    %2046 = vmatpush1.msra.mxu0 0.0
    %2047 = vmatprep.subr.mxu0 0.0
    %2048 = vmatpush1.msra.mxu0 0.0
    %2049 = vmatprep.subr.mxu0 0.0
    %2050 = vmatpush1.msra.mxu0 0.0
    %2051 = vmatprep.subr.mxu0 0.0
    %2052 = vmatpush1.msra.mxu0 0.0
    %2053 = vmatprep.subr.mxu0 0.0
    %2054 = vmatpush1.msra.mxu0 0.0
    %2055 = vmatprep.subr.mxu0 0.0
    %2056 = vmatpush1.msra.mxu0 0.0
    %2057 = vmatprep.subr.mxu0 0.0
    %2058 = vmatpush1.msra.mxu0 0.0
    %2059 = vmatprep.subr.mxu0 0.0
    %2060 = vmatpush1.msra.mxu0 0.0
    %2061 = vmatprep.subr.mxu0 0.0
    %2062 = vmatpush1.msra.mxu0 0.0
    %2063 = vmatprep.subr.mxu0 0.0
    %2064 = vmatpush1.msra.mxu0 0.0
    %2065 = vmatprep.subr.mxu0 0.0
    %2066 = vmatpush1.msra.mxu0 0.0
    %2067 = vmatprep.subr.mxu0 0.0
    %2068 = vmatpush1.msra.mxu0 0.0
    %2069 = vmatprep.subr.mxu0 0.0
    %2070 = vmatpush1.msra.mxu0 0.0
    %2071 = vmatprep.subr.mxu0 0.0
    %2072 = vmatpush1.msra.mxu0 0.0
    %2073 = vmatprep.subr.mxu0 0.0
    %2074 = vmatpush1.msra.mxu0 0.0
    %2075 = vmatprep.subr.mxu0 0.0
    %2076 = vmatpush1.msra.mxu0 0.0
    %2077 = vmatprep.subr.mxu0 0.0
    %2078 = vmatpush1.msra.mxu0 0.0
    %2079 = vmatprep.subr.mxu0 0.0
    %2080 = vmatpush1.msra.mxu0 0.0
    %2081 = vmatprep.mubr.f32.mxu0 0.0
    %2082 = vmatmul.mubr.f32.gmra.mrb[0].mxu0 %v2013
    %v2083 = vpop.f32.mrb[0].mxu0
    %v2084 = vadd.f32 0.0, %v2083
    %v2085 = vpop.f32.mrb[0].mxu0
    %2086 = vdwg.mxu0
    %2087 = vrot.lane.b32.xlu0 %v1198, 96
    %v2088 = vpop.permute.xlu0 %2087
    %2089 = vrot.lane.b32.xlu0 %v1200, 96
    %v2090 = vpop.permute.xlu0 %2089
    %v2093 = vsel %vm1838, %v1921, 0
    %v2095 = vsel %vm1206, %v2090, 0
    %2097 = vmatprep.subr.mxu0 0.0
    %2098 = vmatpush1.msra.mxu0 %v2088
    %2099 = vmatprep.subr.mxu0 0.0
    %2100 = vmatpush1.msra.mxu0 %v2095
    %2101 = vmatprep.subr.mxu0 0.0
    %2102 = vmatpush1.msra.mxu0 0.0
    %2103 = vmatprep.subr.mxu0 0.0
    %2104 = vmatpush1.msra.mxu0 0.0
    %2105 = vmatprep.subr.mxu0 0.0
    %2106 = vmatpush1.msra.mxu0 0.0
    %2107 = vmatprep.subr.mxu0 0.0
    %2108 = vmatpush1.msra.mxu0 0.0
    %2109 = vmatprep.subr.mxu0 0.0
    %2110 = vmatpush1.msra.mxu0 0.0
    %2111 = vmatprep.subr.mxu0 0.0
    %2112 = vmatpush1.msra.mxu0 0.0
    %2113 = vmatprep.subr.mxu0 0.0
    %2114 = vmatpush1.msra.mxu0 0.0
    %2115 = vmatprep.subr.mxu0 0.0
    %2116 = vmatpush1.msra.mxu0 0.0
    %2117 = vmatprep.subr.mxu0 0.0
    %2118 = vmatpush1.msra.mxu0 0.0
    %2119 = vmatprep.subr.mxu0 0.0
    %2120 = vmatpush1.msra.mxu0 0.0
    %2121 = vmatprep.subr.mxu0 0.0
    %2122 = vmatpush1.msra.mxu0 0.0
    %2123 = vmatprep.subr.mxu0 0.0
    %2124 = vmatpush1.msra.mxu0 0.0
    %2125 = vmatprep.subr.mxu0 0.0
    %2126 = vmatpush1.msra.mxu0 0.0
    %2127 = vmatprep.subr.mxu0 0.0
    %2128 = vmatpush1.msra.mxu0 0.0
    %2129 = vmatprep.subr.mxu0 0.0
    %2130 = vmatpush1.msra.mxu0 0.0
    %2131 = vmatprep.subr.mxu0 0.0
    %2132 = vmatpush1.msra.mxu0 0.0
    %2133 = vmatprep.subr.mxu0 0.0
    %2134 = vmatpush1.msra.mxu0 0.0
    %2135 = vmatprep.subr.mxu0 0.0
    %2136 = vmatpush1.msra.mxu0 0.0
    %2137 = vmatprep.subr.mxu0 0.0
    %2138 = vmatpush1.msra.mxu0 0.0
    %2139 = vmatprep.subr.mxu0 0.0
    %2140 = vmatpush1.msra.mxu0 0.0
    %2141 = vmatprep.subr.mxu0 0.0
    %2142 = vmatpush1.msra.mxu0 0.0
    %2143 = vmatprep.subr.mxu0 0.0
    %2144 = vmatpush1.msra.mxu0 0.0
    %2145 = vmatprep.subr.mxu0 0.0
    %2146 = vmatpush1.msra.mxu0 0.0
    %2147 = vmatprep.subr.mxu0 0.0
    %2148 = vmatpush1.msra.mxu0 0.0
    %2149 = vmatprep.subr.mxu0 0.0
    %2150 = vmatpush1.msra.mxu0 0.0
    %2151 = vmatprep.subr.mxu0 0.0
    %2152 = vmatpush1.msra.mxu0 0.0
    %2153 = vmatprep.subr.mxu0 0.0
    %2154 = vmatpush1.msra.mxu0 0.0
    %2155 = vmatprep.subr.mxu0 0.0
    %2156 = vmatpush1.msra.mxu0 0.0
    %2157 = vmatprep.subr.mxu0 0.0
    %2158 = vmatpush1.msra.mxu0 0.0
    %2159 = vmatprep.subr.mxu0 0.0
    %2160 = vmatpush1.msra.mxu0 0.0
    %2161 = vmatprep.mubr.f32.mxu0 0.0
    %2162 = vmatmul.mubr.f32.gmra.mrb[0].mxu0 %v2093
    %v2163 = vpop.f32.mrb[0].mxu0
    %v2164 = vadd.f32 0.0, %v2163
    %v2165 = vpop.f32.mrb[0].mxu0
    %2166 = vdwg.mxu0
    %2167 = vrot.lane.b32.xlu0 %v1202, 96
    %v2168 = vpop.permute.xlu0 %2167
    %2169 = vrot.lane.b32.xlu0 %v1204, 96
    %v2170 = vpop.permute.xlu0 %2169
    %v2173 = vsel %vm1838, %v1922, 0
    %v2175 = vsel %vm1206, %v2170, 0
    %2177 = vmatprep.subr.mxu0 0.0
    %2178 = vmatpush1.msra.mxu0 %v2168
    %2179 = vmatprep.subr.mxu0 0.0
    %2180 = vmatpush1.msra.mxu0 %v2175
    %2181 = vmatprep.subr.mxu0 0.0
    %2182 = vmatpush1.msra.mxu0 0.0
    %2183 = vmatprep.subr.mxu0 0.0
    %2184 = vmatpush1.msra.mxu0 0.0
    %2185 = vmatprep.subr.mxu0 0.0
    %2186 = vmatpush1.msra.mxu0 0.0
    %2187 = vmatprep.subr.mxu0 0.0
    %2188 = vmatpush1.msra.mxu0 0.0
    %2189 = vmatprep.subr.mxu0 0.0
    %2190 = vmatpush1.msra.mxu0 0.0
    %2191 = vmatprep.subr.mxu0 0.0
    %2192 = vmatpush1.msra.mxu0 0.0
    %2193 = vmatprep.subr.mxu0 0.0
    %2194 = vmatpush1.msra.mxu0 0.0
    %2195 = vmatprep.subr.mxu0 0.0
    %2196 = vmatpush1.msra.mxu0 0.0
    %2197 = vmatprep.subr.mxu0 0.0
    %2198 = vmatpush1.msra.mxu0 0.0
    %2199 = vmatprep.subr.mxu0 0.0
    %2200 = vmatpush1.msra.mxu0 0.0
    %2201 = vmatprep.subr.mxu0 0.0
    %2202 = vmatpush1.msra.mxu0 0.0
    %2203 = vmatprep.subr.mxu0 0.0
    %2204 = vmatpush1.msra.mxu0 0.0
    %2205 = vmatprep.subr.mxu0 0.0
    %2206 = vmatpush1.msra.mxu0 0.0
    %2207 = vmatprep.subr.mxu0 0.0
    %2208 = vmatpush1.msra.mxu0 0.0
    %2209 = vmatprep.subr.mxu0 0.0
    %2210 = vmatpush1.msra.mxu0 0.0
    %2211 = vmatprep.subr.mxu0 0.0
    %2212 = vmatpush1.msra.mxu0 0.0
    %2213 = vmatprep.subr.mxu0 0.0
    %2214 = vmatpush1.msra.mxu0 0.0
    %2215 = vmatprep.subr.mxu0 0.0
    %2216 = vmatpush1.msra.mxu0 0.0
    %2217 = vmatprep.subr.mxu0 0.0
    %2218 = vmatpush1.msra.mxu0 0.0
    %2219 = vmatprep.subr.mxu0 0.0
    %2220 = vmatpush1.msra.mxu0 0.0
    %2221 = vmatprep.subr.mxu0 0.0
    %2222 = vmatpush1.msra.mxu0 0.0
    %2223 = vmatprep.subr.mxu0 0.0
    %2224 = vmatpush1.msra.mxu0 0.0
    %2225 = vmatprep.subr.mxu0 0.0
    %2226 = vmatpush1.msra.mxu0 0.0
    %2227 = vmatprep.subr.mxu0 0.0
    %2228 = vmatpush1.msra.mxu0 0.0
    %2229 = vmatprep.subr.mxu0 0.0
    %2230 = vmatpush1.msra.mxu0 0.0
    %2231 = vmatprep.subr.mxu0 0.0
    %2232 = vmatpush1.msra.mxu0 0.0
    %2233 = vmatprep.subr.mxu0 0.0
    %2234 = vmatpush1.msra.mxu0 0.0
    %2235 = vmatprep.subr.mxu0 0.0
    %2236 = vmatpush1.msra.mxu0 0.0
    %2237 = vmatprep.subr.mxu0 0.0
    %2238 = vmatpush1.msra.mxu0 0.0
    %2239 = vmatprep.subr.mxu0 0.0
    %2240 = vmatpush1.msra.mxu0 0.0
    %2241 = vmatprep.mubr.f32.mxu0 0.0
    %2242 = vmatmul.mubr.f32.gmra.mrb[0].mxu0 %v2173
    %v2243 = vpop.f32.mrb[0].mxu0
    %v2244 = vadd.f32 0.0, %v2243
    %v2245 = vpop.f32.mrb[0].mxu0
    %2246 = vdwg.mxu0
    %2247 = vrot.lane.b32.xlu0 %v1209, 96
    %v2248 = vpop.permute.xlu0 %2247
    %2249 = vrot.lane.b32.xlu0 %v1208, 96
    %v2250 = vpop.permute.xlu0 %2249
    %v2253 = vsel %vm1838, %v1923, 0
    %v2255 = vsel %vm1206, %v2250, 0
    %2257 = vmatprep.subr.mxu0 0.0
    %2258 = vmatpush1.msra.mxu0 %v2248
    %2259 = vmatprep.subr.mxu0 0.0
    %2260 = vmatpush1.msra.mxu0 %v2255
    %2261 = vmatprep.subr.mxu0 0.0
    %2262 = vmatpush1.msra.mxu0 0.0
    %2263 = vmatprep.subr.mxu0 0.0
    %2264 = vmatpush1.msra.mxu0 0.0
    %2265 = vmatprep.subr.mxu0 0.0
    %2266 = vmatpush1.msra.mxu0 0.0
    %2267 = vmatprep.subr.mxu0 0.0
    %2268 = vmatpush1.msra.mxu0 0.0
    %2269 = vmatprep.subr.mxu0 0.0
    %2270 = vmatpush1.msra.mxu0 0.0
    %2271 = vmatprep.subr.mxu0 0.0
    %2272 = vmatpush1.msra.mxu0 0.0
    %2273 = vmatprep.subr.mxu0 0.0
    %2274 = vmatpush1.msra.mxu0 0.0
    %2275 = vmatprep.subr.mxu0 0.0
    %2276 = vmatpush1.msra.mxu0 0.0
    %2277 = vmatprep.subr.mxu0 0.0
    %2278 = vmatpush1.msra.mxu0 0.0
    %2279 = vmatprep.subr.mxu0 0.0
    %2280 = vmatpush1.msra.mxu0 0.0
    %2281 = vmatprep.subr.mxu0 0.0
    %2282 = vmatpush1.msra.mxu0 0.0
    %2283 = vmatprep.subr.mxu0 0.0
    %2284 = vmatpush1.msra.mxu0 0.0
    %2285 = vmatprep.subr.mxu0 0.0
    %2286 = vmatpush1.msra.mxu0 0.0
    %2287 = vmatprep.subr.mxu0 0.0
    %2288 = vmatpush1.msra.mxu0 0.0
    %2289 = vmatprep.subr.mxu0 0.0
    %2290 = vmatpush1.msra.mxu0 0.0
    %2291 = vmatprep.subr.mxu0 0.0
    %2292 = vmatpush1.msra.mxu0 0.0
    %2293 = vmatprep.subr.mxu0 0.0
    %2294 = vmatpush1.msra.mxu0 0.0
    %2295 = vmatprep.subr.mxu0 0.0
    %2296 = vmatpush1.msra.mxu0 0.0
    %2297 = vmatprep.subr.mxu0 0.0
    %2298 = vmatpush1.msra.mxu0 0.0
    %2299 = vmatprep.subr.mxu0 0.0
    %2300 = vmatpush1.msra.mxu0 0.0
    %2301 = vmatprep.subr.mxu0 0.0
    %2302 = vmatpush1.msra.mxu0 0.0
    %2303 = vmatprep.subr.mxu0 0.0
    %2304 = vmatpush1.msra.mxu0 0.0
    %2305 = vmatprep.subr.mxu0 0.0
    %2306 = vmatpush1.msra.mxu0 0.0
    %2307 = vmatprep.subr.mxu0 0.0
    %2308 = vmatpush1.msra.mxu0 0.0
    %2309 = vmatprep.subr.mxu0 0.0
    %2310 = vmatpush1.msra.mxu0 0.0
    %2311 = vmatprep.subr.mxu0 0.0
    %2312 = vmatpush1.msra.mxu0 0.0
    %2313 = vmatprep.subr.mxu0 0.0
    %2314 = vmatpush1.msra.mxu0 0.0
    %2315 = vmatprep.subr.mxu0 0.0
    %2316 = vmatpush1.msra.mxu0 0.0
    %2317 = vmatprep.subr.mxu0 0.0
    %2318 = vmatpush1.msra.mxu0 0.0
    %2319 = vmatprep.subr.mxu0 0.0
    %2320 = vmatpush1.msra.mxu0 0.0
    %2321 = vmatprep.mubr.f32.mxu0 0.0
    %2322 = vmatmul.mubr.f32.gmra.mrb[0].mxu0 %v2253
    %v2323 = vpop.f32.mrb[0].mxu0
    %v2324 = vadd.f32 0.0, %v2323
    %v2325 = vpop.f32.mrb[0].mxu0
    %2326 = vdwg.mxu0
    %2327 = vrot.lane.b32.xlu0 %v1211, 96
    %v2328 = vpop.permute.xlu0 %2327
    %2329 = vrot.lane.b32.xlu0 %v1213, 96
    %v2330 = vpop.permute.xlu0 %2329
    %v2333 = vsel %vm1838, %v1924, 0
    %v2335 = vsel %vm1206, %v2330, 0
    %2337 = vmatprep.subr.mxu0 0.0
    %2338 = vmatpush1.msra.mxu0 %v2328
    %2339 = vmatprep.subr.mxu0 0.0
    %2340 = vmatpush1.msra.mxu0 %v2335
    %2341 = vmatprep.subr.mxu0 0.0
    %2342 = vmatpush1.msra.mxu0 0.0
    %2343 = vmatprep.subr.mxu0 0.0
    %2344 = vmatpush1.msra.mxu0 0.0
    %2345 = vmatprep.subr.mxu0 0.0
    %2346 = vmatpush1.msra.mxu0 0.0
    %2347 = vmatprep.subr.mxu0 0.0
    %2348 = vmatpush1.msra.mxu0 0.0
    %2349 = vmatprep.subr.mxu0 0.0
    %2350 = vmatpush1.msra.mxu0 0.0
    %2351 = vmatprep.subr.mxu0 0.0
    %2352 = vmatpush1.msra.mxu0 0.0
    %2353 = vmatprep.subr.mxu0 0.0
    %2354 = vmatpush1.msra.mxu0 0.0
    %2355 = vmatprep.subr.mxu0 0.0
    %2356 = vmatpush1.msra.mxu0 0.0
    %2357 = vmatprep.subr.mxu0 0.0
    %2358 = vmatpush1.msra.mxu0 0.0
    %2359 = vmatprep.subr.mxu0 0.0
    %2360 = vmatpush1.msra.mxu0 0.0
    %2361 = vmatprep.subr.mxu0 0.0
    %2362 = vmatpush1.msra.mxu0 0.0
    %2363 = vmatprep.subr.mxu0 0.0
    %2364 = vmatpush1.msra.mxu0 0.0
    %2365 = vmatprep.subr.mxu0 0.0
    %2366 = vmatpush1.msra.mxu0 0.0
    %2367 = vmatprep.subr.mxu0 0.0
    %2368 = vmatpush1.msra.mxu0 0.0
    %2369 = vmatprep.subr.mxu0 0.0
    %2370 = vmatpush1.msra.mxu0 0.0
    %2371 = vmatprep.subr.mxu0 0.0
    %2372 = vmatpush1.msra.mxu0 0.0
    %2373 = vmatprep.subr.mxu0 0.0
    %2374 = vmatpush1.msra.mxu0 0.0
    %2375 = vmatprep.subr.mxu0 0.0
    %2376 = vmatpush1.msra.mxu0 0.0
    %2377 = vmatprep.subr.mxu0 0.0
    %2378 = vmatpush1.msra.mxu0 0.0
    %2379 = vmatprep.subr.mxu0 0.0
    %2380 = vmatpush1.msra.mxu0 0.0
    %2381 = vmatprep.subr.mxu0 0.0
    %2382 = vmatpush1.msra.mxu0 0.0
    %2383 = vmatprep.subr.mxu0 0.0
    %2384 = vmatpush1.msra.mxu0 0.0
    %2385 = vmatprep.subr.mxu0 0.0
    %2386 = vmatpush1.msra.mxu0 0.0
    %2387 = vmatprep.subr.mxu0 0.0
    %2388 = vmatpush1.msra.mxu0 0.0
    %2389 = vmatprep.subr.mxu0 0.0
    %2390 = vmatpush1.msra.mxu0 0.0
    %2391 = vmatprep.subr.mxu0 0.0
    %2392 = vmatpush1.msra.mxu0 0.0
    %2393 = vmatprep.subr.mxu0 0.0
    %2394 = vmatpush1.msra.mxu0 0.0
    %2395 = vmatprep.subr.mxu0 0.0
    %2396 = vmatpush1.msra.mxu0 0.0
    %2397 = vmatprep.subr.mxu0 0.0
    %2398 = vmatpush1.msra.mxu0 0.0
    %2399 = vmatprep.subr.mxu0 0.0
    %2400 = vmatpush1.msra.mxu0 0.0
    %2401 = vmatprep.mubr.f32.mxu0 0.0
    %2402 = vmatmul.mubr.f32.gmra.mrb[0].mxu0 %v2333
    %v2403 = vpop.f32.mrb[0].mxu0
    %v2404 = vadd.f32 0.0, %v2403
    %v2405 = vpop.f32.mrb[0].mxu0
    %2406 = vdwg.mxu0
    %2407 = vrot.lane.b32.xlu0 %v1215, 96
    %v2408 = vpop.permute.xlu0 %2407
    %2409 = vrot.lane.b32.xlu0 %v1217, 96
    %v2410 = vpop.permute.xlu0 %2409
    %v2413 = vsel %vm1838, %v1925, 0
    %v2415 = vsel %vm1206, %v2410, 0
    %2417 = vmatprep.subr.mxu0 0.0
    %2418 = vmatpush1.msra.mxu0 %v2408
    %2419 = vmatprep.subr.mxu0 0.0
    %2420 = vmatpush1.msra.mxu0 %v2415
    %2421 = vmatprep.subr.mxu0 0.0
    %2422 = vmatpush1.msra.mxu0 0.0
    %2423 = vmatprep.subr.mxu0 0.0
    %2424 = vmatpush1.msra.mxu0 0.0
    %2425 = vmatprep.subr.mxu0 0.0
    %2426 = vmatpush1.msra.mxu0 0.0
    %2427 = vmatprep.subr.mxu0 0.0
    %2428 = vmatpush1.msra.mxu0 0.0
    %2429 = vmatprep.subr.mxu0 0.0
    %2430 = vmatpush1.msra.mxu0 0.0
    %2431 = vmatprep.subr.mxu0 0.0
    %2432 = vmatpush1.msra.mxu0 0.0
    %2433 = vmatprep.subr.mxu0 0.0
    %2434 = vmatpush1.msra.mxu0 0.0
    %2435 = vmatprep.subr.mxu0 0.0
    %2436 = vmatpush1.msra.mxu0 0.0
    %2437 = vmatprep.subr.mxu0 0.0
    %2438 = vmatpush1.msra.mxu0 0.0
    %2439 = vmatprep.subr.mxu0 0.0
    %2440 = vmatpush1.msra.mxu0 0.0
    %2441 = vmatprep.subr.mxu0 0.0
    %2442 = vmatpush1.msra.mxu0 0.0
    %2443 = vmatprep.subr.mxu0 0.0
    %2444 = vmatpush1.msra.mxu0 0.0
    %2445 = vmatprep.subr.mxu0 0.0
    %2446 = vmatpush1.msra.mxu0 0.0
    %2447 = vmatprep.subr.mxu0 0.0
    %2448 = vmatpush1.msra.mxu0 0.0
    %2449 = vmatprep.subr.mxu0 0.0
    %2450 = vmatpush1.msra.mxu0 0.0
    %2451 = vmatprep.subr.mxu0 0.0
    %2452 = vmatpush1.msra.mxu0 0.0
    %2453 = vmatprep.subr.mxu0 0.0
    %2454 = vmatpush1.msra.mxu0 0.0
    %2455 = vmatprep.subr.mxu0 0.0
    %2456 = vmatpush1.msra.mxu0 0.0
    %2457 = vmatprep.subr.mxu0 0.0
    %2458 = vmatpush1.msra.mxu0 0.0
    %2459 = vmatprep.subr.mxu0 0.0
    %2460 = vmatpush1.msra.mxu0 0.0
    %2461 = vmatprep.subr.mxu0 0.0
    %2462 = vmatpush1.msra.mxu0 0.0
    %2463 = vmatprep.subr.mxu0 0.0
    %2464 = vmatpush1.msra.mxu0 0.0
    %2465 = vmatprep.subr.mxu0 0.0
    %2466 = vmatpush1.msra.mxu0 0.0
    %2467 = vmatprep.subr.mxu0 0.0
    %2468 = vmatpush1.msra.mxu0 0.0
    %2469 = vmatprep.subr.mxu0 0.0
    %2470 = vmatpush1.msra.mxu0 0.0
    %2471 = vmatprep.subr.mxu0 0.0
    %2472 = vmatpush1.msra.mxu0 0.0
    %2473 = vmatprep.subr.mxu0 0.0
    %2474 = vmatpush1.msra.mxu0 0.0
    %2475 = vmatprep.subr.mxu0 0.0
    %2476 = vmatpush1.msra.mxu0 0.0
    %2477 = vmatprep.subr.mxu0 0.0
    %2478 = vmatpush1.msra.mxu0 0.0
    %2479 = vmatprep.subr.mxu0 0.0
    %2480 = vmatpush1.msra.mxu0 0.0
    %2481 = vmatprep.mubr.f32.mxu0 0.0
    %2482 = vmatmul.mubr.f32.gmra.mrb[0].mxu0 %v2413
    %v2483 = vpop.f32.mrb[0].mxu0
    %v2484 = vadd.f32 0.0, %v2483
    %v2485 = vpop.f32.mrb[0].mxu0
    %2486 = vdwg.mxu0
    %2487 = vrot.lane.b32.xlu0 %v1219, 96
    %v2488 = vpop.permute.xlu0 %2487
    %2489 = vrot.lane.b32.xlu0 %v1221, 96
    %v2490 = vpop.permute.xlu0 %2489
    %v2493 = vsel %vm1838, %v1926, 0
    %v2495 = vsel %vm1206, %v2490, 0
    %2497 = vmatprep.subr.mxu0 0.0
    %2498 = vmatpush1.msra.mxu0 %v2488
    %2499 = vmatprep.subr.mxu0 0.0
    %2500 = vmatpush1.msra.mxu0 %v2495
    %2501 = vmatprep.subr.mxu0 0.0
    %2502 = vmatpush1.msra.mxu0 0.0
    %2503 = vmatprep.subr.mxu0 0.0
    %2504 = vmatpush1.msra.mxu0 0.0
    %2505 = vmatprep.subr.mxu0 0.0
    %2506 = vmatpush1.msra.mxu0 0.0
    %2507 = vmatprep.subr.mxu0 0.0
    %2508 = vmatpush1.msra.mxu0 0.0
    %2509 = vmatprep.subr.mxu0 0.0
    %2510 = vmatpush1.msra.mxu0 0.0
    %2511 = vmatprep.subr.mxu0 0.0
    %2512 = vmatpush1.msra.mxu0 0.0
    %2513 = vmatprep.subr.mxu0 0.0
    %2514 = vmatpush1.msra.mxu0 0.0
    %2515 = vmatprep.subr.mxu0 0.0
    %2516 = vmatpush1.msra.mxu0 0.0
    %2517 = vmatprep.subr.mxu0 0.0
    %2518 = vmatpush1.msra.mxu0 0.0
    %2519 = vmatprep.subr.mxu0 0.0
    %2520 = vmatpush1.msra.mxu0 0.0
    %2521 = vmatprep.subr.mxu0 0.0
    %2522 = vmatpush1.msra.mxu0 0.0
    %2523 = vmatprep.subr.mxu0 0.0
    %2524 = vmatpush1.msra.mxu0 0.0
    %2525 = vmatprep.subr.mxu0 0.0
    %2526 = vmatpush1.msra.mxu0 0.0
    %2527 = vmatprep.subr.mxu0 0.0
    %2528 = vmatpush1.msra.mxu0 0.0
    %2529 = vmatprep.subr.mxu0 0.0
    %2530 = vmatpush1.msra.mxu0 0.0
    %2531 = vmatprep.subr.mxu0 0.0
    %2532 = vmatpush1.msra.mxu0 0.0
    %2533 = vmatprep.subr.mxu0 0.0
    %2534 = vmatpush1.msra.mxu0 0.0
    %2535 = vmatprep.subr.mxu0 0.0
    %2536 = vmatpush1.msra.mxu0 0.0
    %2537 = vmatprep.subr.mxu0 0.0
    %2538 = vmatpush1.msra.mxu0 0.0
    %2539 = vmatprep.subr.mxu0 0.0
    %2540 = vmatpush1.msra.mxu0 0.0
    %2541 = vmatprep.subr.mxu0 0.0
    %2542 = vmatpush1.msra.mxu0 0.0
    %2543 = vmatprep.subr.mxu0 0.0
    %2544 = vmatpush1.msra.mxu0 0.0
    %2545 = vmatprep.subr.mxu0 0.0
    %2546 = vmatpush1.msra.mxu0 0.0
    %2547 = vmatprep.subr.mxu0 0.0
    %2548 = vmatpush1.msra.mxu0 0.0
    %2549 = vmatprep.subr.mxu0 0.0
    %2550 = vmatpush1.msra.mxu0 0.0
    %2551 = vmatprep.subr.mxu0 0.0
    %2552 = vmatpush1.msra.mxu0 0.0
    %2553 = vmatprep.subr.mxu0 0.0
    %2554 = vmatpush1.msra.mxu0 0.0
    %2555 = vmatprep.subr.mxu0 0.0
    %2556 = vmatpush1.msra.mxu0 0.0
    %2557 = vmatprep.subr.mxu0 0.0
    %2558 = vmatpush1.msra.mxu0 0.0
    %2559 = vmatprep.subr.mxu0 0.0
    %2560 = vmatpush1.msra.mxu0 0.0
    %2561 = vmatprep.mubr.f32.mxu0 0.0
    %2562 = vmatmul.mubr.f32.gmra.mrb[0].mxu0 %v2493
    %v2563 = vpop.f32.mrb[0].mxu0
    %v2564 = vadd.f32 0.0, %v2563
    %v2565 = vpop.f32.mrb[0].mxu0
    %2566 = vdwg.mxu0
    %2568 = vrot.lane.b32.xlu0 %v2084, 8
    %v2569 = vpop.permute.xlu0 %2568
    %2572 = vrot.lane.b32.xlu0 %v2164, 16
    %v2573 = vpop.permute.xlu0 %2572
    %2576 = vrot.lane.b32.xlu0 %v2244, 24
    %v2577 = vpop.permute.xlu0 %2576
    %v2579 = vsel %vm167, %v2004, %v2569
    %v2580 = vsel %vm846, %v2579, %v2573
    %v2581 = vsel %vm848, %v2580, %v2577
    %2583 = vrot.lane.b32.xlu0 %v2404, 8
    %v2584 = vpop.permute.xlu0 %2583
    %2587 = vrot.lane.b32.xlu0 %v2484, 16
    %v2588 = vpop.permute.xlu0 %2587
    %2591 = vrot.lane.b32.xlu0 %v2564, 24
    %v2592 = vpop.permute.xlu0 %2591
    %v2594 = vsel %vm167, %v2324, %v2584
    %v2595 = vsel %vm846, %v2594, %v2588
    %v2596 = vsel %vm848, %v2595, %v2592
    %v2597 = vlaneseq
    %v2598 = vshrl.u32 %v2597, 7
    %v2599 = vsub.s32 2, %v2598
    %v2600 = vrot.slane %v34, %v2599
    %2601 = vrot.lane.b32.xlu0 %v22, 32
    %v2602 = vpop.permute.xlu0 %2601
    %2603 = vrot.lane.b32.xlu0 %v25, 32
    %v2604 = vpop.permute.xlu0 %2603
    %2605 = vrot.lane.b32.xlu0 %v28, 32
    %v2606 = vpop.permute.xlu0 %2605
    %2607 = vrot.lane.b32.xlu0 %v31, 32
    %v2608 = vpop.permute.xlu0 %2607
    %v2614 = vsel %vm56, %v2581, 0
    %v2617 = vsel %vm56, %v2596, 0
    %2619 = vmatprep.subr.mxu0 0.0
    %2620 = vmatpush1.msra.mxu0 %v2602
    %2621 = vmatprep.subr.mxu0 0.0
    %2622 = vmatpush1.msra.mxu0 %v2604
    %2623 = vmatprep.subr.mxu0 0.0
    %2624 = vmatpush1.msra.mxu0 %v2606
    %2625 = vmatprep.subr.mxu0 0.0
    %2626 = vmatpush1.msra.mxu0 %v2608
    %2627 = vmatprep.subr.mxu0 0.0
    %2628 = vmatpush1.msra.mxu0 0.0
    %2629 = vmatprep.subr.mxu0 0.0
    %2630 = vmatpush1.msra.mxu0 0.0
    %2631 = vmatprep.subr.mxu0 0.0
    %2632 = vmatpush1.msra.mxu0 0.0
    %2633 = vmatprep.subr.mxu0 0.0
    %2634 = vmatpush1.msra.mxu0 0.0
    %2635 = vmatprep.subr.mxu0 0.0
    %2636 = vmatpush1.msra.mxu0 0.0
    %2637 = vmatprep.subr.mxu0 0.0
    %2638 = vmatpush1.msra.mxu0 0.0
    %2639 = vmatprep.subr.mxu0 0.0
    %2640 = vmatpush1.msra.mxu0 0.0
    %2641 = vmatprep.subr.mxu0 0.0
    %2642 = vmatpush1.msra.mxu0 0.0
    %2643 = vmatprep.subr.mxu0 0.0
    %2644 = vmatpush1.msra.mxu0 0.0
    %2645 = vmatprep.subr.mxu0 0.0
    %2646 = vmatpush1.msra.mxu0 0.0
    %2647 = vmatprep.subr.mxu0 0.0
    %2648 = vmatpush1.msra.mxu0 0.0
    %2649 = vmatprep.subr.mxu0 0.0
    %2650 = vmatpush1.msra.mxu0 0.0
    %2651 = vmatprep.subr.mxu0 0.0
    %2652 = vmatpush1.msra.mxu0 0.0
    %2653 = vmatprep.subr.mxu0 0.0
    %2654 = vmatpush1.msra.mxu0 0.0
    %2655 = vmatprep.subr.mxu0 0.0
    %2656 = vmatpush1.msra.mxu0 0.0
    %2657 = vmatprep.subr.mxu0 0.0
    %2658 = vmatpush1.msra.mxu0 0.0
    %2659 = vmatprep.subr.mxu0 0.0
    %2660 = vmatpush1.msra.mxu0 0.0
    %2661 = vmatprep.subr.mxu0 0.0
    %2662 = vmatpush1.msra.mxu0 0.0
    %2663 = vmatprep.subr.mxu0 0.0
    %2664 = vmatpush1.msra.mxu0 0.0
    %2665 = vmatprep.subr.mxu0 0.0
    %2666 = vmatpush1.msra.mxu0 0.0
    %2667 = vmatprep.subr.mxu0 0.0
    %2668 = vmatpush1.msra.mxu0 0.0
    %2669 = vmatprep.subr.mxu0 0.0
    %2670 = vmatpush1.msra.mxu0 0.0
    %2671 = vmatprep.subr.mxu0 0.0
    %2672 = vmatpush1.msra.mxu0 0.0
    %2673 = vmatprep.subr.mxu0 0.0
    %2674 = vmatpush1.msra.mxu0 0.0
    %2675 = vmatprep.subr.mxu0 0.0
    %2676 = vmatpush1.msra.mxu0 0.0
    %2677 = vmatprep.subr.mxu0 0.0
    %2678 = vmatpush1.msra.mxu0 0.0
    %2679 = vmatprep.subr.mxu0 0.0
    %2680 = vmatpush1.msra.mxu0 0.0
    %2681 = vmatprep.subr.mxu0 0.0
    %2682 = vmatpush1.msra.mxu0 0.0
    %2683 = vmatprep.mubr.f32.mxu0 0.0
    %2684 = vmatmul.mubr.f32.gmra.mrb[0].mxu0 %v2614
    %v2685 = vpop.f32.mrb[0].mxu0
    %v2686 = vadd.f32 %v2600, %v2685
    %v2687 = vpop.f32.mrb[0].mxu0
    %2688 = vmatprep.mubr.f32.mxu0 0.0
    %2689 = vmatmul.mubr.f32.gmra.mrb[0].mxu0 %v2617
    %v2690 = vpop.f32.mrb[0].mxu0
    %v2691 = vadd.f32 %v2600, %v2690
    %v2692 = vpop.f32.mrb[0].mxu0
    %2693 = vdwg.mxu0
    %v2694 = vadd.f32 %v2686, %v943
    %v2695 = vadd.f32 %v2691, %v944
    %v2696 = vsel %vm56, %v2694, 0.0
    %2697 = vadd.xlane.f32.xlu0 %v2696
    %v2698 = vpop.xlane.xlu0 %2697
    %v2699 = vsel %vm56, %v2695, 0.0
    %2700 = vadd.xlane.f32.xlu0 %v2699
    %v2701 = vpop.xlane.xlu0 %2700
    %v2702 = vmul.f32 %v2698, %v60
    %v2703 = vmul.f32 %v2701, %v60
    %v2704 = vsub.f32 %v2694, %v2702
    %v2705 = vsub.f32 %v2695, %v2703
    %v2706 = vmul.f32 %v2704, %v2704
    %v2707 = vmul.f32 %v2705, %v2705
    %v2708 = vsel %vm56, %v2706, 0.0
    %2709 = vadd.xlane.f32.xlu0 %v2708
    %v2710 = vpop.xlane.xlu0 %2709
    %v2711 = vsel %vm56, %v2707, 0.0
    %2712 = vadd.xlane.f32.xlu0 %v2711
    %v2713 = vpop.xlane.xlu0 %2712
    %v2714 = vmul.f32 %v2710, %v60
    %v2715 = vmul.f32 %v2713, %v60
    %v2716 = vadd.f32 %v2714, 1e-05
    %v2717 = vadd.f32 %v2715, 1e-05
    %v2718 = vrsqrt.pop %v2716
    %v2719 = vrsqrt.pop %v2717
    %v2720 = vmul.f32 %v2704, %v2718
    %v2721 = vmul.f32 %v2705, %v2719
    %v2722 = vlaneseq
    %v2723 = vshrl.u32 %v2722, 7
    %v2724 = vsub.s32 4, %v2723
    %v2725 = vrot.slane %v33, %v2724
    %v2726 = vmul.f32 %v2720, %v2725
    %v2727 = vmul.f32 %v2721, %v2725
    %v2728 = vlaneseq
    %v2729 = vshrl.u32 %v2728, 7
    %v2730 = vsub.s32 5, %v2729
    %v2731 = vrot.slane %v33, %v2730
    %v2732 = vadd.f32 %v2726, %v2731
    %v2733 = vadd.f32 %v2727, %v2731
    %v2734 = vlaneseq
    %v2735 = vshrl.u32 %v2734, 7
    %v2736 = vsub.s32 3, %v2735
    %v2737 = vrot.slane %v34, %v2736
    %v2739 = vsel %vm56, %v2732, 0
    %v2742 = vsel %vm56, %v2733, 0
    %2744 = vmatprep.subr.mxu0 0.0
    %2745 = vmatpush1.msra.mxu0 %v23
    %2746 = vmatprep.subr.mxu0 0.0
    %2747 = vmatpush1.msra.mxu0 %v26
    %2748 = vmatprep.subr.mxu0 0.0
    %2749 = vmatpush1.msra.mxu0 %v29
    %2750 = vmatprep.subr.mxu0 0.0
    %2751 = vmatpush1.msra.mxu0 %v32
    %2752 = vmatprep.subr.mxu0 0.0
    %2753 = vmatpush1.msra.mxu0 0.0
    %2754 = vmatprep.subr.mxu0 0.0
    %2755 = vmatpush1.msra.mxu0 0.0
    %2756 = vmatprep.subr.mxu0 0.0
    %2757 = vmatpush1.msra.mxu0 0.0
    %2758 = vmatprep.subr.mxu0 0.0
    %2759 = vmatpush1.msra.mxu0 0.0
    %2760 = vmatprep.subr.mxu0 0.0
    %2761 = vmatpush1.msra.mxu0 0.0
    %2762 = vmatprep.subr.mxu0 0.0
    %2763 = vmatpush1.msra.mxu0 0.0
    %2764 = vmatprep.subr.mxu0 0.0
    %2765 = vmatpush1.msra.mxu0 0.0
    %2766 = vmatprep.subr.mxu0 0.0
    %2767 = vmatpush1.msra.mxu0 0.0
    %2768 = vmatprep.subr.mxu0 0.0
    %2769 = vmatpush1.msra.mxu0 0.0
    %2770 = vmatprep.subr.mxu0 0.0
    %2771 = vmatpush1.msra.mxu0 0.0
    %2772 = vmatprep.subr.mxu0 0.0
    %2773 = vmatpush1.msra.mxu0 0.0
    %2774 = vmatprep.subr.mxu0 0.0
    %2775 = vmatpush1.msra.mxu0 0.0
    %2776 = vmatprep.subr.mxu0 0.0
    %2777 = vmatpush1.msra.mxu0 0.0
    %2778 = vmatprep.subr.mxu0 0.0
    %2779 = vmatpush1.msra.mxu0 0.0
    %2780 = vmatprep.subr.mxu0 0.0
    %2781 = vmatpush1.msra.mxu0 0.0
    %2782 = vmatprep.subr.mxu0 0.0
    %2783 = vmatpush1.msra.mxu0 0.0
    %2784 = vmatprep.subr.mxu0 0.0
    %2785 = vmatpush1.msra.mxu0 0.0
    %2786 = vmatprep.subr.mxu0 0.0
    %2787 = vmatpush1.msra.mxu0 0.0
    %2788 = vmatprep.subr.mxu0 0.0
    %2789 = vmatpush1.msra.mxu0 0.0
    %2790 = vmatprep.subr.mxu0 0.0
    %2791 = vmatpush1.msra.mxu0 0.0
    %2792 = vmatprep.subr.mxu0 0.0
    %2793 = vmatpush1.msra.mxu0 0.0
    %2794 = vmatprep.subr.mxu0 0.0
    %2795 = vmatpush1.msra.mxu0 0.0
    %2796 = vmatprep.subr.mxu0 0.0
    %2797 = vmatpush1.msra.mxu0 0.0
    %2798 = vmatprep.subr.mxu0 0.0
    %2799 = vmatpush1.msra.mxu0 0.0
    %2800 = vmatprep.subr.mxu0 0.0
    %2801 = vmatpush1.msra.mxu0 0.0
    %2802 = vmatprep.subr.mxu0 0.0
    %2803 = vmatpush1.msra.mxu0 0.0
    %2804 = vmatprep.subr.mxu0 0.0
    %2805 = vmatpush1.msra.mxu0 0.0
    %2806 = vmatprep.subr.mxu0 0.0
    %2807 = vmatpush1.msra.mxu0 0.0
    %2808 = vmatprep.mubr.f32.mxu0 0.0
    %2809 = vmatmul.mubr.f32.gmra.mrb[0].mxu0 %v2739
    %v2810 = vpop.f32.mrb[0].mxu0
    %v2811 = vadd.f32 %v2737, %v2810
    %v2812 = vpop.f32.mrb[0].mxu0
    %2813 = vmatprep.mubr.f32.mxu0 0.0
    %2814 = vmatmul.mubr.f32.gmra.mrb[0].mxu0 %v2742
    %v2815 = vpop.f32.mrb[0].mxu0
    %v2816 = vadd.f32 %v2737, %v2815
    %v2817 = vpop.f32.mrb[0].mxu0
    %2818 = vdwg.mxu0
    %v2819 = vmul.f32 %v2811, 0.5
    %v2820 = vmul.f32 %v2816, 0.5
    %v2821 = vmul.f32 %v2811, 0.044715
    %v2822 = vmul.f32 %v2816, 0.044715
    %v2823 = vmul.f32 %v2821, %v2811
    %v2824 = vmul.f32 %v2822, %v2816
    %v2825 = vmul.f32 %v2823, %v2811
    %v2826 = vmul.f32 %v2824, %v2816
    %v2827 = vadd.f32 %v2811, %v2825
    %v2828 = vadd.f32 %v2816, %v2826
    %v2829 = vmul.f32 %v2827, 0.7978846
    %v2830 = vmul.f32 %v2828, 0.7978846
    %v2831 = vtanh.pop %v2829
    %v2832 = vtanh.pop %v2830
    %v2833 = vadd.f32 %v2831, 1.0
    %v2834 = vadd.f32 %v2832, 1.0
    %v2835 = vmul.f32 %v2819, %v2833
    %v2836 = vmul.f32 %v2820, %v2834
    %v2837 = vlaneseq
    %v2838 = vshrl.u32 %v2837, 7
    %v2839 = vsub.s32 4, %v2838
    %v2840 = vrot.slane %v34, %v2839
    %2841 = vmatprep.subr.mxu0 0.0
    %2842 = vmatpush1.msra.mxu0 %v35
    %2843 = vmatprep.subr.mxu0 0.0
    %2844 = vmatpush1.msra.mxu0 %v36
    %2845 = vmatprep.subr.mxu0 0.0
    %2846 = vmatpush1.msra.mxu0 %v37
    %2847 = vmatprep.subr.mxu0 0.0
    %2848 = vmatpush1.msra.mxu0 %v38
    %2849 = vmatprep.subr.mxu0 0.0
    %2850 = vmatpush1.msra.mxu0 %v39
    %2851 = vmatprep.subr.mxu0 0.0
    %2852 = vmatpush1.msra.mxu0 %v40
    %2853 = vmatprep.subr.mxu0 0.0
    %2854 = vmatpush1.msra.mxu0 %v41
    %2855 = vmatprep.subr.mxu0 0.0
    %2856 = vmatpush1.msra.mxu0 %v42
    %2857 = vmatprep.subr.mxu0 0.0
    %2858 = vmatpush1.msra.mxu0 %v43
    %2859 = vmatprep.subr.mxu0 0.0
    %2860 = vmatpush1.msra.mxu0 %v44
    %2861 = vmatprep.subr.mxu0 0.0
    %2862 = vmatpush1.msra.mxu0 %v45
    %2863 = vmatprep.subr.mxu0 0.0
    %2864 = vmatpush1.msra.mxu0 %v46
    %2865 = vmatprep.subr.mxu0 0.0
    %2866 = vmatpush1.msra.mxu0 %v47
    %2867 = vmatprep.subr.mxu0 0.0
    %2868 = vmatpush1.msra.mxu0 %v48
    %2869 = vmatprep.subr.mxu0 0.0
    %2870 = vmatpush1.msra.mxu0 %v49
    %2871 = vmatprep.subr.mxu0 0.0
    %2872 = vmatpush1.msra.mxu0 %v50
    %2873 = vmatprep.subr.mxu0 0.0
    %2874 = vmatpush1.msra.mxu0 0.0
    %2875 = vmatprep.subr.mxu0 0.0
    %2876 = vmatpush1.msra.mxu0 0.0
    %2877 = vmatprep.subr.mxu0 0.0
    %2878 = vmatpush1.msra.mxu0 0.0
    %2879 = vmatprep.subr.mxu0 0.0
    %2880 = vmatpush1.msra.mxu0 0.0
    %2881 = vmatprep.subr.mxu0 0.0
    %2882 = vmatpush1.msra.mxu0 0.0
    %2883 = vmatprep.subr.mxu0 0.0
    %2884 = vmatpush1.msra.mxu0 0.0
    %2885 = vmatprep.subr.mxu0 0.0
    %2886 = vmatpush1.msra.mxu0 0.0
    %2887 = vmatprep.subr.mxu0 0.0
    %2888 = vmatpush1.msra.mxu0 0.0
    %2889 = vmatprep.subr.mxu0 0.0
    %2890 = vmatpush1.msra.mxu0 0.0
    %2891 = vmatprep.subr.mxu0 0.0
    %2892 = vmatpush1.msra.mxu0 0.0
    %2893 = vmatprep.subr.mxu0 0.0
    %2894 = vmatpush1.msra.mxu0 0.0
    %2895 = vmatprep.subr.mxu0 0.0
    %2896 = vmatpush1.msra.mxu0 0.0
    %2897 = vmatprep.subr.mxu0 0.0
    %2898 = vmatpush1.msra.mxu0 0.0
    %2899 = vmatprep.subr.mxu0 0.0
    %2900 = vmatpush1.msra.mxu0 0.0
    %2901 = vmatprep.subr.mxu0 0.0
    %2902 = vmatpush1.msra.mxu0 0.0
    %2903 = vmatprep.subr.mxu0 0.0
    %2904 = vmatpush1.msra.mxu0 0.0
    %2905 = vmatprep.mubr.f32.mxu0 0.0
    %2906 = vmatmul.mubr.f32.gmra.mrb[0].mxu0 %v2835
    %v2907 = vpop.f32.mrb[0].mxu0
    %v2908 = vadd.f32 %v2840, %v2907
    %v2909 = vpop.f32.mrb[0].mxu0
    %2910 = vmatprep.mubr.f32.mxu0 0.0
    %2911 = vmatmul.mubr.f32.gmra.mrb[0].mxu0 %v2836
    %v2912 = vpop.f32.mrb[0].mxu0
    %v2913 = vadd.f32 %v2840, %v2912
    %v2914 = vpop.f32.mrb[0].mxu0
    %2915 = vdwg.mxu0
    %v2916 = vadd.f32 %v2908, %v2694
    %v2917 = vadd.f32 %v2913, %v2695
    %v2918 = vsel %vm56, %v2916, 0.0
    %v2919 = vsel %vm56, %v2917, 0.0
    %2920 = vst [vmem:[#allocation2] sm:$0xff] %v2918
    %2921 = vst [vmem:[#allocation2 + $0x8] sm:$0xff] %v2919
    // Predicated region
    $region22: #{tpu_custom_call.1} parent=1 // pred_check
      _
    $region23: #{tpu_custom_call.1} parent=1 // pred_check_branch
      %2923 = sbr.rel (0) target = $region25
    $region24: #{tpu_custom_call.1} parent=1 // pred_region
      %s2925 = ssub.s32 256, 256
      %2926 = vsyncadd [#allocation3], %s2925
      %s2927 = sshll.u32 [#allocation2], 4
      %s2928 = int_to_ptr.vmem [resolvable:$true] %s2927
      %2933 = dma.vmem_to_hbm [thread:$0]  %s2928, 256, %s5, [#allocation3], 128, 128, 8
    $region25: #{tpu_custom_call.1} parent=1 // pred_fallthru
      _
    // Predicated region
    $region26: #{tpu_custom_call.1} parent=1 // pred_check
      _
    $region27: #{tpu_custom_call.1} parent=1 // pred_check_branch
      %2935 = sbr.rel (0) target = $region29
    $region28: #{tpu_custom_call.1} parent=1 // pred_region
      %2936 = dma.done [#allocation3], 256
    $region29: #{tpu_custom_call.1} parent=1 // pred_fallthru
      _
    %2937 = vsyncpa [#allocation3], 1

</llo_original>
